<compile_context>
chip_gen: v7x
topology: tpu7x:2x2x1
jax: 0.10.0
libtpu: 0.0.40
codegen_flags: <defaults>
</compile_context>

<pallas_src>
import functools

import jax
import jax.numpy as jnp
from jax import lax
from jax.experimental import pallas as pl
from jax.experimental.pallas import tpu as pltpu


def _round_up(n, m):
    return ((n + m - 1) // m) * m


def _pad_axis(a, axis, new_size):
    pad = new_size - a.shape[axis]
    if pad <= 0:
        return a
    widths = [(0, 0)] * a.ndim
    widths[axis] = (0, pad)
    return jnp.pad(a, widths)


def _pad_gate_cols(w, H, Hp):
    """[..., 4*H] with gate blocks (i,f,g,o) -> [..., 4*Hp], zero-padded per gate."""
    lead = w.shape[:-1]
    w4 = w.reshape(*lead, 4, H)
    w4 = _pad_axis(w4, w4.ndim - 1, Hp)
    return w4.reshape(*lead, 4 * Hp)


def _num_tensorcores():
    """Best-effort TensorCore count (v7x has 2/chip); safe fallback = 1."""
    for probe in (lambda: pltpu.get_tpu_info(), lambda: jax.devices()[0]):
        try:
            obj = probe()
        except Exception:
            continue
        for attr in ("num_cores", "core_count", "tensorcores_per_chip"):
            v = getattr(obj, attr, None)
            try:
                if v is not None and int(v) > 0:
                    return int(v)
            except Exception:
                pass
    return 1


def _vmem_capacity_bytes():
    try:
        cap = getattr(pltpu.get_tpu_info(), "vmem_capacity_bytes", None)
        if cap:
            return int(cap)
    except Exception:
        pass
    return 64 * 1024 * 1024  # conservative (v7x per-TC physical)


def lstm_fc_kernel(num_layers, hidden_pad, seq_len, x_ref, *args):
    """args = [w_ih_0, w_hh_0, b_0, ..., w_ih_{L-1}, w_hh_{L-1}, b_{L-1},
               w_fc, b_fc, out_ref, gate_ref(scratch), seq_ref(scratch)]

    x_ref:    [T*Bt, F]          time-major batch tile (matmul dtype)
    w_ih_l:   [F_in_pad, 4*Hp]   (gate order i,f,g,o; zero-padded per gate)
    w_hh_l:   [Hp, 4*Hp]
    b_l:      [1, 4*Hp]          combined b_ih + b_hh (f32)
    w_fc:     [Hp, Op], b_fc: [1, Op] (f32)
    gate_ref: [T*Bt, 4*Hp] f32   hoisted input-projection results
    seq_ref:  [T*Bt, Hp]         inter-layer hidden sequence (matmul dtype)
    """
    layer_refs = args[: 3 * num_layers]
    w_fc_ref, b_fc_ref, out_ref, gate_ref, seq_ref = args[3 * num_layers:]

    Hp = hidden_pad
    T = seq_len
    Bt = x_ref.shape[0] // T
    mm_dtype = x_ref.dtype  # matmul operand dtype (bf16 or f32)

    # Unroll by live-vreg footprint: each step keeps roughly h, c, 4 gate
    # slices and tanh(c) live (~7 tiles of [Bt, Hp] f32 = 7*Bt*Hp/1024 vregs).
    live_vregs = (7 * Bt * Hp) // 1024
    if live_vregs <= 24:
        unroll = True if T <= 16 else 4
    else:
        unroll = 2

    h_last = None
    for layer in range(num_layers):
        w_ih = layer_refs[3 * layer][...]       # [F_in_pad, 4*Hp] mm_dtype
        w_hh = layer_refs[3 * layer + 1][...]   # [Hp, 4*Hp]       mm_dtype
        b = layer_refs[3 * layer + 2][...]      # [1, 4*Hp]        f32

        # Hoisted input projection: one big MXU-friendly GEMM over all
        # timesteps, bias folded in (removes it from the per-step path).
        x_all = x_ref[...] if layer == 0 else seq_ref[...]
        gate_ref[...] = (
            jnp.dot(x_all, w_ih, preferred_element_type=jnp.float32) + b
        )

        last_layer = layer == num_layers - 1

        def step(t, carry, w_hh=w_hh, last_layer=last_layer):
            h, c = carry                         # h: mm_dtype, c: f32
            row = pl.multiple_of(t * Bt, Bt)
            gates = gate_ref[pl.ds(row, Bt), :] + jnp.dot(
                h, w_hh, preferred_element_type=jnp.float32)
            # Hp is a multiple of 128 -> each gate slice is whole vregs.
            # Gate nonlinearities stay in f32 (no bf16 VPU/EUP on v5e).
            i = jax.nn.sigmoid(gates[:, 0 * Hp:1 * Hp])
            f = jax.nn.sigmoid(gates[:, 1 * Hp:2 * Hp])
            g = jnp.tanh(gates[:, 2 * Hp:3 * Hp])
            o = jax.nn.sigmoid(gates[:, 3 * Hp:4 * Hp])
            c_new = f * c + i * g
            h_new = (o * jnp.tanh(c_new)).astype(mm_dtype)
            if not last_layer:                    # static Python guard
                seq_ref[pl.ds(row, Bt), :] = h_new
            return (h_new, c_new)

        h0 = jnp.zeros((Bt, Hp), mm_dtype)
        c0 = jnp.zeros((Bt, Hp), jnp.float32)
        h_last, _ = lax.fori_loop(0, T, step, (h0, c0), unroll=unroll)

    # fc applied to the last timestep's hidden state of the last layer
    out_ref[...] = (
        jnp.dot(h_last, w_fc_ref[...], preferred_element_type=jnp.float32)
        + b_fc_ref[...]
    )


def lstm_model_forward(x, params, hidden_size, num_layers,
                       matmul_dtype=jnp.bfloat16):
    """x: [B, T, F] float32. Returns [B, output_size] float32."""
    B, T, F = x.shape
    H = hidden_size
    Hp = _round_up(H, 128)   # 128-lane-aligned gate blocks
    w_fc, b_fc = params["fc"]
    O = w_fc.shape[1]
    Op = _round_up(O, 128)   # lane-dense final store
    mm = jnp.dtype(matmul_dtype)

    # Batch tiling: split independent batch rows across TensorCores when the
    # chip has more than one (v7x); single tile otherwise (v5e/v6e).
    n_cores = _num_tensorcores()
    if n_cores > 1 and B > 8:
        Btile = _round_up(-(-B // n_cores), 8)
        n_tiles = -(-B // Btile)
    else:
        Btile = _round_up(B, 8)   # f32 sublane alignment
        n_tiles = 1
    Bp = Btile * n_tiles

    # [B, T, F] -> time-major, batch-padded, batch-tiled: [n_tiles, T*Btile, F]
    xp = _pad_axis(x, 0, Bp)                                   # [Bp, T, F]
    x_tm = jnp.transpose(xp, (1, 0, 2))                        # [T, Bp, F]
    x_tiles = x_tm.reshape(T, n_tiles, Btile, F).transpose(1, 0, 2, 3)
    x_tiles = x_tiles.reshape(n_tiles, T * Btile, F).astype(mm)

    const_args = []
    for l in range(num_layers):
        w_ih, w_hh, b = params[f"layer{l}"]
        in_pad = F if l == 0 else Hp
        w_ih_p = _pad_gate_cols(_pad_axis(w_ih, 0, in_pad), H, Hp).astype(mm)
        w_hh_p = _pad_gate_cols(_pad_axis(w_hh, 0, Hp), H, Hp).astype(mm)
        b_p = _pad_gate_cols(b, H, Hp)                          # stays f32
        const_args += [w_ih_p, w_hh_p, b_p]
    w_fc_p = _pad_axis(_pad_axis(w_fc, 0, Hp), 1, Op).astype(mm)
    b_fc_p = _pad_axis(b_fc, 1, Op)                             # stays f32
    const_args += [w_fc_p, b_fc_p]

    # Generation-aware VMEM budget (no blanket cap, no blind 2x factor).
    x_block_bytes = T * Btile * F * mm.itemsize
    weight_bytes = sum(int(a.size) * a.dtype.itemsize for a in const_args)
    scratch_bytes = T * Btile * 4 * Hp * 4 + T * Btile * Hp * mm.itemsize
    out_bytes = Btile * Op * 4
    est_bytes = (2 * x_block_bytes + 2 * weight_bytes + 2 * out_bytes
                 + scratch_bytes + (1 << 20))
    usable = int(_vmem_capacity_bytes() * 0.85)
    vmem_limit = min(max(int(est_bytes * 1.2), 16 * 1024 * 1024), usable)
    # TODO(synk): if est_bytes > usable (large T/H, esp. v7x), fall over to a
    #             time-chunked gate scratch + HBM weight streaming path.

    def _full_spec(a):
        return pl.BlockSpec(a.shape, lambda i, _nd=a.ndim: (0,) * _nd)

    in_specs = [pl.BlockSpec((pl.Squeezed(), T * Btile, F),
                             lambda i: (i, 0, 0))]
    in_specs += [_full_spec(a) for a in const_args]

    kernel = functools.partial(lstm_fc_kernel, num_layers, Hp, T)

    out_padded = pl.pallas_call(
        kernel,
        out_shape=jax.ShapeDtypeStruct((Bp, Op), jnp.float32),
        grid=(n_tiles,),
        in_specs=in_specs,
        out_specs=pl.BlockSpec((Btile, Op), lambda i: (i, 0)),
        scratch_shapes=[
            pltpu.VMEM((T * Btile, 4 * Hp), jnp.float32),   # hoisted gates
            pltpu.VMEM((T * Btile, Hp), mm),                # inter-layer seq
        ],
        compiler_params=pltpu.CompilerParams(
            dimension_semantics=("parallel",),
            vmem_limit_bytes=vmem_limit),
    )(x_tiles, *const_args)
    return out_padded[:B, :O]


def init_params(key, input_size, hidden_size, output_size, num_layers):
    """Deterministic synthetic parameters (PyTorch-style uniform init scale)."""
    params = {}
    scale = 1.0 / jnp.sqrt(hidden_size)
    for l in range(num_layers):
        in_dim = input_size if l == 0 else hidden_size
        key, k1, k2, k3, k4 = jax.random.split(key, 5)
        w_ih = jax.random.uniform(k1, (in_dim, 4 * hidden_size),
                                  minval=-scale, maxval=scale, dtype=jnp.float32)
        w_hh = jax.random.uniform(k2, (hidden_size, 4 * hidden_size),
                                  minval=-scale, maxval=scale, dtype=jnp.float32)
        b_ih = jax.random.uniform(k3, (1, 4 * hidden_size),
                                  minval=-scale, maxval=scale, dtype=jnp.float32)
        b_hh = jax.random.uniform(k4, (1, 4 * hidden_size),
                                  minval=-scale, maxval=scale, dtype=jnp.float32)
        params[f"layer{l}"] = (w_ih, w_hh, b_ih + b_hh)
    key, k1, k2 = jax.random.split(key, 3)
    w_fc = jax.random.uniform(k1, (hidden_size, output_size),
                              minval=-scale, maxval=scale, dtype=jnp.float32)
    b_fc = jax.random.uniform(k2, (1, output_size),
                              minval=-scale, maxval=scale, dtype=jnp.float32)
    params["fc"] = (w_fc, b_fc)
    return params


def lstm_model_ref(x, params, hidden_size, num_layers):
    """Pure-JAX reference matching nn.LSTM (i,f,g,o gate order) + Linear."""
    B, T, _ = x.shape
    H = hidden_size
    h_seq = x
    for l in range(num_layers):
        w_ih, w_hh, b = params[f"layer{l}"]
        h = jnp.zeros((B, H), jnp.float32)
        c = jnp.zeros((B, H), jnp.float32)
        outs = []
        for t in range(T):
            gates = h_seq[:, t, :] @ w_ih + h @ w_hh + b
            i = jax.nn.sigmoid(gates[:, 0 * H:1 * H])
            f = jax.nn.sigmoid(gates[:, 1 * H:2 * H])
            g = jnp.tanh(gates[:, 2 * H:3 * H])
            o = jax.nn.sigmoid(gates[:, 3 * H:4 * H])
            c = f * c + i * g
            h = o * jnp.tanh(c)
            outs.append(h)
        h_seq = jnp.stack(outs, axis=1)
    w_fc, b_fc = params["fc"]
    return h_seq[:, -1, :] @ w_fc + b_fc


if __name__ == "__main__":
    B, T = 2, 8
    input_size, hidden_size, output_size, num_layers = 16, 32, 8, 2

    key = jax.random.PRNGKey(0)
    key, xk = jax.random.split(key)
    x = jax.random.normal(xk, (B, T, input_size), dtype=jnp.float32)
    params = init_params(key, input_size, hidden_size, output_size, num_layers)

    ref = lstm_model_ref(x, params, hidden_size, num_layers)

    # Exact-parity mode (f32 matmul operands): tight tolerance.
    out_f32 = jax.block_until_ready(
        lstm_model_forward(x, params, hidden_size, num_layers,
                           matmul_dtype=jnp.float32))
    assert out_f32.shape == (B, output_size), out_f32.shape
    assert jnp.allclose(out_f32, ref, atol=2e-5, rtol=2e-5), (
        f"f32 max abs err {jnp.max(jnp.abs(out_f32 - ref))}")

    # Fast mode (bf16 MXU operands, f32 accumulation): relaxed tolerance.
    out_bf16 = jax.block_until_ready(
        lstm_model_forward(x, params, hidden_size, num_layers,
                           matmul_dtype=jnp.bfloat16))
    assert out_bf16.shape == (B, output_size), out_bf16.shape
    assert jnp.allclose(out_bf16, ref, atol=6e-2, rtol=6e-2), (
        f"bf16 max abs err {jnp.max(jnp.abs(out_bf16 - ref))}")

    print("KERNEL_OK")
</pallas_src>

<mosaic_0001>
module attributes {stable_mosaic.version = 11 : i64} {
  func.func @lstm_fc_kernel(%arg0: i32, %arg1: memref<1x64x16xf32, #tpu.memory_space<vmem>>, %arg2: memref<16x512xf32, #tpu.memory_space<vmem>>, %arg3: memref<128x512xf32, #tpu.memory_space<vmem>>, %arg4: memref<1x512xf32, #tpu.memory_space<vmem>>, %arg5: memref<128x512xf32, #tpu.memory_space<vmem>>, %arg6: memref<128x512xf32, #tpu.memory_space<vmem>>, %arg7: memref<1x512xf32, #tpu.memory_space<vmem>>, %arg8: memref<128x128xf32, #tpu.memory_space<vmem>>, %arg9: memref<1x128xf32, #tpu.memory_space<vmem>>, %arg10: memref<8x128xf32, #tpu.memory_space<vmem>>, %arg11: memref<64x512xf32, #tpu.memory_space<vmem>>, %arg12: memref<64x128xf32, #tpu.memory_space<vmem>>) attributes {dimension_semantics = [#tpu.dimension_semantics<parallel>], iteration_bounds = array<i64: 1>, scalar_prefetch = 0 : i64, scratch_operands = 2 : i64, tpu.core_type = #tpu.core_type<tc>, window_params = [{transform_indices = @transform_0, window_bounds = array<i64: 1, 64, 16>}, {pipeline_mode = #tpu.pipeline_mode<synchronous>, transform_indices = @transform_1, window_bounds = array<i64: 16, 512>}, {pipeline_mode = #tpu.pipeline_mode<synchronous>, transform_indices = @transform_2, window_bounds = array<i64: 128, 512>}, {pipeline_mode = #tpu.pipeline_mode<synchronous>, transform_indices = @transform_3, window_bounds = array<i64: 1, 512>}, {pipeline_mode = #tpu.pipeline_mode<synchronous>, transform_indices = @transform_4, window_bounds = array<i64: 128, 512>}, {pipeline_mode = #tpu.pipeline_mode<synchronous>, transform_indices = @transform_5, window_bounds = array<i64: 128, 512>}, {pipeline_mode = #tpu.pipeline_mode<synchronous>, transform_indices = @transform_6, window_bounds = array<i64: 1, 512>}, {pipeline_mode = #tpu.pipeline_mode<synchronous>, transform_indices = @transform_7, window_bounds = array<i64: 128, 128>}, {pipeline_mode = #tpu.pipeline_mode<synchronous>, transform_indices = @transform_8, window_bounds = array<i64: 1, 128>}, {transform_indices = @transform_9, window_bounds = array<i64: 8, 128>}]} {
    %c0 = arith.constant 0 : index
    %c0_0 = arith.constant 0 : index
    %0 = vector.load %arg2[%c0, %c0_0] : memref<16x512xf32, #tpu.memory_space<vmem>>, vector<16x512xf32>
    %c0_1 = arith.constant 0 : index
    %c0_2 = arith.constant 0 : index
    %1 = vector.load %arg3[%c0_1, %c0_2] : memref<128x512xf32, #tpu.memory_space<vmem>>, vector<128x512xf32>
    %c0_3 = arith.constant 0 : index
    %c0_4 = arith.constant 0 : index
    %2 = vector.load %arg4[%c0_3, %c0_4] : memref<1x512xf32, #tpu.memory_space<vmem>>, vector<1x512xf32>
    %c0_5 = arith.constant 0 : index
    %c0_6 = arith.constant 0 : index
    %c0_7 = arith.constant 0 : index
    %3 = vector.load %arg1[%c0_5, %c0_6, %c0_7] : memref<1x64x16xf32, #tpu.memory_space<vmem>>, vector<1x64x16xf32>
    %4 = vector.shape_cast %3 : vector<1x64x16xf32> to vector<64x16xf32>
    %cst = arith.constant dense<0.000000e+00> : vector<64x512xf32>
    %5 = tpu.matmul %4, %0, %cst {dimension_numbers = #tpu.dot_dimension_numbers<[1], [0], [0], [1], [0, 0, 1, 1], [], []>} : vector<64x16xf32>, vector<16x512xf32>, vector<64x512xf32> -> vector<64x512xf32>
    %6 = vector.broadcast %2 : vector<1x512xf32> to vector<64x512xf32>
    %7 = arith.addf %5, %6 : vector<64x512xf32>
    %c0_8 = arith.constant 0 : index
    %c0_9 = arith.constant 0 : index
    %8 = vector.load %arg11[%c0_8, %c0_9] : memref<64x512xf32, #tpu.memory_space<vmem>>, vector<64x512xf32>
    tpu.vector_store %arg11[%c0_8, %c0_9], %7 {strides = array<i32>} : memref<64x512xf32, #tpu.memory_space<vmem>>, vector<64x512xf32>,
    %cst_10 = arith.constant 0.000000e+00 : f32
    %9 = vector.broadcast %cst_10 : f32 to vector<8x128xf32>
    %cst_11 = arith.constant 0.000000e+00 : f32
    %10 = vector.broadcast %cst_11 : f32 to vector<8x128xf32>
    %c0_i32 = arith.constant 0 : i32
    %c8_i32 = arith.constant 8 : i32
    %11 = arith.muli %c0_i32, %c8_i32 : i32
    %12 = tpu.assume_multiple %11, 8 : i32
    %13 = arith.index_cast %12 : i32 to index
    %c0_12 = arith.constant 0 : index
    %14 = vector.load %arg11[%13, %c0_12] : memref<64x512xf32, #tpu.memory_space<vmem>>, vector<8x512xf32>
    %cst_13 = arith.constant dense<0.000000e+00> : vector<8x512xf32>
    %15 = tpu.matmul %9, %1, %cst_13 {dimension_numbers = #tpu.dot_dimension_numbers<[1], [0], [0], [1], [0, 0, 1, 1], [], []>} : vector<8x128xf32>, vector<128x512xf32>, vector<8x512xf32> -> vector<8x512xf32>
    %16 = arith.addf %14, %15 : vector<8x512xf32>
    %17 = vector.extract_strided_slice %16 {offsets = [0, 0], sizes = [8, 128], strides = [1, 1]} : vector<8x512xf32> to vector<8x128xf32>
    %18 = arith.negf %17 : vector<8x128xf32>
    %19 = math.exp %18 : vector<8x128xf32>
    %cst_14 = arith.constant 1.000000e+00 : f32
    %20 = vector.broadcast %cst_14 : f32 to vector<8x128xf32>
    %21 = arith.addf %20, %19 : vector<8x128xf32>
    %22 = arith.divf %20, %21 : vector<8x128xf32>
    %23 = vector.extract_strided_slice %16 {offsets = [0, 128], sizes = [8, 128], strides = [1, 1]} : vector<8x512xf32> to vector<8x128xf32>
    %24 = arith.negf %23 : vector<8x128xf32>
    %25 = math.exp %24 : vector<8x128xf32>
    %cst_15 = arith.constant 1.000000e+00 : f32
    %26 = vector.broadcast %cst_15 : f32 to vector<8x128xf32>
    %27 = arith.addf %26, %25 : vector<8x128xf32>
    %28 = arith.divf %26, %27 : vector<8x128xf32>
    %29 = vector.extract_strided_slice %16 {offsets = [0, 256], sizes = [8, 128], strides = [1, 1]} : vector<8x512xf32> to vector<8x128xf32>
    %30 = math.tanh %29 : vector<8x128xf32>
    %31 = vector.extract_strided_slice %16 {offsets = [0, 384], sizes = [8, 128], strides = [1, 1]} : vector<8x512xf32> to vector<8x128xf32>
    %32 = arith.negf %31 : vector<8x128xf32>
    %33 = math.exp %32 : vector<8x128xf32>
    %cst_16 = arith.constant 1.000000e+00 : f32
    %34 = vector.broadcast %cst_16 : f32 to vector<8x128xf32>
    %35 = arith.addf %34, %33 : vector<8x128xf32>
    %36 = arith.divf %34, %35 : vector<8x128xf32>
    %37 = arith.mulf %28, %10 : vector<8x128xf32>
    %38 = arith.mulf %22, %30 : vector<8x128xf32>
    %39 = arith.addf %37, %38 : vector<8x128xf32>
    %40 = math.tanh %39 : vector<8x128xf32>
    %41 = arith.mulf %36, %40 : vector<8x128xf32>
    %42 = arith.index_cast %12 : i32 to index
    %c0_17 = arith.constant 0 : index
    %43 = vector.load %arg12[%42, %c0_17] : memref<64x128xf32, #tpu.memory_space<vmem>>, vector<8x128xf32>
    tpu.vector_store %arg12[%42, %c0_17], %41 {strides = array<i32>} : memref<64x128xf32, #tpu.memory_space<vmem>>, vector<8x128xf32>,
    %c1_i32 = arith.constant 1 : i32
    %c8_i32_18 = arith.constant 8 : i32
    %44 = arith.muli %c1_i32, %c8_i32_18 : i32
    %45 = tpu.assume_multiple %44, 8 : i32
    %46 = arith.index_cast %45 : i32 to index
    %c0_19 = arith.constant 0 : index
    %47 = vector.load %arg11[%46, %c0_19] : memref<64x512xf32, #tpu.memory_space<vmem>>, vector<8x512xf32>
    %cst_20 = arith.constant dense<0.000000e+00> : vector<8x512xf32>
    %48 = tpu.matmul %41, %1, %cst_20 {dimension_numbers = #tpu.dot_dimension_numbers<[1], [0], [0], [1], [0, 0, 1, 1], [], []>} : vector<8x128xf32>, vector<128x512xf32>, vector<8x512xf32> -> vector<8x512xf32>
    %49 = arith.addf %47, %48 : vector<8x512xf32>
    %50 = vector.extract_strided_slice %49 {offsets = [0, 0], sizes = [8, 128], strides = [1, 1]} : vector<8x512xf32> to vector<8x128xf32>
    %51 = arith.negf %50 : vector<8x128xf32>
    %52 = math.exp %51 : vector<8x128xf32>
    %cst_21 = arith.constant 1.000000e+00 : f32
    %53 = vector.broadcast %cst_21 : f32 to vector<8x128xf32>
    %54 = arith.addf %53, %52 : vector<8x128xf32>
    %55 = arith.divf %53, %54 : vector<8x128xf32>
    %56 = vector.extract_strided_slice %49 {offsets = [0, 128], sizes = [8, 128], strides = [1, 1]} : vector<8x512xf32> to vector<8x128xf32>
    %57 = arith.negf %56 : vector<8x128xf32>
    %58 = math.exp %57 : vector<8x128xf32>
    %cst_22 = arith.constant 1.000000e+00 : f32
    %59 = vector.broadcast %cst_22 : f32 to vector<8x128xf32>
    %60 = arith.addf %59, %58 : vector<8x128xf32>
    %61 = arith.divf %59, %60 : vector<8x128xf32>
    %62 = vector.extract_strided_slice %49 {offsets = [0, 256], sizes = [8, 128], strides = [1, 1]} : vector<8x512xf32> to vector<8x128xf32>
    %63 = math.tanh %62 : vector<8x128xf32>
    %64 = vector.extract_strided_slice %49 {offsets = [0, 384], sizes = [8, 128], strides = [1, 1]} : vector<8x512xf32> to vector<8x128xf32>
    %65 = arith.negf %64 : vector<8x128xf32>
    %66 = math.exp %65 : vector<8x128xf32>
    %cst_23 = arith.constant 1.000000e+00 : f32
    %67 = vector.broadcast %cst_23 : f32 to vector<8x128xf32>
    %68 = arith.addf %67, %66 : vector<8x128xf32>
    %69 = arith.divf %67, %68 : vector<8x128xf32>
    %70 = arith.mulf %61, %39 : vector<8x128xf32>
    %71 = arith.mulf %55, %63 : vector<8x128xf32>
    %72 = arith.addf %70, %71 : vector<8x128xf32>
    %73 = math.tanh %72 : vector<8x128xf32>
    %74 = arith.mulf %69, %73 : vector<8x128xf32>
    %75 = arith.index_cast %45 : i32 to index
    %c0_24 = arith.constant 0 : index
    %76 = vector.load %arg12[%75, %c0_24] : memref<64x128xf32, #tpu.memory_space<vmem>>, vector<8x128xf32>
    tpu.vector_store %arg12[%75, %c0_24], %74 {strides = array<i32>} : memref<64x128xf32, #tpu.memory_space<vmem>>, vector<8x128xf32>,
    %c2_i32 = arith.constant 2 : i32
    %c8_i32_25 = arith.constant 8 : i32
    %77 = arith.muli %c2_i32, %c8_i32_25 : i32
    %78 = tpu.assume_multiple %77, 8 : i32
    %79 = arith.index_cast %78 : i32 to index
    %c0_26 = arith.constant 0 : index
    %80 = vector.load %arg11[%79, %c0_26] : memref<64x512xf32, #tpu.memory_space<vmem>>, vector<8x512xf32>
    %cst_27 = arith.constant dense<0.000000e+00> : vector<8x512xf32>
    %81 = tpu.matmul %74, %1, %cst_27 {dimension_numbers = #tpu.dot_dimension_numbers<[1], [0], [0], [1], [0, 0, 1, 1], [], []>} : vector<8x128xf32>, vector<128x512xf32>, vector<8x512xf32> -> vector<8x512xf32>
    %82 = arith.addf %80, %81 : vector<8x512xf32>
    %83 = vector.extract_strided_slice %82 {offsets = [0, 0], sizes = [8, 128], strides = [1, 1]} : vector<8x512xf32> to vector<8x128xf32>
    %84 = arith.negf %83 : vector<8x128xf32>
    %85 = math.exp %84 : vector<8x128xf32>
    %cst_28 = arith.constant 1.000000e+00 : f32
    %86 = vector.broadcast %cst_28 : f32 to vector<8x128xf32>
    %87 = arith.addf %86, %85 : vector<8x128xf32>
    %88 = arith.divf %86, %87 : vector<8x128xf32>
    %89 = vector.extract_strided_slice %82 {offsets = [0, 128], sizes = [8, 128], strides = [1, 1]} : vector<8x512xf32> to vector<8x128xf32>
    %90 = arith.negf %89 : vector<8x128xf32>
    %91 = math.exp %90 : vector<8x128xf32>
    %cst_29 = arith.constant 1.000000e+00 : f32
    %92 = vector.broadcast %cst_29 : f32 to vector<8x128xf32>
    %93 = arith.addf %92, %91 : vector<8x128xf32>
    %94 = arith.divf %92, %93 : vector<8x128xf32>
    %95 = vector.extract_strided_slice %82 {offsets = [0, 256], sizes = [8, 128], strides = [1, 1]} : vector<8x512xf32> to vector<8x128xf32>
    %96 = math.tanh %95 : vector<8x128xf32>
    %97 = vector.extract_strided_slice %82 {offsets = [0, 384], sizes = [8, 128], strides = [1, 1]} : vector<8x512xf32> to vector<8x128xf32>
    %98 = arith.negf %97 : vector<8x128xf32>
    %99 = math.exp %98 : vector<8x128xf32>
    %cst_30 = arith.constant 1.000000e+00 : f32
    %100 = vector.broadcast %cst_30 : f32 to vector<8x128xf32>
    %101 = arith.addf %100, %99 : vector<8x128xf32>
    %102 = arith.divf %100, %101 : vector<8x128xf32>
    %103 = arith.mulf %94, %72 : vector<8x128xf32>
    %104 = arith.mulf %88, %96 : vector<8x128xf32>
    %105 = arith.addf %103, %104 : vector<8x128xf32>
    %106 = math.tanh %105 : vector<8x128xf32>
    %107 = arith.mulf %102, %106 : vector<8x128xf32>
    %108 = arith.index_cast %78 : i32 to index
    %c0_31 = arith.constant 0 : index
    %109 = vector.load %arg12[%108, %c0_31] : memref<64x128xf32, #tpu.memory_space<vmem>>, vector<8x128xf32>
    tpu.vector_store %arg12[%108, %c0_31], %107 {strides = array<i32>} : memref<64x128xf32, #tpu.memory_space<vmem>>, vector<8x128xf32>,
    %c3_i32 = arith.constant 3 : i32
    %c8_i32_32 = arith.constant 8 : i32
    %110 = arith.muli %c3_i32, %c8_i32_32 : i32
    %111 = tpu.assume_multiple %110, 8 : i32
    %112 = arith.index_cast %111 : i32 to index
    %c0_33 = arith.constant 0 : index
    %113 = vector.load %arg11[%112, %c0_33] : memref<64x512xf32, #tpu.memory_space<vmem>>, vector<8x512xf32>
    %cst_34 = arith.constant dense<0.000000e+00> : vector<8x512xf32>
    %114 = tpu.matmul %107, %1, %cst_34 {dimension_numbers = #tpu.dot_dimension_numbers<[1], [0], [0], [1], [0, 0, 1, 1], [], []>} : vector<8x128xf32>, vector<128x512xf32>, vector<8x512xf32> -> vector<8x512xf32>
    %115 = arith.addf %113, %114 : vector<8x512xf32>
    %116 = vector.extract_strided_slice %115 {offsets = [0, 0], sizes = [8, 128], strides = [1, 1]} : vector<8x512xf32> to vector<8x128xf32>
    %117 = arith.negf %116 : vector<8x128xf32>
    %118 = math.exp %117 : vector<8x128xf32>
    %cst_35 = arith.constant 1.000000e+00 : f32
    %119 = vector.broadcast %cst_35 : f32 to vector<8x128xf32>
    %120 = arith.addf %119, %118 : vector<8x128xf32>
    %121 = arith.divf %119, %120 : vector<8x128xf32>
    %122 = vector.extract_strided_slice %115 {offsets = [0, 128], sizes = [8, 128], strides = [1, 1]} : vector<8x512xf32> to vector<8x128xf32>
    %123 = arith.negf %122 : vector<8x128xf32>
    %124 = math.exp %123 : vector<8x128xf32>
    %cst_36 = arith.constant 1.000000e+00 : f32
    %125 = vector.broadcast %cst_36 : f32 to vector<8x128xf32>
    %126 = arith.addf %125, %124 : vector<8x128xf32>
    %127 = arith.divf %125, %126 : vector<8x128xf32>
    %128 = vector.extract_strided_slice %115 {offsets = [0, 256], sizes = [8, 128], strides = [1, 1]} : vector<8x512xf32> to vector<8x128xf32>
    %129 = math.tanh %128 : vector<8x128xf32>
    %130 = vector.extract_strided_slice %115 {offsets = [0, 384], sizes = [8, 128], strides = [1, 1]} : vector<8x512xf32> to vector<8x128xf32>
    %131 = arith.negf %130 : vector<8x128xf32>
    %132 = math.exp %131 : vector<8x128xf32>
    %cst_37 = arith.constant 1.000000e+00 : f32
    %133 = vector.broadcast %cst_37 : f32 to vector<8x128xf32>
    %134 = arith.addf %133, %132 : vector<8x128xf32>
    %135 = arith.divf %133, %134 : vector<8x128xf32>
    %136 = arith.mulf %127, %105 : vector<8x128xf32>
    %137 = arith.mulf %121, %129 : vector<8x128xf32>
    %138 = arith.addf %136, %137 : vector<8x128xf32>
    %139 = math.tanh %138 : vector<8x128xf32>
    %140 = arith.mulf %135, %139 : vector<8x128xf32>
    %141 = arith.index_cast %111 : i32 to index
    %c0_38 = arith.constant 0 : index
    %142 = vector.load %arg12[%141, %c0_38] : memref<64x128xf32, #tpu.memory_space<vmem>>, vector<8x128xf32>
    tpu.vector_store %arg12[%141, %c0_38], %140 {strides = array<i32>} : memref<64x128xf32, #tpu.memory_space<vmem>>, vector<8x128xf32>,
    %c4_i32 = arith.constant 4 : i32
    %c8_i32_39 = arith.constant 8 : i32
    %143 = arith.muli %c4_i32, %c8_i32_39 : i32
    %144 = tpu.assume_multiple %143, 8 : i32
    %145 = arith.index_cast %144 : i32 to index
    %c0_40 = arith.constant 0 : index
    %146 = vector.load %arg11[%145, %c0_40] : memref<64x512xf32, #tpu.memory_space<vmem>>, vector<8x512xf32>
    %cst_41 = arith.constant dense<0.000000e+00> : vector<8x512xf32>
    %147 = tpu.matmul %140, %1, %cst_41 {dimension_numbers = #tpu.dot_dimension_numbers<[1], [0], [0], [1], [0, 0, 1, 1], [], []>} : vector<8x128xf32>, vector<128x512xf32>, vector<8x512xf32> -> vector<8x512xf32>
    %148 = arith.addf %146, %147 : vector<8x512xf32>
    %149 = vector.extract_strided_slice %148 {offsets = [0, 0], sizes = [8, 128], strides = [1, 1]} : vector<8x512xf32> to vector<8x128xf32>
    %150 = arith.negf %149 : vector<8x128xf32>
    %151 = math.exp %150 : vector<8x128xf32>
    %cst_42 = arith.constant 1.000000e+00 : f32
    %152 = vector.broadcast %cst_42 : f32 to vector<8x128xf32>
    %153 = arith.addf %152, %151 : vector<8x128xf32>
    %154 = arith.divf %152, %153 : vector<8x128xf32>
    %155 = vector.extract_strided_slice %148 {offsets = [0, 128], sizes = [8, 128], strides = [1, 1]} : vector<8x512xf32> to vector<8x128xf32>
    %156 = arith.negf %155 : vector<8x128xf32>
    %157 = math.exp %156 : vector<8x128xf32>
    %cst_43 = arith.constant 1.000000e+00 : f32
    %158 = vector.broadcast %cst_43 : f32 to vector<8x128xf32>
    %159 = arith.addf %158, %157 : vector<8x128xf32>
    %160 = arith.divf %158, %159 : vector<8x128xf32>
    %161 = vector.extract_strided_slice %148 {offsets = [0, 256], sizes = [8, 128], strides = [1, 1]} : vector<8x512xf32> to vector<8x128xf32>
    %162 = math.tanh %161 : vector<8x128xf32>
    %163 = vector.extract_strided_slice %148 {offsets = [0, 384], sizes = [8, 128], strides = [1, 1]} : vector<8x512xf32> to vector<8x128xf32>
    %164 = arith.negf %163 : vector<8x128xf32>
    %165 = math.exp %164 : vector<8x128xf32>
    %cst_44 = arith.constant 1.000000e+00 : f32
    %166 = vector.broadcast %cst_44 : f32 to vector<8x128xf32>
    %167 = arith.addf %166, %165 : vector<8x128xf32>
    %168 = arith.divf %166, %167 : vector<8x128xf32>
    %169 = arith.mulf %160, %138 : vector<8x128xf32>
    %170 = arith.mulf %154, %162 : vector<8x128xf32>
    %171 = arith.addf %169, %170 : vector<8x128xf32>
    %172 = math.tanh %171 : vector<8x128xf32>
    %173 = arith.mulf %168, %172 : vector<8x128xf32>
    %174 = arith.index_cast %144 : i32 to index
    %c0_45 = arith.constant 0 : index
    %175 = vector.load %arg12[%174, %c0_45] : memref<64x128xf32, #tpu.memory_space<vmem>>, vector<8x128xf32>
    tpu.vector_store %arg12[%174, %c0_45], %173 {strides = array<i32>} : memref<64x128xf32, #tpu.memory_space<vmem>>, vector<8x128xf32>,
    %c5_i32 = arith.constant 5 : i32
    %c8_i32_46 = arith.constant 8 : i32
    %176 = arith.muli %c5_i32, %c8_i32_46 : i32
    %177 = tpu.assume_multiple %176, 8 : i32
    %178 = arith.index_cast %177 : i32 to index
    %c0_47 = arith.constant 0 : index
    %179 = vector.load %arg11[%178, %c0_47] : memref<64x512xf32, #tpu.memory_space<vmem>>, vector<8x512xf32>
    %cst_48 = arith.constant dense<0.000000e+00> : vector<8x512xf32>
    %180 = tpu.matmul %173, %1, %cst_48 {dimension_numbers = #tpu.dot_dimension_numbers<[1], [0], [0], [1], [0, 0, 1, 1], [], []>} : vector<8x128xf32>, vector<128x512xf32>, vector<8x512xf32> -> vector<8x512xf32>
    %181 = arith.addf %179, %180 : vector<8x512xf32>
    %182 = vector.extract_strided_slice %181 {offsets = [0, 0], sizes = [8, 128], strides = [1, 1]} : vector<8x512xf32> to vector<8x128xf32>
    %183 = arith.negf %182 : vector<8x128xf32>
    %184 = math.exp %183 : vector<8x128xf32>
    %cst_49 = arith.constant 1.000000e+00 : f32
    %185 = vector.broadcast %cst_49 : f32 to vector<8x128xf32>
    %186 = arith.addf %185, %184 : vector<8x128xf32>
    %187 = arith.divf %185, %186 : vector<8x128xf32>
    %188 = vector.extract_strided_slice %181 {offsets = [0, 128], sizes = [8, 128], strides = [1, 1]} : vector<8x512xf32> to vector<8x128xf32>
    %189 = arith.negf %188 : vector<8x128xf32>
    %190 = math.exp %189 : vector<8x128xf32>
    %cst_50 = arith.constant 1.000000e+00 : f32
    %191 = vector.broadcast %cst_50 : f32 to vector<8x128xf32>
    %192 = arith.addf %191, %190 : vector<8x128xf32>
    %193 = arith.divf %191, %192 : vector<8x128xf32>
    %194 = vector.extract_strided_slice %181 {offsets = [0, 256], sizes = [8, 128], strides = [1, 1]} : vector<8x512xf32> to vector<8x128xf32>
    %195 = math.tanh %194 : vector<8x128xf32>
    %196 = vector.extract_strided_slice %181 {offsets = [0, 384], sizes = [8, 128], strides = [1, 1]} : vector<8x512xf32> to vector<8x128xf32>
    %197 = arith.negf %196 : vector<8x128xf32>
    %198 = math.exp %197 : vector<8x128xf32>
    %cst_51 = arith.constant 1.000000e+00 : f32
    %199 = vector.broadcast %cst_51 : f32 to vector<8x128xf32>
    %200 = arith.addf %199, %198 : vector<8x128xf32>
    %201 = arith.divf %199, %200 : vector<8x128xf32>
    %202 = arith.mulf %193, %171 : vector<8x128xf32>
    %203 = arith.mulf %187, %195 : vector<8x128xf32>
    %204 = arith.addf %202, %203 : vector<8x128xf32>
    %205 = math.tanh %204 : vector<8x128xf32>
    %206 = arith.mulf %201, %205 : vector<8x128xf32>
    %207 = arith.index_cast %177 : i32 to index
    %c0_52 = arith.constant 0 : index
    %208 = vector.load %arg12[%207, %c0_52] : memref<64x128xf32, #tpu.memory_space<vmem>>, vector<8x128xf32>
    tpu.vector_store %arg12[%207, %c0_52], %206 {strides = array<i32>} : memref<64x128xf32, #tpu.memory_space<vmem>>, vector<8x128xf32>,
    %c6_i32 = arith.constant 6 : i32
    %c8_i32_53 = arith.constant 8 : i32
    %209 = arith.muli %c6_i32, %c8_i32_53 : i32
    %210 = tpu.assume_multiple %209, 8 : i32
    %211 = arith.index_cast %210 : i32 to index
    %c0_54 = arith.constant 0 : index
    %212 = vector.load %arg11[%211, %c0_54] : memref<64x512xf32, #tpu.memory_space<vmem>>, vector<8x512xf32>
    %cst_55 = arith.constant dense<0.000000e+00> : vector<8x512xf32>
    %213 = tpu.matmul %206, %1, %cst_55 {dimension_numbers = #tpu.dot_dimension_numbers<[1], [0], [0], [1], [0, 0, 1, 1], [], []>} : vector<8x128xf32>, vector<128x512xf32>, vector<8x512xf32> -> vector<8x512xf32>
    %214 = arith.addf %212, %213 : vector<8x512xf32>
    %215 = vector.extract_strided_slice %214 {offsets = [0, 0], sizes = [8, 128], strides = [1, 1]} : vector<8x512xf32> to vector<8x128xf32>
    %216 = arith.negf %215 : vector<8x128xf32>
    %217 = math.exp %216 : vector<8x128xf32>
    %cst_56 = arith.constant 1.000000e+00 : f32
    %218 = vector.broadcast %cst_56 : f32 to vector<8x128xf32>
    %219 = arith.addf %218, %217 : vector<8x128xf32>
    %220 = arith.divf %218, %219 : vector<8x128xf32>
    %221 = vector.extract_strided_slice %214 {offsets = [0, 128], sizes = [8, 128], strides = [1, 1]} : vector<8x512xf32> to vector<8x128xf32>
    %222 = arith.negf %221 : vector<8x128xf32>
    %223 = math.exp %222 : vector<8x128xf32>
    %cst_57 = arith.constant 1.000000e+00 : f32
    %224 = vector.broadcast %cst_57 : f32 to vector<8x128xf32>
    %225 = arith.addf %224, %223 : vector<8x128xf32>
    %226 = arith.divf %224, %225 : vector<8x128xf32>
    %227 = vector.extract_strided_slice %214 {offsets = [0, 256], sizes = [8, 128], strides = [1, 1]} : vector<8x512xf32> to vector<8x128xf32>
    %228 = math.tanh %227 : vector<8x128xf32>
    %229 = vector.extract_strided_slice %214 {offsets = [0, 384], sizes = [8, 128], strides = [1, 1]} : vector<8x512xf32> to vector<8x128xf32>
    %230 = arith.negf %229 : vector<8x128xf32>
    %231 = math.exp %230 : vector<8x128xf32>
    %cst_58 = arith.constant 1.000000e+00 : f32
    %232 = vector.broadcast %cst_58 : f32 to vector<8x128xf32>
    %233 = arith.addf %232, %231 : vector<8x128xf32>
    %234 = arith.divf %232, %233 : vector<8x128xf32>
    %235 = arith.mulf %226, %204 : vector<8x128xf32>
    %236 = arith.mulf %220, %228 : vector<8x128xf32>
    %237 = arith.addf %235, %236 : vector<8x128xf32>
    %238 = math.tanh %237 : vector<8x128xf32>
    %239 = arith.mulf %234, %238 : vector<8x128xf32>
    %240 = arith.index_cast %210 : i32 to index
    %c0_59 = arith.constant 0 : index
    %241 = vector.load %arg12[%240, %c0_59] : memref<64x128xf32, #tpu.memory_space<vmem>>, vector<8x128xf32>
    tpu.vector_store %arg12[%240, %c0_59], %239 {strides = array<i32>} : memref<64x128xf32, #tpu.memory_space<vmem>>, vector<8x128xf32>,
    %c7_i32 = arith.constant 7 : i32
    %c8_i32_60 = arith.constant 8 : i32
    %242 = arith.muli %c7_i32, %c8_i32_60 : i32
    %243 = tpu.assume_multiple %242, 8 : i32
    %244 = arith.index_cast %243 : i32 to index
    %c0_61 = arith.constant 0 : index
    %245 = vector.load %arg11[%244, %c0_61] : memref<64x512xf32, #tpu.memory_space<vmem>>, vector<8x512xf32>
    %cst_62 = arith.constant dense<0.000000e+00> : vector<8x512xf32>
    %246 = tpu.matmul %239, %1, %cst_62 {dimension_numbers = #tpu.dot_dimension_numbers<[1], [0], [0], [1], [0, 0, 1, 1], [], []>} : vector<8x128xf32>, vector<128x512xf32>, vector<8x512xf32> -> vector<8x512xf32>
    %247 = arith.addf %245, %246 : vector<8x512xf32>
    %248 = vector.extract_strided_slice %247 {offsets = [0, 0], sizes = [8, 128], strides = [1, 1]} : vector<8x512xf32> to vector<8x128xf32>
    %249 = arith.negf %248 : vector<8x128xf32>
    %250 = math.exp %249 : vector<8x128xf32>
    %cst_63 = arith.constant 1.000000e+00 : f32
    %251 = vector.broadcast %cst_63 : f32 to vector<8x128xf32>
    %252 = arith.addf %251, %250 : vector<8x128xf32>
    %253 = arith.divf %251, %252 : vector<8x128xf32>
    %254 = vector.extract_strided_slice %247 {offsets = [0, 128], sizes = [8, 128], strides = [1, 1]} : vector<8x512xf32> to vector<8x128xf32>
    %255 = arith.negf %254 : vector<8x128xf32>
    %256 = math.exp %255 : vector<8x128xf32>
    %cst_64 = arith.constant 1.000000e+00 : f32
    %257 = vector.broadcast %cst_64 : f32 to vector<8x128xf32>
    %258 = arith.addf %257, %256 : vector<8x128xf32>
    %259 = arith.divf %257, %258 : vector<8x128xf32>
    %260 = vector.extract_strided_slice %247 {offsets = [0, 256], sizes = [8, 128], strides = [1, 1]} : vector<8x512xf32> to vector<8x128xf32>
    %261 = math.tanh %260 : vector<8x128xf32>
    %262 = vector.extract_strided_slice %247 {offsets = [0, 384], sizes = [8, 128], strides = [1, 1]} : vector<8x512xf32> to vector<8x128xf32>
    %263 = arith.negf %262 : vector<8x128xf32>
    %264 = math.exp %263 : vector<8x128xf32>
    %cst_65 = arith.constant 1.000000e+00 : f32
    %265 = vector.broadcast %cst_65 : f32 to vector<8x128xf32>
    %266 = arith.addf %265, %264 : vector<8x128xf32>
    %267 = arith.divf %265, %266 : vector<8x128xf32>
    %268 = arith.mulf %259, %237 : vector<8x128xf32>
    %269 = arith.mulf %253, %261 : vector<8x128xf32>
    %270 = arith.addf %268, %269 : vector<8x128xf32>
    %271 = math.tanh %270 : vector<8x128xf32>
    %272 = arith.mulf %267, %271 : vector<8x128xf32>
    %273 = arith.index_cast %243 : i32 to index
    %c0_66 = arith.constant 0 : index
    %274 = vector.load %arg12[%273, %c0_66] : memref<64x128xf32, #tpu.memory_space<vmem>>, vector<8x128xf32>
    tpu.vector_store %arg12[%273, %c0_66], %272 {strides = array<i32>} : memref<64x128xf32, #tpu.memory_space<vmem>>, vector<8x128xf32>,
    %c8_i32_67 = arith.constant 8 : i32
    %c0_68 = arith.constant 0 : index
    %c0_69 = arith.constant 0 : index
    %275 = vector.load %arg5[%c0_68, %c0_69] : memref<128x512xf32, #tpu.memory_space<vmem>>, vector<128x512xf32>
    %c0_70 = arith.constant 0 : index
    %c0_71 = arith.constant 0 : index
    %276 = vector.load %arg6[%c0_70, %c0_71] : memref<128x512xf32, #tpu.memory_space<vmem>>, vector<128x512xf32>
    %c0_72 = arith.constant 0 : index
    %c0_73 = arith.constant 0 : index
    %277 = vector.load %arg7[%c0_72, %c0_73] : memref<1x512xf32, #tpu.memory_space<vmem>>, vector<1x512xf32>
    %c0_74 = arith.constant 0 : index
    %c0_75 = arith.constant 0 : index
    %278 = vector.load %arg12[%c0_74, %c0_75] : memref<64x128xf32, #tpu.memory_space<vmem>>, vector<64x128xf32>
    %cst_76 = arith.constant dense<0.000000e+00> : vector<64x512xf32>
    %279 = tpu.matmul %278, %275, %cst_76 {dimension_numbers = #tpu.dot_dimension_numbers<[1], [0], [0], [1], [0, 0, 1, 1], [], []>} : vector<64x128xf32>, vector<128x512xf32>, vector<64x512xf32> -> vector<64x512xf32>
    %280 = vector.broadcast %277 : vector<1x512xf32> to vector<64x512xf32>
    %281 = arith.addf %279, %280 : vector<64x512xf32>
    %c0_77 = arith.constant 0 : index
    %c0_78 = arith.constant 0 : index
    %282 = vector.load %arg11[%c0_77, %c0_78] : memref<64x512xf32, #tpu.memory_space<vmem>>, vector<64x512xf32>
    tpu.vector_store %arg11[%c0_77, %c0_78], %281 {strides = array<i32>} : memref<64x512xf32, #tpu.memory_space<vmem>>, vector<64x512xf32>,
    %cst_79 = arith.constant 0.000000e+00 : f32
    %283 = vector.broadcast %cst_79 : f32 to vector<8x128xf32>
    %cst_80 = arith.constant 0.000000e+00 : f32
    %284 = vector.broadcast %cst_80 : f32 to vector<8x128xf32>
    %c0_i32_81 = arith.constant 0 : i32
    %c8_i32_82 = arith.constant 8 : i32
    %285 = arith.muli %c0_i32_81, %c8_i32_82 : i32
    %286 = tpu.assume_multiple %285, 8 : i32
    %287 = arith.index_cast %286 : i32 to index
    %c0_83 = arith.constant 0 : index
    %288 = vector.load %arg11[%287, %c0_83] : memref<64x512xf32, #tpu.memory_space<vmem>>, vector<8x512xf32>
    %cst_84 = arith.constant dense<0.000000e+00> : vector<8x512xf32>
    %289 = tpu.matmul %283, %276, %cst_84 {dimension_numbers = #tpu.dot_dimension_numbers<[1], [0], [0], [1], [0, 0, 1, 1], [], []>} : vector<8x128xf32>, vector<128x512xf32>, vector<8x512xf32> -> vector<8x512xf32>
    %290 = arith.addf %288, %289 : vector<8x512xf32>
    %291 = vector.extract_strided_slice %290 {offsets = [0, 0], sizes = [8, 128], strides = [1, 1]} : vector<8x512xf32> to vector<8x128xf32>
    %292 = arith.negf %291 : vector<8x128xf32>
    %293 = math.exp %292 : vector<8x128xf32>
    %cst_85 = arith.constant 1.000000e+00 : f32
    %294 = vector.broadcast %cst_85 : f32 to vector<8x128xf32>
    %295 = arith.addf %294, %293 : vector<8x128xf32>
    %296 = arith.divf %294, %295 : vector<8x128xf32>
    %297 = vector.extract_strided_slice %290 {offsets = [0, 128], sizes = [8, 128], strides = [1, 1]} : vector<8x512xf32> to vector<8x128xf32>
    %298 = arith.negf %297 : vector<8x128xf32>
    %299 = math.exp %298 : vector<8x128xf32>
    %cst_86 = arith.constant 1.000000e+00 : f32
    %300 = vector.broadcast %cst_86 : f32 to vector<8x128xf32>
    %301 = arith.addf %300, %299 : vector<8x128xf32>
    %302 = arith.divf %300, %301 : vector<8x128xf32>
    %303 = vector.extract_strided_slice %290 {offsets = [0, 256], sizes = [8, 128], strides = [1, 1]} : vector<8x512xf32> to vector<8x128xf32>
    %304 = math.tanh %303 : vector<8x128xf32>
    %305 = vector.extract_strided_slice %290 {offsets = [0, 384], sizes = [8, 128], strides = [1, 1]} : vector<8x512xf32> to vector<8x128xf32>
    %306 = arith.negf %305 : vector<8x128xf32>
    %307 = math.exp %306 : vector<8x128xf32>
    %cst_87 = arith.constant 1.000000e+00 : f32
    %308 = vector.broadcast %cst_87 : f32 to vector<8x128xf32>
    %309 = arith.addf %308, %307 : vector<8x128xf32>
    %310 = arith.divf %308, %309 : vector<8x128xf32>
    %311 = arith.mulf %302, %284 : vector<8x128xf32>
    %312 = arith.mulf %296, %304 : vector<8x128xf32>
    %313 = arith.addf %311, %312 : vector<8x128xf32>
    %314 = math.tanh %313 : vector<8x128xf32>
    %315 = arith.mulf %310, %314 : vector<8x128xf32>
    %c1_i32_88 = arith.constant 1 : i32
    %c8_i32_89 = arith.constant 8 : i32
    %316 = arith.muli %c1_i32_88, %c8_i32_89 : i32
    %317 = tpu.assume_multiple %316, 8 : i32
    %318 = arith.index_cast %317 : i32 to index
    %c0_90 = arith.constant 0 : index
    %319 = vector.load %arg11[%318, %c0_90] : memref<64x512xf32, #tpu.memory_space<vmem>>, vector<8x512xf32>
    %cst_91 = arith.constant dense<0.000000e+00> : vector<8x512xf32>
    %320 = tpu.matmul %315, %276, %cst_91 {dimension_numbers = #tpu.dot_dimension_numbers<[1], [0], [0], [1], [0, 0, 1, 1], [], []>} : vector<8x128xf32>, vector<128x512xf32>, vector<8x512xf32> -> vector<8x512xf32>
    %321 = arith.addf %319, %320 : vector<8x512xf32>
    %322 = vector.extract_strided_slice %321 {offsets = [0, 0], sizes = [8, 128], strides = [1, 1]} : vector<8x512xf32> to vector<8x128xf32>
    %323 = arith.negf %322 : vector<8x128xf32>
    %324 = math.exp %323 : vector<8x128xf32>
    %cst_92 = arith.constant 1.000000e+00 : f32
    %325 = vector.broadcast %cst_92 : f32 to vector<8x128xf32>
    %326 = arith.addf %325, %324 : vector<8x128xf32>
    %327 = arith.divf %325, %326 : vector<8x128xf32>
    %328 = vector.extract_strided_slice %321 {offsets = [0, 128], sizes = [8, 128], strides = [1, 1]} : vector<8x512xf32> to vector<8x128xf32>
    %329 = arith.negf %328 : vector<8x128xf32>
    %330 = math.exp %329 : vector<8x128xf32>
    %cst_93 = arith.constant 1.000000e+00 : f32
    %331 = vector.broadcast %cst_93 : f32 to vector<8x128xf32>
    %332 = arith.addf %331, %330 : vector<8x128xf32>
    %333 = arith.divf %331, %332 : vector<8x128xf32>
    %334 = vector.extract_strided_slice %321 {offsets = [0, 256], sizes = [8, 128], strides = [1, 1]} : vector<8x512xf32> to vector<8x128xf32>
    %335 = math.tanh %334 : vector<8x128xf32>
    %336 = vector.extract_strided_slice %321 {offsets = [0, 384], sizes = [8, 128], strides = [1, 1]} : vector<8x512xf32> to vector<8x128xf32>
    %337 = arith.negf %336 : vector<8x128xf32>
    %338 = math.exp %337 : vector<8x128xf32>
    %cst_94 = arith.constant 1.000000e+00 : f32
    %339 = vector.broadcast %cst_94 : f32 to vector<8x128xf32>
    %340 = arith.addf %339, %338 : vector<8x128xf32>
    %341 = arith.divf %339, %340 : vector<8x128xf32>
    %342 = arith.mulf %333, %313 : vector<8x128xf32>
    %343 = arith.mulf %327, %335 : vector<8x128xf32>
    %344 = arith.addf %342, %343 : vector<8x128xf32>
    %345 = math.tanh %344 : vector<8x128xf32>
    %346 = arith.mulf %341, %345 : vector<8x128xf32>
    %c2_i32_95 = arith.constant 2 : i32
    %c8_i32_96 = arith.constant 8 : i32
    %347 = arith.muli %c2_i32_95, %c8_i32_96 : i32
    %348 = tpu.assume_multiple %347, 8 : i32
    %349 = arith.index_cast %348 : i32 to index
    %c0_97 = arith.constant 0 : index
    %350 = vector.load %arg11[%349, %c0_97] : memref<64x512xf32, #tpu.memory_space<vmem>>, vector<8x512xf32>
    %cst_98 = arith.constant dense<0.000000e+00> : vector<8x512xf32>
    %351 = tpu.matmul %346, %276, %cst_98 {dimension_numbers = #tpu.dot_dimension_numbers<[1], [0], [0], [1], [0, 0, 1, 1], [], []>} : vector<8x128xf32>, vector<128x512xf32>, vector<8x512xf32> -> vector<8x512xf32>
    %352 = arith.addf %350, %351 : vector<8x512xf32>
    %353 = vector.extract_strided_slice %352 {offsets = [0, 0], sizes = [8, 128], strides = [1, 1]} : vector<8x512xf32> to vector<8x128xf32>
    %354 = arith.negf %353 : vector<8x128xf32>
    %355 = math.exp %354 : vector<8x128xf32>
    %cst_99 = arith.constant 1.000000e+00 : f32
    %356 = vector.broadcast %cst_99 : f32 to vector<8x128xf32>
    %357 = arith.addf %356, %355 : vector<8x128xf32>
    %358 = arith.divf %356, %357 : vector<8x128xf32>
    %359 = vector.extract_strided_slice %352 {offsets = [0, 128], sizes = [8, 128], strides = [1, 1]} : vector<8x512xf32> to vector<8x128xf32>
    %360 = arith.negf %359 : vector<8x128xf32>
    %361 = math.exp %360 : vector<8x128xf32>
    %cst_100 = arith.constant 1.000000e+00 : f32
    %362 = vector.broadcast %cst_100 : f32 to vector<8x128xf32>
    %363 = arith.addf %362, %361 : vector<8x128xf32>
    %364 = arith.divf %362, %363 : vector<8x128xf32>
    %365 = vector.extract_strided_slice %352 {offsets = [0, 256], sizes = [8, 128], strides = [1, 1]} : vector<8x512xf32> to vector<8x128xf32>
    %366 = math.tanh %365 : vector<8x128xf32>
    %367 = vector.extract_strided_slice %352 {offsets = [0, 384], sizes = [8, 128], strides = [1, 1]} : vector<8x512xf32> to vector<8x128xf32>
    %368 = arith.negf %367 : vector<8x128xf32>
    %369 = math.exp %368 : vector<8x128xf32>
    %cst_101 = arith.constant 1.000000e+00 : f32
    %370 = vector.broadcast %cst_101 : f32 to vector<8x128xf32>
    %371 = arith.addf %370, %369 : vector<8x128xf32>
    %372 = arith.divf %370, %371 : vector<8x128xf32>
    %373 = arith.mulf %364, %344 : vector<8x128xf32>
    %374 = arith.mulf %358, %366 : vector<8x128xf32>
    %375 = arith.addf %373, %374 : vector<8x128xf32>
    %376 = math.tanh %375 : vector<8x128xf32>
    %377 = arith.mulf %372, %376 : vector<8x128xf32>
    %c3_i32_102 = arith.constant 3 : i32
    %c8_i32_103 = arith.constant 8 : i32
    %378 = arith.muli %c3_i32_102, %c8_i32_103 : i32
    %379 = tpu.assume_multiple %378, 8 : i32
    %380 = arith.index_cast %379 : i32 to index
    %c0_104 = arith.constant 0 : index
    %381 = vector.load %arg11[%380, %c0_104] : memref<64x512xf32, #tpu.memory_space<vmem>>, vector<8x512xf32>
    %cst_105 = arith.constant dense<0.000000e+00> : vector<8x512xf32>
    %382 = tpu.matmul %377, %276, %cst_105 {dimension_numbers = #tpu.dot_dimension_numbers<[1], [0], [0], [1], [0, 0, 1, 1], [], []>} : vector<8x128xf32>, vector<128x512xf32>, vector<8x512xf32> -> vector<8x512xf32>
    %383 = arith.addf %381, %382 : vector<8x512xf32>
    %384 = vector.extract_strided_slice %383 {offsets = [0, 0], sizes = [8, 128], strides = [1, 1]} : vector<8x512xf32> to vector<8x128xf32>
    %385 = arith.negf %384 : vector<8x128xf32>
    %386 = math.exp %385 : vector<8x128xf32>
    %cst_106 = arith.constant 1.000000e+00 : f32
    %387 = vector.broadcast %cst_106 : f32 to vector<8x128xf32>
    %388 = arith.addf %387, %386 : vector<8x128xf32>
    %389 = arith.divf %387, %388 : vector<8x128xf32>
    %390 = vector.extract_strided_slice %383 {offsets = [0, 128], sizes = [8, 128], strides = [1, 1]} : vector<8x512xf32> to vector<8x128xf32>
    %391 = arith.negf %390 : vector<8x128xf32>
    %392 = math.exp %391 : vector<8x128xf32>
    %cst_107 = arith.constant 1.000000e+00 : f32
    %393 = vector.broadcast %cst_107 : f32 to vector<8x128xf32>
    %394 = arith.addf %393, %392 : vector<8x128xf32>
    %395 = arith.divf %393, %394 : vector<8x128xf32>
    %396 = vector.extract_strided_slice %383 {offsets = [0, 256], sizes = [8, 128], strides = [1, 1]} : vector<8x512xf32> to vector<8x128xf32>
    %397 = math.tanh %396 : vector<8x128xf32>
    %398 = vector.extract_strided_slice %383 {offsets = [0, 384], sizes = [8, 128], strides = [1, 1]} : vector<8x512xf32> to vector<8x128xf32>
    %399 = arith.negf %398 : vector<8x128xf32>
    %400 = math.exp %399 : vector<8x128xf32>
    %cst_108 = arith.constant 1.000000e+00 : f32
    %401 = vector.broadcast %cst_108 : f32 to vector<8x128xf32>
    %402 = arith.addf %401, %400 : vector<8x128xf32>
    %403 = arith.divf %401, %402 : vector<8x128xf32>
    %404 = arith.mulf %395, %375 : vector<8x128xf32>
    %405 = arith.mulf %389, %397 : vector<8x128xf32>
    %406 = arith.addf %404, %405 : vector<8x128xf32>
    %407 = math.tanh %406 : vector<8x128xf32>
    %408 = arith.mulf %403, %407 : vector<8x128xf32>
    %c4_i32_109 = arith.constant 4 : i32
    %c8_i32_110 = arith.constant 8 : i32
    %409 = arith.muli %c4_i32_109, %c8_i32_110 : i32
    %410 = tpu.assume_multiple %409, 8 : i32
    %411 = arith.index_cast %410 : i32 to index
    %c0_111 = arith.constant 0 : index
    %412 = vector.load %arg11[%411, %c0_111] : memref<64x512xf32, #tpu.memory_space<vmem>>, vector<8x512xf32>
    %cst_112 = arith.constant dense<0.000000e+00> : vector<8x512xf32>
    %413 = tpu.matmul %408, %276, %cst_112 {dimension_numbers = #tpu.dot_dimension_numbers<[1], [0], [0], [1], [0, 0, 1, 1], [], []>} : vector<8x128xf32>, vector<128x512xf32>, vector<8x512xf32> -> vector<8x512xf32>
    %414 = arith.addf %412, %413 : vector<8x512xf32>
    %415 = vector.extract_strided_slice %414 {offsets = [0, 0], sizes = [8, 128], strides = [1, 1]} : vector<8x512xf32> to vector<8x128xf32>
    %416 = arith.negf %415 : vector<8x128xf32>
    %417 = math.exp %416 : vector<8x128xf32>
    %cst_113 = arith.constant 1.000000e+00 : f32
    %418 = vector.broadcast %cst_113 : f32 to vector<8x128xf32>
    %419 = arith.addf %418, %417 : vector<8x128xf32>
    %420 = arith.divf %418, %419 : vector<8x128xf32>
    %421 = vector.extract_strided_slice %414 {offsets = [0, 128], sizes = [8, 128], strides = [1, 1]} : vector<8x512xf32> to vector<8x128xf32>
    %422 = arith.negf %421 : vector<8x128xf32>
    %423 = math.exp %422 : vector<8x128xf32>
    %cst_114 = arith.constant 1.000000e+00 : f32
    %424 = vector.broadcast %cst_114 : f32 to vector<8x128xf32>
    %425 = arith.addf %424, %423 : vector<8x128xf32>
    %426 = arith.divf %424, %425 : vector<8x128xf32>
    %427 = vector.extract_strided_slice %414 {offsets = [0, 256], sizes = [8, 128], strides = [1, 1]} : vector<8x512xf32> to vector<8x128xf32>
    %428 = math.tanh %427 : vector<8x128xf32>
    %429 = vector.extract_strided_slice %414 {offsets = [0, 384], sizes = [8, 128], strides = [1, 1]} : vector<8x512xf32> to vector<8x128xf32>
    %430 = arith.negf %429 : vector<8x128xf32>
    %431 = math.exp %430 : vector<8x128xf32>
    %cst_115 = arith.constant 1.000000e+00 : f32
    %432 = vector.broadcast %cst_115 : f32 to vector<8x128xf32>
    %433 = arith.addf %432, %431 : vector<8x128xf32>
    %434 = arith.divf %432, %433 : vector<8x128xf32>
    %435 = arith.mulf %426, %406 : vector<8x128xf32>
    %436 = arith.mulf %420, %428 : vector<8x128xf32>
    %437 = arith.addf %435, %436 : vector<8x128xf32>
    %438 = math.tanh %437 : vector<8x128xf32>
    %439 = arith.mulf %434, %438 : vector<8x128xf32>
    %c5_i32_116 = arith.constant 5 : i32
    %c8_i32_117 = arith.constant 8 : i32
    %440 = arith.muli %c5_i32_116, %c8_i32_117 : i32
    %441 = tpu.assume_multiple %440, 8 : i32
    %442 = arith.index_cast %441 : i32 to index
    %c0_118 = arith.constant 0 : index
    %443 = vector.load %arg11[%442, %c0_118] : memref<64x512xf32, #tpu.memory_space<vmem>>, vector<8x512xf32>
    %cst_119 = arith.constant dense<0.000000e+00> : vector<8x512xf32>
    %444 = tpu.matmul %439, %276, %cst_119 {dimension_numbers = #tpu.dot_dimension_numbers<[1], [0], [0], [1], [0, 0, 1, 1], [], []>} : vector<8x128xf32>, vector<128x512xf32>, vector<8x512xf32> -> vector<8x512xf32>
    %445 = arith.addf %443, %444 : vector<8x512xf32>
    %446 = vector.extract_strided_slice %445 {offsets = [0, 0], sizes = [8, 128], strides = [1, 1]} : vector<8x512xf32> to vector<8x128xf32>
    %447 = arith.negf %446 : vector<8x128xf32>
    %448 = math.exp %447 : vector<8x128xf32>
    %cst_120 = arith.constant 1.000000e+00 : f32
    %449 = vector.broadcast %cst_120 : f32 to vector<8x128xf32>
    %450 = arith.addf %449, %448 : vector<8x128xf32>
    %451 = arith.divf %449, %450 : vector<8x128xf32>
    %452 = vector.extract_strided_slice %445 {offsets = [0, 128], sizes = [8, 128], strides = [1, 1]} : vector<8x512xf32> to vector<8x128xf32>
    %453 = arith.negf %452 : vector<8x128xf32>
    %454 = math.exp %453 : vector<8x128xf32>
    %cst_121 = arith.constant 1.000000e+00 : f32
    %455 = vector.broadcast %cst_121 : f32 to vector<8x128xf32>
    %456 = arith.addf %455, %454 : vector<8x128xf32>
    %457 = arith.divf %455, %456 : vector<8x128xf32>
    %458 = vector.extract_strided_slice %445 {offsets = [0, 256], sizes = [8, 128], strides = [1, 1]} : vector<8x512xf32> to vector<8x128xf32>
    %459 = math.tanh %458 : vector<8x128xf32>
    %460 = vector.extract_strided_slice %445 {offsets = [0, 384], sizes = [8, 128], strides = [1, 1]} : vector<8x512xf32> to vector<8x128xf32>
    %461 = arith.negf %460 : vector<8x128xf32>
    %462 = math.exp %461 : vector<8x128xf32>
    %cst_122 = arith.constant 1.000000e+00 : f32
    %463 = vector.broadcast %cst_122 : f32 to vector<8x128xf32>
    %464 = arith.addf %463, %462 : vector<8x128xf32>
    %465 = arith.divf %463, %464 : vector<8x128xf32>
    %466 = arith.mulf %457, %437 : vector<8x128xf32>
    %467 = arith.mulf %451, %459 : vector<8x128xf32>
    %468 = arith.addf %466, %467 : vector<8x128xf32>
    %469 = math.tanh %468 : vector<8x128xf32>
    %470 = arith.mulf %465, %469 : vector<8x128xf32>
    %c6_i32_123 = arith.constant 6 : i32
    %c8_i32_124 = arith.constant 8 : i32
    %471 = arith.muli %c6_i32_123, %c8_i32_124 : i32
    %472 = tpu.assume_multiple %471, 8 : i32
    %473 = arith.index_cast %472 : i32 to index
    %c0_125 = arith.constant 0 : index
    %474 = vector.load %arg11[%473, %c0_125] : memref<64x512xf32, #tpu.memory_space<vmem>>, vector<8x512xf32>
    %cst_126 = arith.constant dense<0.000000e+00> : vector<8x512xf32>
    %475 = tpu.matmul %470, %276, %cst_126 {dimension_numbers = #tpu.dot_dimension_numbers<[1], [0], [0], [1], [0, 0, 1, 1], [], []>} : vector<8x128xf32>, vector<128x512xf32>, vector<8x512xf32> -> vector<8x512xf32>
    %476 = arith.addf %474, %475 : vector<8x512xf32>
    %477 = vector.extract_strided_slice %476 {offsets = [0, 0], sizes = [8, 128], strides = [1, 1]} : vector<8x512xf32> to vector<8x128xf32>
    %478 = arith.negf %477 : vector<8x128xf32>
    %479 = math.exp %478 : vector<8x128xf32>
    %cst_127 = arith.constant 1.000000e+00 : f32
    %480 = vector.broadcast %cst_127 : f32 to vector<8x128xf32>
    %481 = arith.addf %480, %479 : vector<8x128xf32>
    %482 = arith.divf %480, %481 : vector<8x128xf32>
    %483 = vector.extract_strided_slice %476 {offsets = [0, 128], sizes = [8, 128], strides = [1, 1]} : vector<8x512xf32> to vector<8x128xf32>
    %484 = arith.negf %483 : vector<8x128xf32>
    %485 = math.exp %484 : vector<8x128xf32>
    %cst_128 = arith.constant 1.000000e+00 : f32
    %486 = vector.broadcast %cst_128 : f32 to vector<8x128xf32>
    %487 = arith.addf %486, %485 : vector<8x128xf32>
    %488 = arith.divf %486, %487 : vector<8x128xf32>
    %489 = vector.extract_strided_slice %476 {offsets = [0, 256], sizes = [8, 128], strides = [1, 1]} : vector<8x512xf32> to vector<8x128xf32>
    %490 = math.tanh %489 : vector<8x128xf32>
    %491 = vector.extract_strided_slice %476 {offsets = [0, 384], sizes = [8, 128], strides = [1, 1]} : vector<8x512xf32> to vector<8x128xf32>
    %492 = arith.negf %491 : vector<8x128xf32>
    %493 = math.exp %492 : vector<8x128xf32>
    %cst_129 = arith.constant 1.000000e+00 : f32
    %494 = vector.broadcast %cst_129 : f32 to vector<8x128xf32>
    %495 = arith.addf %494, %493 : vector<8x128xf32>
    %496 = arith.divf %494, %495 : vector<8x128xf32>
    %497 = arith.mulf %488, %468 : vector<8x128xf32>
    %498 = arith.mulf %482, %490 : vector<8x128xf32>
    %499 = arith.addf %497, %498 : vector<8x128xf32>
    %500 = math.tanh %499 : vector<8x128xf32>
    %501 = arith.mulf %496, %500 : vector<8x128xf32>
    %c7_i32_130 = arith.constant 7 : i32
    %c8_i32_131 = arith.constant 8 : i32
    %502 = arith.muli %c7_i32_130, %c8_i32_131 : i32
    %503 = tpu.assume_multiple %502, 8 : i32
    %504 = arith.index_cast %503 : i32 to index
    %c0_132 = arith.constant 0 : index
    %505 = vector.load %arg11[%504, %c0_132] : memref<64x512xf32, #tpu.memory_space<vmem>>, vector<8x512xf32>
    %cst_133 = arith.constant dense<0.000000e+00> : vector<8x512xf32>
    %506 = tpu.matmul %501, %276, %cst_133 {dimension_numbers = #tpu.dot_dimension_numbers<[1], [0], [0], [1], [0, 0, 1, 1], [], []>} : vector<8x128xf32>, vector<128x512xf32>, vector<8x512xf32> -> vector<8x512xf32>
    %507 = arith.addf %505, %506 : vector<8x512xf32>
    %508 = vector.extract_strided_slice %507 {offsets = [0, 0], sizes = [8, 128], strides = [1, 1]} : vector<8x512xf32> to vector<8x128xf32>
    %509 = arith.negf %508 : vector<8x128xf32>
    %510 = math.exp %509 : vector<8x128xf32>
    %cst_134 = arith.constant 1.000000e+00 : f32
    %511 = vector.broadcast %cst_134 : f32 to vector<8x128xf32>
    %512 = arith.addf %511, %510 : vector<8x128xf32>
    %513 = arith.divf %511, %512 : vector<8x128xf32>
    %514 = vector.extract_strided_slice %507 {offsets = [0, 128], sizes = [8, 128], strides = [1, 1]} : vector<8x512xf32> to vector<8x128xf32>
    %515 = arith.negf %514 : vector<8x128xf32>
    %516 = math.exp %515 : vector<8x128xf32>
    %cst_135 = arith.constant 1.000000e+00 : f32
    %517 = vector.broadcast %cst_135 : f32 to vector<8x128xf32>
    %518 = arith.addf %517, %516 : vector<8x128xf32>
    %519 = arith.divf %517, %518 : vector<8x128xf32>
    %520 = vector.extract_strided_slice %507 {offsets = [0, 256], sizes = [8, 128], strides = [1, 1]} : vector<8x512xf32> to vector<8x128xf32>
    %521 = math.tanh %520 : vector<8x128xf32>
    %522 = vector.extract_strided_slice %507 {offsets = [0, 384], sizes = [8, 128], strides = [1, 1]} : vector<8x512xf32> to vector<8x128xf32>
    %523 = arith.negf %522 : vector<8x128xf32>
    %524 = math.exp %523 : vector<8x128xf32>
    %cst_136 = arith.constant 1.000000e+00 : f32
    %525 = vector.broadcast %cst_136 : f32 to vector<8x128xf32>
    %526 = arith.addf %525, %524 : vector<8x128xf32>
    %527 = arith.divf %525, %526 : vector<8x128xf32>
    %528 = arith.mulf %519, %499 : vector<8x128xf32>
    %529 = arith.mulf %513, %521 : vector<8x128xf32>
    %530 = arith.addf %528, %529 : vector<8x128xf32>
    %531 = math.tanh %530 : vector<8x128xf32>
    %532 = arith.mulf %527, %531 : vector<8x128xf32>
    %c8_i32_137 = arith.constant 8 : i32
    %c0_138 = arith.constant 0 : index
    %c0_139 = arith.constant 0 : index
    %533 = vector.load %arg8[%c0_138, %c0_139] : memref<128x128xf32, #tpu.memory_space<vmem>>, vector<128x128xf32>
    %cst_140 = arith.constant dense<0.000000e+00> : vector<8x128xf32>
    %534 = tpu.matmul %532, %533, %cst_140 {dimension_numbers = #tpu.dot_dimension_numbers<[1], [0], [0], [1], [0, 0, 1, 1], [], []>} : vector<8x128xf32>, vector<128x128xf32>, vector<8x128xf32> -> vector<8x128xf32>
    %c0_141 = arith.constant 0 : index
    %c0_142 = arith.constant 0 : index
    %535 = vector.load %arg9[%c0_141, %c0_142] : memref<1x128xf32, #tpu.memory_space<vmem>>, vector<1x128xf32>
    %536 = vector.broadcast %535 : vector<1x128xf32> to vector<8x128xf32>
    %537 = arith.addf %534, %536 : vector<8x128xf32>
    %c0_143 = arith.constant 0 : index
    %c0_144 = arith.constant 0 : index
    %538 = vector.load %arg10[%c0_143, %c0_144] : memref<8x128xf32, #tpu.memory_space<vmem>>, vector<8x128xf32>
    tpu.vector_store %arg10[%c0_143, %c0_144], %537 {strides = array<i32>} : memref<8x128xf32, #tpu.memory_space<vmem>>, vector<8x128xf32>,
    return
  }
  func.func @transform_0(%arg0: i32) -> (i32, i32, i32) {
    %c0_i32 = arith.constant 0 : i32
    %c0_i32_0 = arith.constant 0 : i32
    %c0_i32_1 = arith.constant 0 : i32
    return %arg0, %c0_i32, %c0_i32_0 : i32, i32, i32
  }
  func.func @transform_1(%arg0: i32) -> (i32, i32) {
    %c0_i32 = arith.constant 0 : i32
    %c0_i32_0 = arith.constant 0 : i32
    %c0_i32_1 = arith.constant 0 : i32
    return %c0_i32, %c0_i32_0 : i32, i32
  }
  func.func @transform_2(%arg0: i32) -> (i32, i32) {
    %c0_i32 = arith.constant 0 : i32
    %c0_i32_0 = arith.constant 0 : i32
    %c0_i32_1 = arith.constant 0 : i32
    return %c0_i32, %c0_i32_0 : i32, i32
  }
  func.func @transform_3(%arg0: i32) -> (i32, i32) {
    %c0_i32 = arith.constant 0 : i32
    %c0_i32_0 = arith.constant 0 : i32
    %c0_i32_1 = arith.constant 0 : i32
    return %c0_i32, %c0_i32_0 : i32, i32
  }
  func.func @transform_4(%arg0: i32) -> (i32, i32) {
    %c0_i32 = arith.constant 0 : i32
    %c0_i32_0 = arith.constant 0 : i32
    %c0_i32_1 = arith.constant 0 : i32
    return %c0_i32, %c0_i32_0 : i32, i32
  }
  func.func @transform_5(%arg0: i32) -> (i32, i32) {
    %c0_i32 = arith.constant 0 : i32
    %c0_i32_0 = arith.constant 0 : i32
    %c0_i32_1 = arith.constant 0 : i32
    return %c0_i32, %c0_i32_0 : i32, i32
  }
  func.func @transform_6(%arg0: i32) -> (i32, i32) {
    %c0_i32 = arith.constant 0 : i32
    %c0_i32_0 = arith.constant 0 : i32
    %c0_i32_1 = arith.constant 0 : i32
    return %c0_i32, %c0_i32_0 : i32, i32
  }
  func.func @transform_7(%arg0: i32) -> (i32, i32) {
    %c0_i32 = arith.constant 0 : i32
    %c0_i32_0 = arith.constant 0 : i32
    %c0_i32_1 = arith.constant 0 : i32
    return %c0_i32, %c0_i32_0 : i32, i32
  }
  func.func @transform_8(%arg0: i32) -> (i32, i32) {
    %c0_i32 = arith.constant 0 : i32
    %c0_i32_0 = arith.constant 0 : i32
    %c0_i32_1 = arith.constant 0 : i32
    return %c0_i32, %c0_i32_0 : i32, i32
  }
  func.func @transform_9(%arg0: i32) -> (i32, i32) {
    %c0_i32 = arith.constant 0 : i32
    %c0_i32_0 = arith.constant 0 : i32
    return %arg0, %c0_i32 : i32, i32
  }
}

</mosaic_0001>

<llo_original>
// kernel: tpu_custom_call.1
$region0: #{tpu_custom_call.1}
  #allocation0 [shape = 'u32[]', space=smem, size = 0x4, offset = 0x4, fixed_abs, tag = 'smem constant byte address 0x4 - core index']
  #allocation1 [shape = 'u32[144,128]{1,0:T(1,128)}', space=vmem, size = 0x12000, scoped, tag = 'internal scratch']
  #allocation2 [shape = 'f32[64,512]{1,0:T(8,128)}', space=vmem, size = 0x20000, scoped, tag = 'scratch operand']
  #allocation3 [shape = 'f32[64,128]{1,0:T(8,128)}', space=vmem, size = 0x8000, scoped, tag = 'scratch operand']
  %s0 = inlined_call_operand.vmem [shape: f32[1,64,16], index: 0, kind: input, shape index: {}]
  %s1 = inlined_call_operand.vmem [shape: f32[16,512], index: 1, kind: input, shape index: {}]
  %s2 = inlined_call_operand.hbm [shape: f32[128,512], index: 2, kind: input, shape index: {}]
  %s3 = inlined_call_operand.vmem [shape: f32[1,512], index: 3, kind: input, shape index: {}]
  %s4 = inlined_call_operand.hbm [shape: f32[128,512], index: 4, kind: input, shape index: {}]
  %s5 = inlined_call_operand.hbm [shape: f32[128,512], index: 5, kind: input, shape index: {}]
  %s6 = inlined_call_operand.vmem [shape: f32[1,512], index: 6, kind: input, shape index: {}]
  %s7 = inlined_call_operand.hbm [shape: f32[128,128], index: 7, kind: input, shape index: {}]
  %s8 = inlined_call_operand.vmem [shape: f32[1,128], index: 8, kind: input, shape index: {}]
  %s9 = inlined_call_operand.hbm [shape: f32[8,128], index: 9, kind: output, shape index: {}]
  %s10 = sld [smem:[#allocation0]]
  $region62: #{tpu_custom_call.1} parent=0
    _
  %s12 = ssub.s32 1, %s10
  %s13 = scalar_select 0, %s12, %s10
  $region1: #{tpu_custom_call.1} parent=0
    #allocation4 [shape = 'u8[262144]{0}', space=vmem, size = 0x40000, scoped, tag = 'input window, operand 2, single buffered']
    #allocation5 [shape = 's32[1]{0}', space=sflag, size = 0x4, scoped, tag = 'scoped memory for tpu_custom_call.1']
    #allocation6 [shape = 's32[1]{0}', space=sflag, size = 0x4, scoped, tag = 'scoped memory for tpu_custom_call.1']
    #allocation7 [shape = 'u8[262144]{0}', space=vmem, size = 0x40000, scoped, tag = 'input window, operand 4, single buffered']
    #allocation8 [shape = 's32[1]{0}', space=sflag, size = 0x4, scoped, tag = 'scoped memory for tpu_custom_call.1']
    #allocation9 [shape = 'u8[262144]{0}', space=vmem, size = 0x40000, scoped, tag = 'input window, operand 5, single buffered']
    #allocation10 [shape = 'u8[65536]{0}', space=vmem, size = 0x10000, scoped, tag = 'input window, operand 7, single buffered']
    #allocation11 [shape = 's32[1]{0}', space=sflag, size = 0x4, scoped, tag = 'scoped memory for tpu_custom_call.1']
    #allocation12 [shape = 'u8[4096]{0}', space=vmem, size = 0x1000, scoped, tag = 'output window, operand 0, single buffered']
    %14 = vsyncpa [#allocation5], 0
    %15 = vsyncpa [#allocation8], 0
    %16 = vsyncpa [#allocation11], 0
    %17 = vsyncpa [#allocation6], 0
    // Predicated region
    $region2: #{tpu_custom_call.1} parent=1 // pred_check
      _
    $region3: #{tpu_custom_call.1} parent=1 // pred_check_branch
      %19 = sbr.rel (0) target = $region5
    $region4: #{tpu_custom_call.1} parent=1 // pred_region
      _
    $region5: #{tpu_custom_call.1} parent=1 // pred_fallthru
      _
    // Predicated region
    $region6: #{tpu_custom_call.1} parent=1 // pred_check
      _
    $region7: #{tpu_custom_call.1} parent=1 // pred_check_branch
      %21 = sbr.rel (0) target = $region9
    $region8: #{tpu_custom_call.1} parent=1 // pred_region
      _
    $region9: #{tpu_custom_call.1} parent=1 // pred_fallthru
      _
    // Predicated region
    $region10: #{tpu_custom_call.1} parent=1 // pred_check
      _
    $region11: #{tpu_custom_call.1} parent=1 // pred_check_branch
      %23 = sbr.rel (0) target = $region13
    $region12: #{tpu_custom_call.1} parent=1 // pred_region
      %s25 = ssub.s32 8192, 8192
      %26 = vsyncadd [#allocation5], %s25
      %s27 = sshll.u32 [#allocation4], 4
      %s28 = int_to_ptr.vmem [resolvable:$true] %s27
      %33 = dma.hbm_to_vmem [thread:$0]  %s2, 8192, %s28, [#allocation5], 512, 512, 32
    $region13: #{tpu_custom_call.1} parent=1 // pred_fallthru
      _
    // Predicated region
    $region14: #{tpu_custom_call.1} parent=1 // pred_check
      _
    $region15: #{tpu_custom_call.1} parent=1 // pred_check_branch
      %35 = sbr.rel (0) target = $region17
    $region16: #{tpu_custom_call.1} parent=1 // pred_region
      _
    $region17: #{tpu_custom_call.1} parent=1 // pred_fallthru
      _
    // Predicated region
    $region18: #{tpu_custom_call.1} parent=1 // pred_check
      _
    $region19: #{tpu_custom_call.1} parent=1 // pred_check_branch
      %37 = sbr.rel (0) target = $region21
    $region20: #{tpu_custom_call.1} parent=1 // pred_region
      %s39 = ssub.s32 8192, 8192
      %40 = vsyncadd [#allocation8], %s39
      %s41 = sshll.u32 [#allocation7], 4
      %s42 = int_to_ptr.vmem [resolvable:$true] %s41
      %47 = dma.hbm_to_vmem [thread:$0]  %s4, 8192, %s42, [#allocation8], 512, 512, 32
    $region21: #{tpu_custom_call.1} parent=1 // pred_fallthru
      _
    // Predicated region
    $region22: #{tpu_custom_call.1} parent=1 // pred_check
      _
    $region23: #{tpu_custom_call.1} parent=1 // pred_check_branch
      %49 = sbr.rel (0) target = $region25
    $region24: #{tpu_custom_call.1} parent=1 // pred_region
      %s51 = ssub.s32 8192, 8192
      %52 = vsyncadd [#allocation8], %s51
      %s53 = sshll.u32 [#allocation9], 4
      %s54 = int_to_ptr.vmem [resolvable:$true] %s53
      %59 = dma.hbm_to_vmem [thread:$0]  %s5, 8192, %s54, [#allocation8], 512, 512, 32
    $region25: #{tpu_custom_call.1} parent=1 // pred_fallthru
      _
    // Predicated region
    $region26: #{tpu_custom_call.1} parent=1 // pred_check
      _
    $region27: #{tpu_custom_call.1} parent=1 // pred_check_branch
      %61 = sbr.rel (0) target = $region29
    $region28: #{tpu_custom_call.1} parent=1 // pred_region
      _
    $region29: #{tpu_custom_call.1} parent=1 // pred_fallthru
      _
    // Predicated region
    $region30: #{tpu_custom_call.1} parent=1 // pred_check
      _
    $region31: #{tpu_custom_call.1} parent=1 // pred_check_branch
      %63 = sbr.rel (0) target = $region33
    $region32: #{tpu_custom_call.1} parent=1 // pred_region
      %s65 = ssub.s32 2048, 2048
      %66 = vsyncadd [#allocation11], %s65
      %s67 = sshll.u32 [#allocation10], 4
      %s68 = int_to_ptr.vmem [resolvable:$true] %s67
      %73 = dma.hbm_to_vmem [thread:$0]  %s7, 2048, %s68, [#allocation11], 128, 128, 8
    $region33: #{tpu_custom_call.1} parent=1 // pred_fallthru
      _
    // Predicated region
    $region34: #{tpu_custom_call.1} parent=1 // pred_check
      _
    $region35: #{tpu_custom_call.1} parent=1 // pred_check_branch
      %75 = sbr.rel (0) target = $region37
    $region36: #{tpu_custom_call.1} parent=1 // pred_region
      _
    $region37: #{tpu_custom_call.1} parent=1 // pred_fallthru
      _
    // Predicated region
    $region38: #{tpu_custom_call.1} parent=1 // pred_check
      _
    $region39: #{tpu_custom_call.1} parent=1 // pred_check_branch
      %77 = sbr.rel (0) target = $region41
    $region40: #{tpu_custom_call.1} parent=1 // pred_region
      %78 = dma.done [#allocation5], 8192
    $region41: #{tpu_custom_call.1} parent=1 // pred_fallthru
      _
    // Predicated region
    $region42: #{tpu_custom_call.1} parent=1 // pred_check
      _
    $region43: #{tpu_custom_call.1} parent=1 // pred_check_branch
      %80 = sbr.rel (0) target = $region45
    $region44: #{tpu_custom_call.1} parent=1 // pred_region
      %81 = dma.done [#allocation8], 8192
    $region45: #{tpu_custom_call.1} parent=1 // pred_fallthru
      _
    // Predicated region
    $region46: #{tpu_custom_call.1} parent=1 // pred_check
      _
    $region47: #{tpu_custom_call.1} parent=1 // pred_check_branch
      %83 = sbr.rel (0) target = $region49
    $region48: #{tpu_custom_call.1} parent=1 // pred_region
      %84 = dma.done [#allocation8], 8192
    $region49: #{tpu_custom_call.1} parent=1 // pred_fallthru
      _
    // Predicated region
    $region50: #{tpu_custom_call.1} parent=1 // pred_check
      _
    $region51: #{tpu_custom_call.1} parent=1 // pred_check_branch
      %86 = sbr.rel (0) target = $region53
    $region52: #{tpu_custom_call.1} parent=1 // pred_region
      %87 = dma.done [#allocation11], 2048
    $region53: #{tpu_custom_call.1} parent=1 // pred_fallthru
      _
    %v88 = vld [vmem:[%s1] sm:$0xff]
    %v89 = vld [vmem:[%s1 + $0x8] sm:$0xff]
    %v90 = vld [vmem:[%s1 + $0x10] sm:$0xff]
    %v91 = vld [vmem:[%s1 + $0x18] sm:$0xff]
    %v92 = vld [vmem:[%s1 + $0x20] sm:$0xff]
    %v93 = vld [vmem:[%s1 + $0x28] sm:$0xff]
    %v94 = vld [vmem:[%s1 + $0x30] sm:$0xff]
    %v95 = vld [vmem:[%s1 + $0x38] sm:$0xff]
    %v96 = vld [vmem:[#allocation4] sm:$0xff]
    %v97 = vld [vmem:[#allocation4 + $0x8] sm:$0xff]
    %v98 = vld [vmem:[#allocation4 + $0x10] sm:$0xff]
    %v99 = vld [vmem:[#allocation4 + $0x18] sm:$0xff]
    %v100 = vld [vmem:[#allocation4 + $0x20] sm:$0xff]
    %v101 = vld [vmem:[#allocation4 + $0x28] sm:$0xff]
    %v102 = vld [vmem:[#allocation4 + $0x30] sm:$0xff]
    %v103 = vld [vmem:[#allocation4 + $0x38] sm:$0xff]
    %v104 = vld [vmem:[#allocation4 + $0x40] sm:$0xff]
    %v105 = vld [vmem:[#allocation4 + $0x48] sm:$0xff]
    %v106 = vld [vmem:[#allocation4 + $0x50] sm:$0xff]
    %v107 = vld [vmem:[#allocation4 + $0x58] sm:$0xff]
    %v108 = vld [vmem:[#allocation4 + $0x60] sm:$0xff]
    %v109 = vld [vmem:[#allocation4 + $0x68] sm:$0xff]
    %v110 = vld [vmem:[#allocation4 + $0x70] sm:$0xff]
    %v111 = vld [vmem:[#allocation4 + $0x78] sm:$0xff]
    %v112 = vld [vmem:[#allocation4 + $0x80] sm:$0xff]
    %v113 = vld [vmem:[#allocation4 + $0x88] sm:$0xff]
    %v114 = vld [vmem:[#allocation4 + $0x90] sm:$0xff]
    %v115 = vld [vmem:[#allocation4 + $0x98] sm:$0xff]
    %v116 = vld [vmem:[#allocation4 + $0xa0] sm:$0xff]
    %v117 = vld [vmem:[#allocation4 + $0xa8] sm:$0xff]
    %v118 = vld [vmem:[#allocation4 + $0xb0] sm:$0xff]
    %v119 = vld [vmem:[#allocation4 + $0xb8] sm:$0xff]
    %v120 = vld [vmem:[#allocation4 + $0xc0] sm:$0xff]
    %v121 = vld [vmem:[#allocation4 + $0xc8] sm:$0xff]
    %v122 = vld [vmem:[#allocation4 + $0xd0] sm:$0xff]
    %v123 = vld [vmem:[#allocation4 + $0xd8] sm:$0xff]
    %v124 = vld [vmem:[#allocation4 + $0xe0] sm:$0xff]
    %v125 = vld [vmem:[#allocation4 + $0xe8] sm:$0xff]
    %v126 = vld [vmem:[#allocation4 + $0xf0] sm:$0xff]
    %v127 = vld [vmem:[#allocation4 + $0xf8] sm:$0xff]
    %v128 = vld [vmem:[#allocation4 + $0x100] sm:$0xff]
    %v129 = vld [vmem:[#allocation4 + $0x108] sm:$0xff]
    %v130 = vld [vmem:[#allocation4 + $0x110] sm:$0xff]
    %v131 = vld [vmem:[#allocation4 + $0x118] sm:$0xff]
    %v132 = vld [vmem:[#allocation4 + $0x120] sm:$0xff]
    %v133 = vld [vmem:[#allocation4 + $0x128] sm:$0xff]
    %v134 = vld [vmem:[#allocation4 + $0x130] sm:$0xff]
    %v135 = vld [vmem:[#allocation4 + $0x138] sm:$0xff]
    %v136 = vld [vmem:[#allocation4 + $0x140] sm:$0xff]
    %v137 = vld [vmem:[#allocation4 + $0x148] sm:$0xff]
    %v138 = vld [vmem:[#allocation4 + $0x150] sm:$0xff]
    %v139 = vld [vmem:[#allocation4 + $0x158] sm:$0xff]
    %v140 = vld [vmem:[#allocation4 + $0x160] sm:$0xff]
    %v141 = vld [vmem:[#allocation4 + $0x168] sm:$0xff]
    %v142 = vld [vmem:[#allocation4 + $0x170] sm:$0xff]
    %v143 = vld [vmem:[#allocation4 + $0x178] sm:$0xff]
    %v144 = vld [vmem:[#allocation4 + $0x180] sm:$0xff]
    %v145 = vld [vmem:[#allocation4 + $0x188] sm:$0xff]
    %v146 = vld [vmem:[#allocation4 + $0x190] sm:$0xff]
    %v147 = vld [vmem:[#allocation4 + $0x198] sm:$0xff]
    %v148 = vld [vmem:[#allocation4 + $0x1a0] sm:$0xff]
    %v149 = vld [vmem:[#allocation4 + $0x1a8] sm:$0xff]
    %v150 = vld [vmem:[#allocation4 + $0x1b0] sm:$0xff]
    %v151 = vld [vmem:[#allocation4 + $0x1b8] sm:$0xff]
    %v152 = vld [vmem:[#allocation4 + $0x1c0] sm:$0xff]
    %v153 = vld [vmem:[#allocation4 + $0x1c8] sm:$0xff]
    %v154 = vld [vmem:[#allocation4 + $0x1d0] sm:$0xff]
    %v155 = vld [vmem:[#allocation4 + $0x1d8] sm:$0xff]
    %v156 = vld [vmem:[#allocation4 + $0x1e0] sm:$0xff]
    %v157 = vld [vmem:[#allocation4 + $0x1e8] sm:$0xff]
    %v158 = vld [vmem:[#allocation4 + $0x1f0] sm:$0xff]
    %v159 = vld [vmem:[#allocation4 + $0x1f8] sm:$0xff]
    %v160 = vld [vmem:[%s3] sm:$0xf]
    %v161 = vld [vmem:[%s0] sm:$0xff]
    %v162 = vld [vmem:[%s0 + $0x8] sm:$0xff]
    %v163 = vld [vmem:[%s0 + $0x10] sm:$0xff]
    %v164 = vld [vmem:[%s0 + $0x18] sm:$0xff]
    %v165 = vld [vmem:[%s0 + $0x20] sm:$0xff]
    %v166 = vld [vmem:[%s0 + $0x28] sm:$0xff]
    %v167 = vld [vmem:[%s0 + $0x30] sm:$0xff]
    %v168 = vld [vmem:[%s0 + $0x38] sm:$0xff]
    %v170 = vlaneseq
    %v171 = vshrl.u32 %v170, 7
    %v172 = vsub.s32 0, %v171
    %v173 = vrot.slane %v160, %v172
    %v174 = vlaneseq
    %v175 = vshrl.u32 %v174, 7
    %v176 = vsub.s32 1, %v175
    %v177 = vrot.slane %v160, %v176
    %v178 = vlaneseq
    %v179 = vshrl.u32 %v178, 7
    %v180 = vsub.s32 2, %v179
    %v181 = vrot.slane %v160, %v180
    %v182 = vlaneseq
    %v183 = vshrl.u32 %v182, 7
    %v184 = vsub.s32 3, %v183
    %v185 = vrot.slane %v160, %v184
    %vm190 = vcmask 130048
    %v192 = vsel %vm190, %v161, 0
    %v195 = vsel %vm190, %v162, 0
    %v198 = vsel %vm190, %v163, 0
    %v201 = vsel %vm190, %v164, 0
    %v204 = vsel %vm190, %v165, 0
    %v207 = vsel %vm190, %v166, 0
    %v210 = vsel %vm190, %v167, 0
    %v213 = vsel %vm190, %v168, 0
    %215 = vmatprep.subr.mxu0 %v89
    %216 = vmatpush1.msra.mxu0 %v88
    %217 = vmatprep.subr.mxu0 %v93
    %218 = vmatpush1.msra.mxu0 %v92
    %219 = vmatprep.subr.mxu0 0.0
    %220 = vmatpush1.msra.mxu0 0.0
    %221 = vmatprep.subr.mxu0 0.0
    %222 = vmatpush1.msra.mxu0 0.0
    %223 = vmatprep.subr.mxu0 0.0
    %224 = vmatpush1.msra.mxu0 0.0
    %225 = vmatprep.subr.mxu0 0.0
    %226 = vmatpush1.msra.mxu0 0.0
    %227 = vmatprep.subr.mxu0 0.0
    %228 = vmatpush1.msra.mxu0 0.0
    %229 = vmatprep.subr.mxu0 0.0
    %230 = vmatpush1.msra.mxu0 0.0
    %231 = vmatprep.subr.mxu0 0.0
    %232 = vmatpush1.msra.mxu0 0.0
    %233 = vmatprep.subr.mxu0 0.0
    %234 = vmatpush1.msra.mxu0 0.0
    %235 = vmatprep.subr.mxu0 0.0
    %236 = vmatpush1.msra.mxu0 0.0
    %237 = vmatprep.subr.mxu0 0.0
    %238 = vmatpush1.msra.mxu0 0.0
    %239 = vmatprep.subr.mxu0 0.0
    %240 = vmatpush1.msra.mxu0 0.0
    %241 = vmatprep.subr.mxu0 0.0
    %242 = vmatpush1.msra.mxu0 0.0
    %243 = vmatprep.subr.mxu0 0.0
    %244 = vmatpush1.msra.mxu0 0.0
    %245 = vmatprep.subr.mxu0 0.0
    %246 = vmatpush1.msra.mxu0 0.0
    %247 = vmatprep.subr.mxu0 0.0
    %248 = vmatpush1.msra.mxu0 0.0
    %249 = vmatprep.subr.mxu0 0.0
    %250 = vmatpush1.msra.mxu0 0.0
    %251 = vmatprep.subr.mxu0 0.0
    %252 = vmatpush1.msra.mxu0 0.0
    %253 = vmatprep.subr.mxu0 0.0
    %254 = vmatpush1.msra.mxu0 0.0
    %255 = vmatprep.subr.mxu0 0.0
    %256 = vmatpush1.msra.mxu0 0.0
    %257 = vmatprep.subr.mxu0 0.0
    %258 = vmatpush1.msra.mxu0 0.0
    %259 = vmatprep.subr.mxu0 0.0
    %260 = vmatpush1.msra.mxu0 0.0
    %261 = vmatprep.subr.mxu0 0.0
    %262 = vmatpush1.msra.mxu0 0.0
    %263 = vmatprep.subr.mxu0 0.0
    %264 = vmatpush1.msra.mxu0 0.0
    %265 = vmatprep.subr.mxu0 0.0
    %266 = vmatpush1.msra.mxu0 0.0
    %267 = vmatprep.subr.mxu0 0.0
    %268 = vmatpush1.msra.mxu0 0.0
    %269 = vmatprep.subr.mxu0 0.0
    %270 = vmatpush1.msra.mxu0 0.0
    %271 = vmatprep.subr.mxu0 0.0
    %272 = vmatpush1.msra.mxu0 0.0
    %273 = vmatprep.subr.mxu0 0.0
    %274 = vmatpush1.msra.mxu0 0.0
    %275 = vmatprep.subr.mxu0 0.0
    %276 = vmatpush1.msra.mxu0 0.0
    %277 = vmatprep.subr.mxu0 0.0
    %278 = vmatpush1.msra.mxu0 0.0
    %279 = vmatprep.mubr.f32.mxu0 0.0
    %280 = vmatmul.mubr.f32.gmra.mrb[0].mxu0 %v192
    %v281 = vpop.f32.mrb[0].mxu0
    %v282 = vadd.f32 %v173, %v281
    %v283 = vpop.f32.mrb[0].mxu0
    %v284 = vadd.f32 %v177, %v283
    %285 = vmatprep.mubr.f32.mxu0 0.0
    %286 = vmatmul.mubr.f32.gmra.mrb[0].mxu0 %v195
    %v287 = vpop.f32.mrb[0].mxu0
    %v288 = vadd.f32 %v173, %v287
    %v289 = vpop.f32.mrb[0].mxu0
    %v290 = vadd.f32 %v177, %v289
    %291 = vmatprep.mubr.f32.mxu0 0.0
    %292 = vmatmul.mubr.f32.gmra.mrb[0].mxu0 %v198
    %v293 = vpop.f32.mrb[0].mxu0
    %v294 = vadd.f32 %v173, %v293
    %v295 = vpop.f32.mrb[0].mxu0
    %v296 = vadd.f32 %v177, %v295
    %297 = vmatprep.mubr.f32.mxu0 0.0
    %298 = vmatmul.mubr.f32.gmra.mrb[0].mxu0 %v201
    %v299 = vpop.f32.mrb[0].mxu0
    %v300 = vadd.f32 %v173, %v299
    %v301 = vpop.f32.mrb[0].mxu0
    %v302 = vadd.f32 %v177, %v301
    %303 = vmatprep.mubr.f32.mxu0 0.0
    %304 = vmatmul.mubr.f32.gmra.mrb[0].mxu0 %v204
    %v305 = vpop.f32.mrb[0].mxu0
    %v306 = vadd.f32 %v173, %v305
    %v307 = vpop.f32.mrb[0].mxu0
    %v308 = vadd.f32 %v177, %v307
    %309 = vmatprep.mubr.f32.mxu0 0.0
    %310 = vmatmul.mubr.f32.gmra.mrb[0].mxu0 %v207
    %v311 = vpop.f32.mrb[0].mxu0
    %v312 = vadd.f32 %v173, %v311
    %v313 = vpop.f32.mrb[0].mxu0
    %v314 = vadd.f32 %v177, %v313
    %315 = vmatprep.mubr.f32.mxu0 0.0
    %316 = vmatmul.mubr.f32.gmra.mrb[0].mxu0 %v210
    %v317 = vpop.f32.mrb[0].mxu0
    %v318 = vadd.f32 %v173, %v317
    %v319 = vpop.f32.mrb[0].mxu0
    %v320 = vadd.f32 %v177, %v319
    %321 = vmatprep.mubr.f32.mxu0 0.0
    %322 = vmatmul.mubr.f32.gmra.mrb[0].mxu0 %v213
    %v323 = vpop.f32.mrb[0].mxu0
    %v324 = vadd.f32 %v173, %v323
    %v325 = vpop.f32.mrb[0].mxu0
    %v326 = vadd.f32 %v177, %v325
    %327 = vdwg.mxu0
    %328 = vmatprep.subr.mxu0 %v91
    %329 = vmatpush1.msra.mxu0 %v90
    %330 = vmatprep.subr.mxu0 %v95
    %331 = vmatpush1.msra.mxu0 %v94
    %332 = vmatprep.subr.mxu0 0.0
    %333 = vmatpush1.msra.mxu0 0.0
    %334 = vmatprep.subr.mxu0 0.0
    %335 = vmatpush1.msra.mxu0 0.0
    %336 = vmatprep.subr.mxu0 0.0
    %337 = vmatpush1.msra.mxu0 0.0
    %338 = vmatprep.subr.mxu0 0.0
    %339 = vmatpush1.msra.mxu0 0.0
    %340 = vmatprep.subr.mxu0 0.0
    %341 = vmatpush1.msra.mxu0 0.0
    %342 = vmatprep.subr.mxu0 0.0
    %343 = vmatpush1.msra.mxu0 0.0
    %344 = vmatprep.subr.mxu0 0.0
    %345 = vmatpush1.msra.mxu0 0.0
    %346 = vmatprep.subr.mxu0 0.0
    %347 = vmatpush1.msra.mxu0 0.0
    %348 = vmatprep.subr.mxu0 0.0
    %349 = vmatpush1.msra.mxu0 0.0
    %350 = vmatprep.subr.mxu0 0.0
    %351 = vmatpush1.msra.mxu0 0.0
    %352 = vmatprep.subr.mxu0 0.0
    %353 = vmatpush1.msra.mxu0 0.0
    %354 = vmatprep.subr.mxu0 0.0
    %355 = vmatpush1.msra.mxu0 0.0
    %356 = vmatprep.subr.mxu0 0.0
    %357 = vmatpush1.msra.mxu0 0.0
    %358 = vmatprep.subr.mxu0 0.0
    %359 = vmatpush1.msra.mxu0 0.0
    %360 = vmatprep.subr.mxu0 0.0
    %361 = vmatpush1.msra.mxu0 0.0
    %362 = vmatprep.subr.mxu0 0.0
    %363 = vmatpush1.msra.mxu0 0.0
    %364 = vmatprep.subr.mxu0 0.0
    %365 = vmatpush1.msra.mxu0 0.0
    %366 = vmatprep.subr.mxu0 0.0
    %367 = vmatpush1.msra.mxu0 0.0
    %368 = vmatprep.subr.mxu0 0.0
    %369 = vmatpush1.msra.mxu0 0.0
    %370 = vmatprep.subr.mxu0 0.0
    %371 = vmatpush1.msra.mxu0 0.0
    %372 = vmatprep.subr.mxu0 0.0
    %373 = vmatpush1.msra.mxu0 0.0
    %374 = vmatprep.subr.mxu0 0.0
    %375 = vmatpush1.msra.mxu0 0.0
    %376 = vmatprep.subr.mxu0 0.0
    %377 = vmatpush1.msra.mxu0 0.0
    %378 = vmatprep.subr.mxu0 0.0
    %379 = vmatpush1.msra.mxu0 0.0
    %380 = vmatprep.subr.mxu0 0.0
    %381 = vmatpush1.msra.mxu0 0.0
    %382 = vmatprep.subr.mxu0 0.0
    %383 = vmatpush1.msra.mxu0 0.0
    %384 = vmatprep.subr.mxu0 0.0
    %385 = vmatpush1.msra.mxu0 0.0
    %386 = vmatprep.subr.mxu0 0.0
    %387 = vmatpush1.msra.mxu0 0.0
    %388 = vmatprep.subr.mxu0 0.0
    %389 = vmatpush1.msra.mxu0 0.0
    %390 = vmatprep.subr.mxu0 0.0
    %391 = vmatpush1.msra.mxu0 0.0
    %392 = vmatprep.mubr.f32.mxu0 0.0
    %393 = vmatmul.mubr.f32.gmra.mrb[0].mxu0 %v192
    %v394 = vpop.f32.mrb[0].mxu0
    %v395 = vadd.f32 %v181, %v394
    %v396 = vpop.f32.mrb[0].mxu0
    %v397 = vadd.f32 %v185, %v396
    %398 = vmatprep.mubr.f32.mxu0 0.0
    %399 = vmatmul.mubr.f32.gmra.mrb[0].mxu0 %v195
    %v400 = vpop.f32.mrb[0].mxu0
    %v401 = vadd.f32 %v181, %v400
    %v402 = vpop.f32.mrb[0].mxu0
    %v403 = vadd.f32 %v185, %v402
    %404 = vmatprep.mubr.f32.mxu0 0.0
    %405 = vmatmul.mubr.f32.gmra.mrb[0].mxu0 %v198
    %v406 = vpop.f32.mrb[0].mxu0
    %v407 = vadd.f32 %v181, %v406
    %v408 = vpop.f32.mrb[0].mxu0
    %v409 = vadd.f32 %v185, %v408
    %410 = vmatprep.mubr.f32.mxu0 0.0
    %411 = vmatmul.mubr.f32.gmra.mrb[0].mxu0 %v201
    %v412 = vpop.f32.mrb[0].mxu0
    %v413 = vadd.f32 %v181, %v412
    %v414 = vpop.f32.mrb[0].mxu0
    %v415 = vadd.f32 %v185, %v414
    %416 = vmatprep.mubr.f32.mxu0 0.0
    %417 = vmatmul.mubr.f32.gmra.mrb[0].mxu0 %v204
    %v418 = vpop.f32.mrb[0].mxu0
    %v419 = vadd.f32 %v181, %v418
    %v420 = vpop.f32.mrb[0].mxu0
    %v421 = vadd.f32 %v185, %v420
    %422 = vmatprep.mubr.f32.mxu0 0.0
    %423 = vmatmul.mubr.f32.gmra.mrb[0].mxu0 %v207
    %v424 = vpop.f32.mrb[0].mxu0
    %v425 = vadd.f32 %v181, %v424
    %v426 = vpop.f32.mrb[0].mxu0
    %v427 = vadd.f32 %v185, %v426
    %428 = vmatprep.mubr.f32.mxu0 0.0
    %429 = vmatmul.mubr.f32.gmra.mrb[0].mxu0 %v210
    %v430 = vpop.f32.mrb[0].mxu0
    %v431 = vadd.f32 %v181, %v430
    %v432 = vpop.f32.mrb[0].mxu0
    %v433 = vadd.f32 %v185, %v432
    %434 = vmatprep.mubr.f32.mxu0 0.0
    %435 = vmatmul.mubr.f32.gmra.mrb[0].mxu0 %v213
    %v436 = vpop.f32.mrb[0].mxu0
    %v437 = vadd.f32 %v181, %v436
    %v438 = vpop.f32.mrb[0].mxu0
    %v439 = vadd.f32 %v185, %v438
    %440 = vdwg.mxu0
    %441 = vst [vmem:[#allocation2] sm:$0xff] %v282
    %442 = vst [vmem:[#allocation2 + $0x8] sm:$0xff] %v284
    %443 = vst [vmem:[#allocation2 + $0x10] sm:$0xff] %v395
    %444 = vst [vmem:[#allocation2 + $0x18] sm:$0xff] %v397
    %445 = vst [vmem:[#allocation2 + $0x20] sm:$0xff] %v288
    %446 = vst [vmem:[#allocation2 + $0x28] sm:$0xff] %v290
    %447 = vst [vmem:[#allocation2 + $0x30] sm:$0xff] %v401
    %448 = vst [vmem:[#allocation2 + $0x38] sm:$0xff] %v403
    %449 = vst [vmem:[#allocation2 + $0x40] sm:$0xff] %v294
    %450 = vst [vmem:[#allocation2 + $0x48] sm:$0xff] %v296
    %451 = vst [vmem:[#allocation2 + $0x50] sm:$0xff] %v407
    %452 = vst [vmem:[#allocation2 + $0x58] sm:$0xff] %v409
    %453 = vst [vmem:[#allocation2 + $0x60] sm:$0xff] %v300
    %454 = vst [vmem:[#allocation2 + $0x68] sm:$0xff] %v302
    %455 = vst [vmem:[#allocation2 + $0x70] sm:$0xff] %v413
    %456 = vst [vmem:[#allocation2 + $0x78] sm:$0xff] %v415
    %457 = vst [vmem:[#allocation2 + $0x80] sm:$0xff] %v306
    %458 = vst [vmem:[#allocation2 + $0x88] sm:$0xff] %v308
    %459 = vst [vmem:[#allocation2 + $0x90] sm:$0xff] %v419
    %460 = vst [vmem:[#allocation2 + $0x98] sm:$0xff] %v421
    %461 = vst [vmem:[#allocation2 + $0xa0] sm:$0xff] %v312
    %462 = vst [vmem:[#allocation2 + $0xa8] sm:$0xff] %v314
    %463 = vst [vmem:[#allocation2 + $0xb0] sm:$0xff] %v425
    %464 = vst [vmem:[#allocation2 + $0xb8] sm:$0xff] %v427
    %465 = vst [vmem:[#allocation2 + $0xc0] sm:$0xff] %v318
    %466 = vst [vmem:[#allocation2 + $0xc8] sm:$0xff] %v320
    %467 = vst [vmem:[#allocation2 + $0xd0] sm:$0xff] %v431
    %468 = vst [vmem:[#allocation2 + $0xd8] sm:$0xff] %v433
    %469 = vst [vmem:[#allocation2 + $0xe0] sm:$0xff] %v324
    %470 = vst [vmem:[#allocation2 + $0xe8] sm:$0xff] %v326
    %471 = vst [vmem:[#allocation2 + $0xf0] sm:$0xff] %v437
    %472 = vst [vmem:[#allocation2 + $0xf8] sm:$0xff] %v439
    %s473 = smul.u32 0, 4
    %s474 = smul.addr %s473, 8
    %s475 = scalar_lea.vmem [#allocation2], %s474
    %v476 = vld [vmem:[%s475] sm:$0xff]
    %v477 = vld [vmem:[%s475 + $0x8] sm:$0xff]
    %v478 = vld [vmem:[%s475 + $0x10] sm:$0xff]
    %v479 = vld [vmem:[%s475 + $0x18] sm:$0xff]
    %480 = vmatprep.subr.mxu0 %v97
    %481 = vmatpush1.msra.mxu0 %v96
    %482 = vmatprep.subr.mxu0 %v101
    %483 = vmatpush1.msra.mxu0 %v100
    %484 = vmatprep.subr.mxu0 %v105
    %485 = vmatpush1.msra.mxu0 %v104
    %486 = vmatprep.subr.mxu0 %v109
    %487 = vmatpush1.msra.mxu0 %v108
    %488 = vmatprep.subr.mxu0 %v113
    %489 = vmatpush1.msra.mxu0 %v112
    %490 = vmatprep.subr.mxu0 %v117
    %491 = vmatpush1.msra.mxu0 %v116
    %492 = vmatprep.subr.mxu0 %v121
    %493 = vmatpush1.msra.mxu0 %v120
    %494 = vmatprep.subr.mxu0 %v125
    %495 = vmatpush1.msra.mxu0 %v124
    %496 = vmatprep.subr.mxu0 %v129
    %497 = vmatpush1.msra.mxu0 %v128
    %498 = vmatprep.subr.mxu0 %v133
    %499 = vmatpush1.msra.mxu0 %v132
    %500 = vmatprep.subr.mxu0 %v137
    %501 = vmatpush1.msra.mxu0 %v136
    %502 = vmatprep.subr.mxu0 %v141
    %503 = vmatpush1.msra.mxu0 %v140
    %504 = vmatprep.subr.mxu0 %v145
    %505 = vmatpush1.msra.mxu0 %v144
    %506 = vmatprep.subr.mxu0 %v149
    %507 = vmatpush1.msra.mxu0 %v148
    %508 = vmatprep.subr.mxu0 %v153
    %509 = vmatpush1.msra.mxu0 %v152
    %510 = vmatprep.subr.mxu0 %v157
    %511 = vmatpush1.msra.mxu0 %v156
    %512 = vmatprep.subr.mxu0 0.0
    %513 = vmatpush1.msra.mxu0 0.0
    %514 = vmatprep.subr.mxu0 0.0
    %515 = vmatpush1.msra.mxu0 0.0
    %516 = vmatprep.subr.mxu0 0.0
    %517 = vmatpush1.msra.mxu0 0.0
    %518 = vmatprep.subr.mxu0 0.0
    %519 = vmatpush1.msra.mxu0 0.0
    %520 = vmatprep.subr.mxu0 0.0
    %521 = vmatpush1.msra.mxu0 0.0
    %522 = vmatprep.subr.mxu0 0.0
    %523 = vmatpush1.msra.mxu0 0.0
    %524 = vmatprep.subr.mxu0 0.0
    %525 = vmatpush1.msra.mxu0 0.0
    %526 = vmatprep.subr.mxu0 0.0
    %527 = vmatpush1.msra.mxu0 0.0
    %528 = vmatprep.subr.mxu0 0.0
    %529 = vmatpush1.msra.mxu0 0.0
    %530 = vmatprep.subr.mxu0 0.0
    %531 = vmatpush1.msra.mxu0 0.0
    %532 = vmatprep.subr.mxu0 0.0
    %533 = vmatpush1.msra.mxu0 0.0
    %534 = vmatprep.subr.mxu0 0.0
    %535 = vmatpush1.msra.mxu0 0.0
    %536 = vmatprep.subr.mxu0 0.0
    %537 = vmatpush1.msra.mxu0 0.0
    %538 = vmatprep.subr.mxu0 0.0
    %539 = vmatpush1.msra.mxu0 0.0
    %540 = vmatprep.subr.mxu0 0.0
    %541 = vmatpush1.msra.mxu0 0.0
    %542 = vmatprep.subr.mxu0 0.0
    %543 = vmatpush1.msra.mxu0 0.0
    %544 = vmatprep.mubr.f32.mxu0 0.0
    %545 = vmatmul.mubr.f32.gmra.mrb[0].mxu0 0.0
    %v546 = vpop.f32.mrb[0].mxu0
    %v547 = vadd.f32 0.0, %v546
    %v548 = vpop.f32.mrb[0].mxu0
    %v549 = vadd.f32 0.0, %v548
    %550 = vdwg.mxu0
    %551 = vmatprep.subr.mxu0 %v99
    %552 = vmatpush1.msra.mxu0 %v98
    %553 = vmatprep.subr.mxu0 %v103
    %554 = vmatpush1.msra.mxu0 %v102
    %555 = vmatprep.subr.mxu0 %v107
    %556 = vmatpush1.msra.mxu0 %v106
    %557 = vmatprep.subr.mxu0 %v111
    %558 = vmatpush1.msra.mxu0 %v110
    %559 = vmatprep.subr.mxu0 %v115
    %560 = vmatpush1.msra.mxu0 %v114
    %561 = vmatprep.subr.mxu0 %v119
    %562 = vmatpush1.msra.mxu0 %v118
    %563 = vmatprep.subr.mxu0 %v123
    %564 = vmatpush1.msra.mxu0 %v122
    %565 = vmatprep.subr.mxu0 %v127
    %566 = vmatpush1.msra.mxu0 %v126
    %567 = vmatprep.subr.mxu0 %v131
    %568 = vmatpush1.msra.mxu0 %v130
    %569 = vmatprep.subr.mxu0 %v135
    %570 = vmatpush1.msra.mxu0 %v134
    %571 = vmatprep.subr.mxu0 %v139
    %572 = vmatpush1.msra.mxu0 %v138
    %573 = vmatprep.subr.mxu0 %v143
    %574 = vmatpush1.msra.mxu0 %v142
    %575 = vmatprep.subr.mxu0 %v147
    %576 = vmatpush1.msra.mxu0 %v146
    %577 = vmatprep.subr.mxu0 %v151
    %578 = vmatpush1.msra.mxu0 %v150
    %579 = vmatprep.subr.mxu0 %v155
    %580 = vmatpush1.msra.mxu0 %v154
    %581 = vmatprep.subr.mxu0 %v159
    %582 = vmatpush1.msra.mxu0 %v158
    %583 = vmatprep.subr.mxu0 0.0
    %584 = vmatpush1.msra.mxu0 0.0
    %585 = vmatprep.subr.mxu0 0.0
    %586 = vmatpush1.msra.mxu0 0.0
    %587 = vmatprep.subr.mxu0 0.0
    %588 = vmatpush1.msra.mxu0 0.0
    %589 = vmatprep.subr.mxu0 0.0
    %590 = vmatpush1.msra.mxu0 0.0
    %591 = vmatprep.subr.mxu0 0.0
    %592 = vmatpush1.msra.mxu0 0.0
    %593 = vmatprep.subr.mxu0 0.0
    %594 = vmatpush1.msra.mxu0 0.0
    %595 = vmatprep.subr.mxu0 0.0
    %596 = vmatpush1.msra.mxu0 0.0
    %597 = vmatprep.subr.mxu0 0.0
    %598 = vmatpush1.msra.mxu0 0.0
    %599 = vmatprep.subr.mxu0 0.0
    %600 = vmatpush1.msra.mxu0 0.0
    %601 = vmatprep.subr.mxu0 0.0
    %602 = vmatpush1.msra.mxu0 0.0
    %603 = vmatprep.subr.mxu0 0.0
    %604 = vmatpush1.msra.mxu0 0.0
    %605 = vmatprep.subr.mxu0 0.0
    %606 = vmatpush1.msra.mxu0 0.0
    %607 = vmatprep.subr.mxu0 0.0
    %608 = vmatpush1.msra.mxu0 0.0
    %609 = vmatprep.subr.mxu0 0.0
    %610 = vmatpush1.msra.mxu0 0.0
    %611 = vmatprep.subr.mxu0 0.0
    %612 = vmatpush1.msra.mxu0 0.0
    %613 = vmatprep.subr.mxu0 0.0
    %614 = vmatpush1.msra.mxu0 0.0
    %615 = vmatprep.mubr.f32.mxu0 0.0
    %616 = vmatmul.mubr.f32.gmra.mrb[0].mxu0 0.0
    %v617 = vpop.f32.mrb[0].mxu0
    %v618 = vadd.f32 0.0, %v617
    %v619 = vpop.f32.mrb[0].mxu0
    %v620 = vadd.f32 0.0, %v619
    %621 = vdwg.mxu0
    %v622 = vadd.f32 %v476, %v547
    %v623 = vadd.f32 %v477, %v549
    %v624 = vadd.f32 %v478, %v618
    %v625 = vadd.f32 %v479, %v620
    %v626 = vxor.u32 %v622, 2147483648
    %v627 = vmul.f32 %v626, 1.442695
    %v628 = vpow.pop %v627
    %v629 = vadd.f32 %v628, 1.0
    %v630 = vrcp.pop %v629
    %v631 = vmul.f32 1.0, %v630
    %v632 = vxor.u32 %v623, 2147483648
    %v633 = vmul.f32 %v632, 1.442695
    %v634 = vpow.pop %v633
    %v635 = vadd.f32 %v634, 1.0
    %v636 = vrcp.pop %v635
    %v637 = vmul.f32 1.0, %v636
    %v638 = vtanh.pop %v624
    %v639 = vxor.u32 %v625, 2147483648
    %v640 = vmul.f32 %v639, 1.442695
    %v641 = vpow.pop %v640
    %v642 = vadd.f32 %v641, 1.0
    %v643 = vrcp.pop %v642
    %v644 = vmul.f32 1.0, %v643
    %v645 = vmul.f32 %v637, 0.0
    %v646 = vmul.f32 %v631, %v638
    %v647 = vadd.f32 %v645, %v646
    %v648 = vtanh.pop %v647
    %v649 = vmul.f32 %v644, %v648
    %650 = vst [vmem:[#allocation3] sm:$0xff] %v649
    %s651 = smul.u32 1, 4
    %s652 = smul.addr %s651, 8
    %s653 = scalar_lea.vmem [#allocation2], %s652
    %v654 = vld [vmem:[%s653] sm:$0xff]
    %v655 = vld [vmem:[%s653 + $0x8] sm:$0xff]
    %v656 = vld [vmem:[%s653 + $0x10] sm:$0xff]
    %v657 = vld [vmem:[%s653 + $0x18] sm:$0xff]
    %658 = vmatprep.subr.mxu0 %v97
    %659 = vmatpush1.msra.mxu0 %v96
    %660 = vmatprep.subr.mxu0 %v101
    %661 = vmatpush1.msra.mxu0 %v100
    %662 = vmatprep.subr.mxu0 %v105
    %663 = vmatpush1.msra.mxu0 %v104
    %664 = vmatprep.subr.mxu0 %v109
    %665 = vmatpush1.msra.mxu0 %v108
    %666 = vmatprep.subr.mxu0 %v113
    %667 = vmatpush1.msra.mxu0 %v112
    %668 = vmatprep.subr.mxu0 %v117
    %669 = vmatpush1.msra.mxu0 %v116
    %670 = vmatprep.subr.mxu0 %v121
    %671 = vmatpush1.msra.mxu0 %v120
    %672 = vmatprep.subr.mxu0 %v125
    %673 = vmatpush1.msra.mxu0 %v124
    %674 = vmatprep.subr.mxu0 %v129
    %675 = vmatpush1.msra.mxu0 %v128
    %676 = vmatprep.subr.mxu0 %v133
    %677 = vmatpush1.msra.mxu0 %v132
    %678 = vmatprep.subr.mxu0 %v137
    %679 = vmatpush1.msra.mxu0 %v136
    %680 = vmatprep.subr.mxu0 %v141
    %681 = vmatpush1.msra.mxu0 %v140
    %682 = vmatprep.subr.mxu0 %v145
    %683 = vmatpush1.msra.mxu0 %v144
    %684 = vmatprep.subr.mxu0 %v149
    %685 = vmatpush1.msra.mxu0 %v148
    %686 = vmatprep.subr.mxu0 %v153
    %687 = vmatpush1.msra.mxu0 %v152
    %688 = vmatprep.subr.mxu0 %v157
    %689 = vmatpush1.msra.mxu0 %v156
    %690 = vmatprep.subr.mxu0 0.0
    %691 = vmatpush1.msra.mxu0 0.0
    %692 = vmatprep.subr.mxu0 0.0
    %693 = vmatpush1.msra.mxu0 0.0
    %694 = vmatprep.subr.mxu0 0.0
    %695 = vmatpush1.msra.mxu0 0.0
    %696 = vmatprep.subr.mxu0 0.0
    %697 = vmatpush1.msra.mxu0 0.0
    %698 = vmatprep.subr.mxu0 0.0
    %699 = vmatpush1.msra.mxu0 0.0
    %700 = vmatprep.subr.mxu0 0.0
    %701 = vmatpush1.msra.mxu0 0.0
    %702 = vmatprep.subr.mxu0 0.0
    %703 = vmatpush1.msra.mxu0 0.0
    %704 = vmatprep.subr.mxu0 0.0
    %705 = vmatpush1.msra.mxu0 0.0
    %706 = vmatprep.subr.mxu0 0.0
    %707 = vmatpush1.msra.mxu0 0.0
    %708 = vmatprep.subr.mxu0 0.0
    %709 = vmatpush1.msra.mxu0 0.0
    %710 = vmatprep.subr.mxu0 0.0
    %711 = vmatpush1.msra.mxu0 0.0
    %712 = vmatprep.subr.mxu0 0.0
    %713 = vmatpush1.msra.mxu0 0.0
    %714 = vmatprep.subr.mxu0 0.0
    %715 = vmatpush1.msra.mxu0 0.0
    %716 = vmatprep.subr.mxu0 0.0
    %717 = vmatpush1.msra.mxu0 0.0
    %718 = vmatprep.subr.mxu0 0.0
    %719 = vmatpush1.msra.mxu0 0.0
    %720 = vmatprep.subr.mxu0 0.0
    %721 = vmatpush1.msra.mxu0 0.0
    %722 = vmatprep.mubr.f32.mxu0 0.0
    %723 = vmatmul.mubr.f32.gmra.mrb[0].mxu0 %v649
    %v724 = vpop.f32.mrb[0].mxu0
    %v725 = vadd.f32 0.0, %v724
    %v726 = vpop.f32.mrb[0].mxu0
    %v727 = vadd.f32 0.0, %v726
    %728 = vdwg.mxu0
    %729 = vmatprep.subr.mxu0 %v99
    %730 = vmatpush1.msra.mxu0 %v98
    %731 = vmatprep.subr.mxu0 %v103
    %732 = vmatpush1.msra.mxu0 %v102
    %733 = vmatprep.subr.mxu0 %v107
    %734 = vmatpush1.msra.mxu0 %v106
    %735 = vmatprep.subr.mxu0 %v111
    %736 = vmatpush1.msra.mxu0 %v110
    %737 = vmatprep.subr.mxu0 %v115
    %738 = vmatpush1.msra.mxu0 %v114
    %739 = vmatprep.subr.mxu0 %v119
    %740 = vmatpush1.msra.mxu0 %v118
    %741 = vmatprep.subr.mxu0 %v123
    %742 = vmatpush1.msra.mxu0 %v122
    %743 = vmatprep.subr.mxu0 %v127
    %744 = vmatpush1.msra.mxu0 %v126
    %745 = vmatprep.subr.mxu0 %v131
    %746 = vmatpush1.msra.mxu0 %v130
    %747 = vmatprep.subr.mxu0 %v135
    %748 = vmatpush1.msra.mxu0 %v134
    %749 = vmatprep.subr.mxu0 %v139
    %750 = vmatpush1.msra.mxu0 %v138
    %751 = vmatprep.subr.mxu0 %v143
    %752 = vmatpush1.msra.mxu0 %v142
    %753 = vmatprep.subr.mxu0 %v147
    %754 = vmatpush1.msra.mxu0 %v146
    %755 = vmatprep.subr.mxu0 %v151
    %756 = vmatpush1.msra.mxu0 %v150
    %757 = vmatprep.subr.mxu0 %v155
    %758 = vmatpush1.msra.mxu0 %v154
    %759 = vmatprep.subr.mxu0 %v159
    %760 = vmatpush1.msra.mxu0 %v158
    %761 = vmatprep.subr.mxu0 0.0
    %762 = vmatpush1.msra.mxu0 0.0
    %763 = vmatprep.subr.mxu0 0.0
    %764 = vmatpush1.msra.mxu0 0.0
    %765 = vmatprep.subr.mxu0 0.0
    %766 = vmatpush1.msra.mxu0 0.0
    %767 = vmatprep.subr.mxu0 0.0
    %768 = vmatpush1.msra.mxu0 0.0
    %769 = vmatprep.subr.mxu0 0.0
    %770 = vmatpush1.msra.mxu0 0.0
    %771 = vmatprep.subr.mxu0 0.0
    %772 = vmatpush1.msra.mxu0 0.0
    %773 = vmatprep.subr.mxu0 0.0
    %774 = vmatpush1.msra.mxu0 0.0
    %775 = vmatprep.subr.mxu0 0.0
    %776 = vmatpush1.msra.mxu0 0.0
    %777 = vmatprep.subr.mxu0 0.0
    %778 = vmatpush1.msra.mxu0 0.0
    %779 = vmatprep.subr.mxu0 0.0
    %780 = vmatpush1.msra.mxu0 0.0
    %781 = vmatprep.subr.mxu0 0.0
    %782 = vmatpush1.msra.mxu0 0.0
    %783 = vmatprep.subr.mxu0 0.0
    %784 = vmatpush1.msra.mxu0 0.0
    %785 = vmatprep.subr.mxu0 0.0
    %786 = vmatpush1.msra.mxu0 0.0
    %787 = vmatprep.subr.mxu0 0.0
    %788 = vmatpush1.msra.mxu0 0.0
    %789 = vmatprep.subr.mxu0 0.0
    %790 = vmatpush1.msra.mxu0 0.0
    %791 = vmatprep.subr.mxu0 0.0
    %792 = vmatpush1.msra.mxu0 0.0
    %793 = vmatprep.mubr.f32.mxu0 0.0
    %794 = vmatmul.mubr.f32.gmra.mrb[0].mxu0 %v649
    %v795 = vpop.f32.mrb[0].mxu0
    %v796 = vadd.f32 0.0, %v795
    %v797 = vpop.f32.mrb[0].mxu0
    %v798 = vadd.f32 0.0, %v797
    %799 = vdwg.mxu0
    %v800 = vadd.f32 %v654, %v725
    %v801 = vadd.f32 %v655, %v727
    %v802 = vadd.f32 %v656, %v796
    %v803 = vadd.f32 %v657, %v798
    %v804 = vxor.u32 %v800, 2147483648
    %v805 = vmul.f32 %v804, 1.442695
    %v806 = vpow.pop %v805
    %v807 = vadd.f32 %v806, 1.0
    %v808 = vrcp.pop %v807
    %v809 = vmul.f32 1.0, %v808
    %v810 = vxor.u32 %v801, 2147483648
    %v811 = vmul.f32 %v810, 1.442695
    %v812 = vpow.pop %v811
    %v813 = vadd.f32 %v812, 1.0
    %v814 = vrcp.pop %v813
    %v815 = vmul.f32 1.0, %v814
    %v816 = vtanh.pop %v802
    %v817 = vxor.u32 %v803, 2147483648
    %v818 = vmul.f32 %v817, 1.442695
    %v819 = vpow.pop %v818
    %v820 = vadd.f32 %v819, 1.0
    %v821 = vrcp.pop %v820
    %v822 = vmul.f32 1.0, %v821
    %v823 = vmul.f32 %v815, %v647
    %v824 = vmul.f32 %v809, %v816
    %v825 = vadd.f32 %v823, %v824
    %v826 = vtanh.pop %v825
    %v827 = vmul.f32 %v822, %v826
    %s828 = scalar_lea.vmem [#allocation3], 8
    %829 = vst [vmem:[%s828] sm:$0xff] %v827
    %s830 = smul.u32 2, 4
    %s831 = smul.addr %s830, 8
    %s832 = scalar_lea.vmem [#allocation2], %s831
    %v833 = vld [vmem:[%s832] sm:$0xff]
    %v834 = vld [vmem:[%s832 + $0x8] sm:$0xff]
    %v835 = vld [vmem:[%s832 + $0x10] sm:$0xff]
    %v836 = vld [vmem:[%s832 + $0x18] sm:$0xff]
    %837 = vmatprep.subr.mxu0 %v97
    %838 = vmatpush1.msra.mxu0 %v96
    %839 = vmatprep.subr.mxu0 %v101
    %840 = vmatpush1.msra.mxu0 %v100
    %841 = vmatprep.subr.mxu0 %v105
    %842 = vmatpush1.msra.mxu0 %v104
    %843 = vmatprep.subr.mxu0 %v109
    %844 = vmatpush1.msra.mxu0 %v108
    %845 = vmatprep.subr.mxu0 %v113
    %846 = vmatpush1.msra.mxu0 %v112
    %847 = vmatprep.subr.mxu0 %v117
    %848 = vmatpush1.msra.mxu0 %v116
    %849 = vmatprep.subr.mxu0 %v121
    %850 = vmatpush1.msra.mxu0 %v120
    %851 = vmatprep.subr.mxu0 %v125
    %852 = vmatpush1.msra.mxu0 %v124
    %853 = vmatprep.subr.mxu0 %v129
    %854 = vmatpush1.msra.mxu0 %v128
    %855 = vmatprep.subr.mxu0 %v133
    %856 = vmatpush1.msra.mxu0 %v132
    %857 = vmatprep.subr.mxu0 %v137
    %858 = vmatpush1.msra.mxu0 %v136
    %859 = vmatprep.subr.mxu0 %v141
    %860 = vmatpush1.msra.mxu0 %v140
    %861 = vmatprep.subr.mxu0 %v145
    %862 = vmatpush1.msra.mxu0 %v144
    %863 = vmatprep.subr.mxu0 %v149
    %864 = vmatpush1.msra.mxu0 %v148
    %865 = vmatprep.subr.mxu0 %v153
    %866 = vmatpush1.msra.mxu0 %v152
    %867 = vmatprep.subr.mxu0 %v157
    %868 = vmatpush1.msra.mxu0 %v156
    %869 = vmatprep.subr.mxu0 0.0
    %870 = vmatpush1.msra.mxu0 0.0
    %871 = vmatprep.subr.mxu0 0.0
    %872 = vmatpush1.msra.mxu0 0.0
    %873 = vmatprep.subr.mxu0 0.0
    %874 = vmatpush1.msra.mxu0 0.0
    %875 = vmatprep.subr.mxu0 0.0
    %876 = vmatpush1.msra.mxu0 0.0
    %877 = vmatprep.subr.mxu0 0.0
    %878 = vmatpush1.msra.mxu0 0.0
    %879 = vmatprep.subr.mxu0 0.0
    %880 = vmatpush1.msra.mxu0 0.0
    %881 = vmatprep.subr.mxu0 0.0
    %882 = vmatpush1.msra.mxu0 0.0
    %883 = vmatprep.subr.mxu0 0.0
    %884 = vmatpush1.msra.mxu0 0.0
    %885 = vmatprep.subr.mxu0 0.0
    %886 = vmatpush1.msra.mxu0 0.0
    %887 = vmatprep.subr.mxu0 0.0
    %888 = vmatpush1.msra.mxu0 0.0
    %889 = vmatprep.subr.mxu0 0.0
    %890 = vmatpush1.msra.mxu0 0.0
    %891 = vmatprep.subr.mxu0 0.0
    %892 = vmatpush1.msra.mxu0 0.0
    %893 = vmatprep.subr.mxu0 0.0
    %894 = vmatpush1.msra.mxu0 0.0
    %895 = vmatprep.subr.mxu0 0.0
    %896 = vmatpush1.msra.mxu0 0.0
    %897 = vmatprep.subr.mxu0 0.0
    %898 = vmatpush1.msra.mxu0 0.0
    %899 = vmatprep.subr.mxu0 0.0
    %900 = vmatpush1.msra.mxu0 0.0
    %901 = vmatprep.mubr.f32.mxu0 0.0
    %902 = vmatmul.mubr.f32.gmra.mrb[0].mxu0 %v827
    %v903 = vpop.f32.mrb[0].mxu0
    %v904 = vadd.f32 0.0, %v903
    %v905 = vpop.f32.mrb[0].mxu0
    %v906 = vadd.f32 0.0, %v905
    %907 = vdwg.mxu0
    %908 = vmatprep.subr.mxu0 %v99
    %909 = vmatpush1.msra.mxu0 %v98
    %910 = vmatprep.subr.mxu0 %v103
    %911 = vmatpush1.msra.mxu0 %v102
    %912 = vmatprep.subr.mxu0 %v107
    %913 = vmatpush1.msra.mxu0 %v106
    %914 = vmatprep.subr.mxu0 %v111
    %915 = vmatpush1.msra.mxu0 %v110
    %916 = vmatprep.subr.mxu0 %v115
    %917 = vmatpush1.msra.mxu0 %v114
    %918 = vmatprep.subr.mxu0 %v119
    %919 = vmatpush1.msra.mxu0 %v118
    %920 = vmatprep.subr.mxu0 %v123
    %921 = vmatpush1.msra.mxu0 %v122
    %922 = vmatprep.subr.mxu0 %v127
    %923 = vmatpush1.msra.mxu0 %v126
    %924 = vmatprep.subr.mxu0 %v131
    %925 = vmatpush1.msra.mxu0 %v130
    %926 = vmatprep.subr.mxu0 %v135
    %927 = vmatpush1.msra.mxu0 %v134
    %928 = vmatprep.subr.mxu0 %v139
    %929 = vmatpush1.msra.mxu0 %v138
    %930 = vmatprep.subr.mxu0 %v143
    %931 = vmatpush1.msra.mxu0 %v142
    %932 = vmatprep.subr.mxu0 %v147
    %933 = vmatpush1.msra.mxu0 %v146
    %934 = vmatprep.subr.mxu0 %v151
    %935 = vmatpush1.msra.mxu0 %v150
    %936 = vmatprep.subr.mxu0 %v155
    %937 = vmatpush1.msra.mxu0 %v154
    %938 = vmatprep.subr.mxu0 %v159
    %939 = vmatpush1.msra.mxu0 %v158
    %940 = vmatprep.subr.mxu0 0.0
    %941 = vmatpush1.msra.mxu0 0.0
    %942 = vmatprep.subr.mxu0 0.0
    %943 = vmatpush1.msra.mxu0 0.0
    %944 = vmatprep.subr.mxu0 0.0
    %945 = vmatpush1.msra.mxu0 0.0
    %946 = vmatprep.subr.mxu0 0.0
    %947 = vmatpush1.msra.mxu0 0.0
    %948 = vmatprep.subr.mxu0 0.0
    %949 = vmatpush1.msra.mxu0 0.0
    %950 = vmatprep.subr.mxu0 0.0
    %951 = vmatpush1.msra.mxu0 0.0
    %952 = vmatprep.subr.mxu0 0.0
    %953 = vmatpush1.msra.mxu0 0.0
    %954 = vmatprep.subr.mxu0 0.0
    %955 = vmatpush1.msra.mxu0 0.0
    %956 = vmatprep.subr.mxu0 0.0
    %957 = vmatpush1.msra.mxu0 0.0
    %958 = vmatprep.subr.mxu0 0.0
    %959 = vmatpush1.msra.mxu0 0.0
    %960 = vmatprep.subr.mxu0 0.0
    %961 = vmatpush1.msra.mxu0 0.0
    %962 = vmatprep.subr.mxu0 0.0
    %963 = vmatpush1.msra.mxu0 0.0
    %964 = vmatprep.subr.mxu0 0.0
    %965 = vmatpush1.msra.mxu0 0.0
    %966 = vmatprep.subr.mxu0 0.0
    %967 = vmatpush1.msra.mxu0 0.0
    %968 = vmatprep.subr.mxu0 0.0
    %969 = vmatpush1.msra.mxu0 0.0
    %970 = vmatprep.subr.mxu0 0.0
    %971 = vmatpush1.msra.mxu0 0.0
    %972 = vmatprep.mubr.f32.mxu0 0.0
    %973 = vmatmul.mubr.f32.gmra.mrb[0].mxu0 %v827
    %v974 = vpop.f32.mrb[0].mxu0
    %v975 = vadd.f32 0.0, %v974
    %v976 = vpop.f32.mrb[0].mxu0
    %v977 = vadd.f32 0.0, %v976
    %978 = vdwg.mxu0
    %v979 = vadd.f32 %v833, %v904
    %v980 = vadd.f32 %v834, %v906
    %v981 = vadd.f32 %v835, %v975
    %v982 = vadd.f32 %v836, %v977
    %v983 = vxor.u32 %v979, 2147483648
    %v984 = vmul.f32 %v983, 1.442695
    %v985 = vpow.pop %v984
    %v986 = vadd.f32 %v985, 1.0
    %v987 = vrcp.pop %v986
    %v988 = vmul.f32 1.0, %v987
    %v989 = vxor.u32 %v980, 2147483648
    %v990 = vmul.f32 %v989, 1.442695
    %v991 = vpow.pop %v990
    %v992 = vadd.f32 %v991, 1.0
    %v993 = vrcp.pop %v992
    %v994 = vmul.f32 1.0, %v993
    %v995 = vtanh.pop %v981
    %v996 = vxor.u32 %v982, 2147483648
    %v997 = vmul.f32 %v996, 1.442695
    %v998 = vpow.pop %v997
    %v999 = vadd.f32 %v998, 1.0
    %v1000 = vrcp.pop %v999
    %v1001 = vmul.f32 1.0, %v1000
    %v1002 = vmul.f32 %v994, %v825
    %v1003 = vmul.f32 %v988, %v995
    %v1004 = vadd.f32 %v1002, %v1003
    %v1005 = vtanh.pop %v1004
    %v1006 = vmul.f32 %v1001, %v1005
    %s1007 = scalar_lea.vmem [#allocation3], 16
    %1008 = vst [vmem:[%s1007] sm:$0xff] %v1006
    %s1009 = smul.u32 3, 4
    %s1010 = smul.addr %s1009, 8
    %s1011 = scalar_lea.vmem [#allocation2], %s1010
    %v1012 = vld [vmem:[%s1011] sm:$0xff]
    %v1013 = vld [vmem:[%s1011 + $0x8] sm:$0xff]
    %v1014 = vld [vmem:[%s1011 + $0x10] sm:$0xff]
    %v1015 = vld [vmem:[%s1011 + $0x18] sm:$0xff]
    %1016 = vmatprep.subr.mxu0 %v97
    %1017 = vmatpush1.msra.mxu0 %v96
    %1018 = vmatprep.subr.mxu0 %v101
    %1019 = vmatpush1.msra.mxu0 %v100
    %1020 = vmatprep.subr.mxu0 %v105
    %1021 = vmatpush1.msra.mxu0 %v104
    %1022 = vmatprep.subr.mxu0 %v109
    %1023 = vmatpush1.msra.mxu0 %v108
    %1024 = vmatprep.subr.mxu0 %v113
    %1025 = vmatpush1.msra.mxu0 %v112
    %1026 = vmatprep.subr.mxu0 %v117
    %1027 = vmatpush1.msra.mxu0 %v116
    %1028 = vmatprep.subr.mxu0 %v121
    %1029 = vmatpush1.msra.mxu0 %v120
    %1030 = vmatprep.subr.mxu0 %v125
    %1031 = vmatpush1.msra.mxu0 %v124
    %1032 = vmatprep.subr.mxu0 %v129
    %1033 = vmatpush1.msra.mxu0 %v128
    %1034 = vmatprep.subr.mxu0 %v133
    %1035 = vmatpush1.msra.mxu0 %v132
    %1036 = vmatprep.subr.mxu0 %v137
    %1037 = vmatpush1.msra.mxu0 %v136
    %1038 = vmatprep.subr.mxu0 %v141
    %1039 = vmatpush1.msra.mxu0 %v140
    %1040 = vmatprep.subr.mxu0 %v145
    %1041 = vmatpush1.msra.mxu0 %v144
    %1042 = vmatprep.subr.mxu0 %v149
    %1043 = vmatpush1.msra.mxu0 %v148
    %1044 = vmatprep.subr.mxu0 %v153
    %1045 = vmatpush1.msra.mxu0 %v152
    %1046 = vmatprep.subr.mxu0 %v157
    %1047 = vmatpush1.msra.mxu0 %v156
    %1048 = vmatprep.subr.mxu0 0.0
    %1049 = vmatpush1.msra.mxu0 0.0
    %1050 = vmatprep.subr.mxu0 0.0
    %1051 = vmatpush1.msra.mxu0 0.0
    %1052 = vmatprep.subr.mxu0 0.0
    %1053 = vmatpush1.msra.mxu0 0.0
    %1054 = vmatprep.subr.mxu0 0.0
    %1055 = vmatpush1.msra.mxu0 0.0
    %1056 = vmatprep.subr.mxu0 0.0
    %1057 = vmatpush1.msra.mxu0 0.0
    %1058 = vmatprep.subr.mxu0 0.0
    %1059 = vmatpush1.msra.mxu0 0.0
    %1060 = vmatprep.subr.mxu0 0.0
    %1061 = vmatpush1.msra.mxu0 0.0
    %1062 = vmatprep.subr.mxu0 0.0
    %1063 = vmatpush1.msra.mxu0 0.0
    %1064 = vmatprep.subr.mxu0 0.0
    %1065 = vmatpush1.msra.mxu0 0.0
    %1066 = vmatprep.subr.mxu0 0.0
    %1067 = vmatpush1.msra.mxu0 0.0
    %1068 = vmatprep.subr.mxu0 0.0
    %1069 = vmatpush1.msra.mxu0 0.0
    %1070 = vmatprep.subr.mxu0 0.0
    %1071 = vmatpush1.msra.mxu0 0.0
    %1072 = vmatprep.subr.mxu0 0.0
    %1073 = vmatpush1.msra.mxu0 0.0
    %1074 = vmatprep.subr.mxu0 0.0
    %1075 = vmatpush1.msra.mxu0 0.0
    %1076 = vmatprep.subr.mxu0 0.0
    %1077 = vmatpush1.msra.mxu0 0.0
    %1078 = vmatprep.subr.mxu0 0.0
    %1079 = vmatpush1.msra.mxu0 0.0
    %1080 = vmatprep.mubr.f32.mxu0 0.0
    %1081 = vmatmul.mubr.f32.gmra.mrb[0].mxu0 %v1006
    %v1082 = vpop.f32.mrb[0].mxu0
    %v1083 = vadd.f32 0.0, %v1082
    %v1084 = vpop.f32.mrb[0].mxu0
    %v1085 = vadd.f32 0.0, %v1084
    %1086 = vdwg.mxu0
    %1087 = vmatprep.subr.mxu0 %v99
    %1088 = vmatpush1.msra.mxu0 %v98
    %1089 = vmatprep.subr.mxu0 %v103
    %1090 = vmatpush1.msra.mxu0 %v102
    %1091 = vmatprep.subr.mxu0 %v107
    %1092 = vmatpush1.msra.mxu0 %v106
    %1093 = vmatprep.subr.mxu0 %v111
    %1094 = vmatpush1.msra.mxu0 %v110
    %1095 = vmatprep.subr.mxu0 %v115
    %1096 = vmatpush1.msra.mxu0 %v114
    %1097 = vmatprep.subr.mxu0 %v119
    %1098 = vmatpush1.msra.mxu0 %v118
    %1099 = vmatprep.subr.mxu0 %v123
    %1100 = vmatpush1.msra.mxu0 %v122
    %1101 = vmatprep.subr.mxu0 %v127
    %1102 = vmatpush1.msra.mxu0 %v126
    %1103 = vmatprep.subr.mxu0 %v131
    %1104 = vmatpush1.msra.mxu0 %v130
    %1105 = vmatprep.subr.mxu0 %v135
    %1106 = vmatpush1.msra.mxu0 %v134
    %1107 = vmatprep.subr.mxu0 %v139
    %1108 = vmatpush1.msra.mxu0 %v138
    %1109 = vmatprep.subr.mxu0 %v143
    %1110 = vmatpush1.msra.mxu0 %v142
    %1111 = vmatprep.subr.mxu0 %v147
    %1112 = vmatpush1.msra.mxu0 %v146
    %1113 = vmatprep.subr.mxu0 %v151
    %1114 = vmatpush1.msra.mxu0 %v150
    %1115 = vmatprep.subr.mxu0 %v155
    %1116 = vmatpush1.msra.mxu0 %v154
    %1117 = vmatprep.subr.mxu0 %v159
    %1118 = vmatpush1.msra.mxu0 %v158
    %1119 = vmatprep.subr.mxu0 0.0
    %1120 = vmatpush1.msra.mxu0 0.0
    %1121 = vmatprep.subr.mxu0 0.0
    %1122 = vmatpush1.msra.mxu0 0.0
    %1123 = vmatprep.subr.mxu0 0.0
    %1124 = vmatpush1.msra.mxu0 0.0
    %1125 = vmatprep.subr.mxu0 0.0
    %1126 = vmatpush1.msra.mxu0 0.0
    %1127 = vmatprep.subr.mxu0 0.0
    %1128 = vmatpush1.msra.mxu0 0.0
    %1129 = vmatprep.subr.mxu0 0.0
    %1130 = vmatpush1.msra.mxu0 0.0
    %1131 = vmatprep.subr.mxu0 0.0
    %1132 = vmatpush1.msra.mxu0 0.0
    %1133 = vmatprep.subr.mxu0 0.0
    %1134 = vmatpush1.msra.mxu0 0.0
    %1135 = vmatprep.subr.mxu0 0.0
    %1136 = vmatpush1.msra.mxu0 0.0
    %1137 = vmatprep.subr.mxu0 0.0
    %1138 = vmatpush1.msra.mxu0 0.0
    %1139 = vmatprep.subr.mxu0 0.0
    %1140 = vmatpush1.msra.mxu0 0.0
    %1141 = vmatprep.subr.mxu0 0.0
    %1142 = vmatpush1.msra.mxu0 0.0
    %1143 = vmatprep.subr.mxu0 0.0
    %1144 = vmatpush1.msra.mxu0 0.0
    %1145 = vmatprep.subr.mxu0 0.0
    %1146 = vmatpush1.msra.mxu0 0.0
    %1147 = vmatprep.subr.mxu0 0.0
    %1148 = vmatpush1.msra.mxu0 0.0
    %1149 = vmatprep.subr.mxu0 0.0
    %1150 = vmatpush1.msra.mxu0 0.0
    %1151 = vmatprep.mubr.f32.mxu0 0.0
    %1152 = vmatmul.mubr.f32.gmra.mrb[0].mxu0 %v1006
    %v1153 = vpop.f32.mrb[0].mxu0
    %v1154 = vadd.f32 0.0, %v1153
    %v1155 = vpop.f32.mrb[0].mxu0
    %v1156 = vadd.f32 0.0, %v1155
    %1157 = vdwg.mxu0
    %v1158 = vadd.f32 %v1012, %v1083
    %v1159 = vadd.f32 %v1013, %v1085
    %v1160 = vadd.f32 %v1014, %v1154
    %v1161 = vadd.f32 %v1015, %v1156
    %v1162 = vxor.u32 %v1158, 2147483648
    %v1163 = vmul.f32 %v1162, 1.442695
    %v1164 = vpow.pop %v1163
    %v1165 = vadd.f32 %v1164, 1.0
    %v1166 = vrcp.pop %v1165
    %v1167 = vmul.f32 1.0, %v1166
    %v1168 = vxor.u32 %v1159, 2147483648
    %v1169 = vmul.f32 %v1168, 1.442695
    %v1170 = vpow.pop %v1169
    %v1171 = vadd.f32 %v1170, 1.0
    %v1172 = vrcp.pop %v1171
    %v1173 = vmul.f32 1.0, %v1172
    %v1174 = vtanh.pop %v1160
    %v1175 = vxor.u32 %v1161, 2147483648
    %v1176 = vmul.f32 %v1175, 1.442695
    %v1177 = vpow.pop %v1176
    %v1178 = vadd.f32 %v1177, 1.0
    %v1179 = vrcp.pop %v1178
    %v1180 = vmul.f32 1.0, %v1179
    %v1181 = vmul.f32 %v1173, %v1004
    %v1182 = vmul.f32 %v1167, %v1174
    %v1183 = vadd.f32 %v1181, %v1182
    %v1184 = vtanh.pop %v1183
    %v1185 = vmul.f32 %v1180, %v1184
    %s1186 = scalar_lea.vmem [#allocation3], 24
    %1187 = vst [vmem:[%s1186] sm:$0xff] %v1185
    %s1188 = smul.u32 4, 4
    %s1189 = smul.addr %s1188, 8
    %s1190 = scalar_lea.vmem [#allocation2], %s1189
    %v1191 = vld [vmem:[%s1190] sm:$0xff]
    %v1192 = vld [vmem:[%s1190 + $0x8] sm:$0xff]
    %v1193 = vld [vmem:[%s1190 + $0x10] sm:$0xff]
    %v1194 = vld [vmem:[%s1190 + $0x18] sm:$0xff]
    %1195 = vmatprep.subr.mxu0 %v97
    %1196 = vmatpush1.msra.mxu0 %v96
    %1197 = vmatprep.subr.mxu0 %v101
    %1198 = vmatpush1.msra.mxu0 %v100
    %1199 = vmatprep.subr.mxu0 %v105
    %1200 = vmatpush1.msra.mxu0 %v104
    %1201 = vmatprep.subr.mxu0 %v109
    %1202 = vmatpush1.msra.mxu0 %v108
    %1203 = vmatprep.subr.mxu0 %v113
    %1204 = vmatpush1.msra.mxu0 %v112
    %1205 = vmatprep.subr.mxu0 %v117
    %1206 = vmatpush1.msra.mxu0 %v116
    %1207 = vmatprep.subr.mxu0 %v121
    %1208 = vmatpush1.msra.mxu0 %v120
    %1209 = vmatprep.subr.mxu0 %v125
    %1210 = vmatpush1.msra.mxu0 %v124
    %1211 = vmatprep.subr.mxu0 %v129
    %1212 = vmatpush1.msra.mxu0 %v128
    %1213 = vmatprep.subr.mxu0 %v133
    %1214 = vmatpush1.msra.mxu0 %v132
    %1215 = vmatprep.subr.mxu0 %v137
    %1216 = vmatpush1.msra.mxu0 %v136
    %1217 = vmatprep.subr.mxu0 %v141
    %1218 = vmatpush1.msra.mxu0 %v140
    %1219 = vmatprep.subr.mxu0 %v145
    %1220 = vmatpush1.msra.mxu0 %v144
    %1221 = vmatprep.subr.mxu0 %v149
    %1222 = vmatpush1.msra.mxu0 %v148
    %1223 = vmatprep.subr.mxu0 %v153
    %1224 = vmatpush1.msra.mxu0 %v152
    %1225 = vmatprep.subr.mxu0 %v157
    %1226 = vmatpush1.msra.mxu0 %v156
    %1227 = vmatprep.subr.mxu0 0.0
    %1228 = vmatpush1.msra.mxu0 0.0
    %1229 = vmatprep.subr.mxu0 0.0
    %1230 = vmatpush1.msra.mxu0 0.0
    %1231 = vmatprep.subr.mxu0 0.0
    %1232 = vmatpush1.msra.mxu0 0.0
    %1233 = vmatprep.subr.mxu0 0.0
    %1234 = vmatpush1.msra.mxu0 0.0
    %1235 = vmatprep.subr.mxu0 0.0
    %1236 = vmatpush1.msra.mxu0 0.0
    %1237 = vmatprep.subr.mxu0 0.0
    %1238 = vmatpush1.msra.mxu0 0.0
    %1239 = vmatprep.subr.mxu0 0.0
    %1240 = vmatpush1.msra.mxu0 0.0
    %1241 = vmatprep.subr.mxu0 0.0
    %1242 = vmatpush1.msra.mxu0 0.0
    %1243 = vmatprep.subr.mxu0 0.0
    %1244 = vmatpush1.msra.mxu0 0.0
    %1245 = vmatprep.subr.mxu0 0.0
    %1246 = vmatpush1.msra.mxu0 0.0
    %1247 = vmatprep.subr.mxu0 0.0
    %1248 = vmatpush1.msra.mxu0 0.0
    %1249 = vmatprep.subr.mxu0 0.0
    %1250 = vmatpush1.msra.mxu0 0.0
    %1251 = vmatprep.subr.mxu0 0.0
    %1252 = vmatpush1.msra.mxu0 0.0
    %1253 = vmatprep.subr.mxu0 0.0
    %1254 = vmatpush1.msra.mxu0 0.0
    %1255 = vmatprep.subr.mxu0 0.0
    %1256 = vmatpush1.msra.mxu0 0.0
    %1257 = vmatprep.subr.mxu0 0.0
    %1258 = vmatpush1.msra.mxu0 0.0
    %1259 = vmatprep.mubr.f32.mxu0 0.0
    %1260 = vmatmul.mubr.f32.gmra.mrb[0].mxu0 %v1185
    %v1261 = vpop.f32.mrb[0].mxu0
    %v1262 = vadd.f32 0.0, %v1261
    %v1263 = vpop.f32.mrb[0].mxu0
    %v1264 = vadd.f32 0.0, %v1263
    %1265 = vdwg.mxu0
    %1266 = vmatprep.subr.mxu0 %v99
    %1267 = vmatpush1.msra.mxu0 %v98
    %1268 = vmatprep.subr.mxu0 %v103
    %1269 = vmatpush1.msra.mxu0 %v102
    %1270 = vmatprep.subr.mxu0 %v107
    %1271 = vmatpush1.msra.mxu0 %v106
    %1272 = vmatprep.subr.mxu0 %v111
    %1273 = vmatpush1.msra.mxu0 %v110
    %1274 = vmatprep.subr.mxu0 %v115
    %1275 = vmatpush1.msra.mxu0 %v114
    %1276 = vmatprep.subr.mxu0 %v119
    %1277 = vmatpush1.msra.mxu0 %v118
    %1278 = vmatprep.subr.mxu0 %v123
    %1279 = vmatpush1.msra.mxu0 %v122
    %1280 = vmatprep.subr.mxu0 %v127
    %1281 = vmatpush1.msra.mxu0 %v126
    %1282 = vmatprep.subr.mxu0 %v131
    %1283 = vmatpush1.msra.mxu0 %v130
    %1284 = vmatprep.subr.mxu0 %v135
    %1285 = vmatpush1.msra.mxu0 %v134
    %1286 = vmatprep.subr.mxu0 %v139
    %1287 = vmatpush1.msra.mxu0 %v138
    %1288 = vmatprep.subr.mxu0 %v143
    %1289 = vmatpush1.msra.mxu0 %v142
    %1290 = vmatprep.subr.mxu0 %v147
    %1291 = vmatpush1.msra.mxu0 %v146
    %1292 = vmatprep.subr.mxu0 %v151
    %1293 = vmatpush1.msra.mxu0 %v150
    %1294 = vmatprep.subr.mxu0 %v155
    %1295 = vmatpush1.msra.mxu0 %v154
    %1296 = vmatprep.subr.mxu0 %v159
    %1297 = vmatpush1.msra.mxu0 %v158
    %1298 = vmatprep.subr.mxu0 0.0
    %1299 = vmatpush1.msra.mxu0 0.0
    %1300 = vmatprep.subr.mxu0 0.0
    %1301 = vmatpush1.msra.mxu0 0.0
    %1302 = vmatprep.subr.mxu0 0.0
    %1303 = vmatpush1.msra.mxu0 0.0
    %1304 = vmatprep.subr.mxu0 0.0
    %1305 = vmatpush1.msra.mxu0 0.0
    %1306 = vmatprep.subr.mxu0 0.0
    %1307 = vmatpush1.msra.mxu0 0.0
    %1308 = vmatprep.subr.mxu0 0.0
    %1309 = vmatpush1.msra.mxu0 0.0
    %1310 = vmatprep.subr.mxu0 0.0
    %1311 = vmatpush1.msra.mxu0 0.0
    %1312 = vmatprep.subr.mxu0 0.0
    %1313 = vmatpush1.msra.mxu0 0.0
    %1314 = vmatprep.subr.mxu0 0.0
    %1315 = vmatpush1.msra.mxu0 0.0
    %1316 = vmatprep.subr.mxu0 0.0
    %1317 = vmatpush1.msra.mxu0 0.0
    %1318 = vmatprep.subr.mxu0 0.0
    %1319 = vmatpush1.msra.mxu0 0.0
    %1320 = vmatprep.subr.mxu0 0.0
    %1321 = vmatpush1.msra.mxu0 0.0
    %1322 = vmatprep.subr.mxu0 0.0
    %1323 = vmatpush1.msra.mxu0 0.0
    %1324 = vmatprep.subr.mxu0 0.0
    %1325 = vmatpush1.msra.mxu0 0.0
    %1326 = vmatprep.subr.mxu0 0.0
    %1327 = vmatpush1.msra.mxu0 0.0
    %1328 = vmatprep.subr.mxu0 0.0
    %1329 = vmatpush1.msra.mxu0 0.0
    %1330 = vmatprep.mubr.f32.mxu0 0.0
    %1331 = vmatmul.mubr.f32.gmra.mrb[0].mxu0 %v1185
    %v1332 = vpop.f32.mrb[0].mxu0
    %v1333 = vadd.f32 0.0, %v1332
    %v1334 = vpop.f32.mrb[0].mxu0
    %v1335 = vadd.f32 0.0, %v1334
    %1336 = vdwg.mxu0
    %v1337 = vadd.f32 %v1191, %v1262
    %v1338 = vadd.f32 %v1192, %v1264
    %v1339 = vadd.f32 %v1193, %v1333
    %v1340 = vadd.f32 %v1194, %v1335
    %v1341 = vxor.u32 %v1337, 2147483648
    %v1342 = vmul.f32 %v1341, 1.442695
    %v1343 = vpow.pop %v1342
    %v1344 = vadd.f32 %v1343, 1.0
    %v1345 = vrcp.pop %v1344
    %v1346 = vmul.f32 1.0, %v1345
    %v1347 = vxor.u32 %v1338, 2147483648
    %v1348 = vmul.f32 %v1347, 1.442695
    %v1349 = vpow.pop %v1348
    %v1350 = vadd.f32 %v1349, 1.0
    %v1351 = vrcp.pop %v1350
    %v1352 = vmul.f32 1.0, %v1351
    %v1353 = vtanh.pop %v1339
    %v1354 = vxor.u32 %v1340, 2147483648
    %v1355 = vmul.f32 %v1354, 1.442695
    %v1356 = vpow.pop %v1355
    %v1357 = vadd.f32 %v1356, 1.0
    %v1358 = vrcp.pop %v1357
    %v1359 = vmul.f32 1.0, %v1358
    %v1360 = vmul.f32 %v1352, %v1183
    %v1361 = vmul.f32 %v1346, %v1353
    %v1362 = vadd.f32 %v1360, %v1361
    %v1363 = vtanh.pop %v1362
    %v1364 = vmul.f32 %v1359, %v1363
    %s1365 = scalar_lea.vmem [#allocation3], 32
    %1366 = vst [vmem:[%s1365] sm:$0xff] %v1364
    %s1367 = smul.u32 5, 4
    %s1368 = smul.addr %s1367, 8
    %s1369 = scalar_lea.vmem [#allocation2], %s1368
    %v1370 = vld [vmem:[%s1369] sm:$0xff]
    %v1371 = vld [vmem:[%s1369 + $0x8] sm:$0xff]
    %v1372 = vld [vmem:[%s1369 + $0x10] sm:$0xff]
    %v1373 = vld [vmem:[%s1369 + $0x18] sm:$0xff]
    %1374 = vmatprep.subr.mxu0 %v97
    %1375 = vmatpush1.msra.mxu0 %v96
    %1376 = vmatprep.subr.mxu0 %v101
    %1377 = vmatpush1.msra.mxu0 %v100
    %1378 = vmatprep.subr.mxu0 %v105
    %1379 = vmatpush1.msra.mxu0 %v104
    %1380 = vmatprep.subr.mxu0 %v109
    %1381 = vmatpush1.msra.mxu0 %v108
    %1382 = vmatprep.subr.mxu0 %v113
    %1383 = vmatpush1.msra.mxu0 %v112
    %1384 = vmatprep.subr.mxu0 %v117
    %1385 = vmatpush1.msra.mxu0 %v116
    %1386 = vmatprep.subr.mxu0 %v121
    %1387 = vmatpush1.msra.mxu0 %v120
    %1388 = vmatprep.subr.mxu0 %v125
    %1389 = vmatpush1.msra.mxu0 %v124
    %1390 = vmatprep.subr.mxu0 %v129
    %1391 = vmatpush1.msra.mxu0 %v128
    %1392 = vmatprep.subr.mxu0 %v133
    %1393 = vmatpush1.msra.mxu0 %v132
    %1394 = vmatprep.subr.mxu0 %v137
    %1395 = vmatpush1.msra.mxu0 %v136
    %1396 = vmatprep.subr.mxu0 %v141
    %1397 = vmatpush1.msra.mxu0 %v140
    %1398 = vmatprep.subr.mxu0 %v145
    %1399 = vmatpush1.msra.mxu0 %v144
    %1400 = vmatprep.subr.mxu0 %v149
    %1401 = vmatpush1.msra.mxu0 %v148
    %1402 = vmatprep.subr.mxu0 %v153
    %1403 = vmatpush1.msra.mxu0 %v152
    %1404 = vmatprep.subr.mxu0 %v157
    %1405 = vmatpush1.msra.mxu0 %v156
    %1406 = vmatprep.subr.mxu0 0.0
    %1407 = vmatpush1.msra.mxu0 0.0
    %1408 = vmatprep.subr.mxu0 0.0
    %1409 = vmatpush1.msra.mxu0 0.0
    %1410 = vmatprep.subr.mxu0 0.0
    %1411 = vmatpush1.msra.mxu0 0.0
    %1412 = vmatprep.subr.mxu0 0.0
    %1413 = vmatpush1.msra.mxu0 0.0
    %1414 = vmatprep.subr.mxu0 0.0
    %1415 = vmatpush1.msra.mxu0 0.0
    %1416 = vmatprep.subr.mxu0 0.0
    %1417 = vmatpush1.msra.mxu0 0.0
    %1418 = vmatprep.subr.mxu0 0.0
    %1419 = vmatpush1.msra.mxu0 0.0
    %1420 = vmatprep.subr.mxu0 0.0
    %1421 = vmatpush1.msra.mxu0 0.0
    %1422 = vmatprep.subr.mxu0 0.0
    %1423 = vmatpush1.msra.mxu0 0.0
    %1424 = vmatprep.subr.mxu0 0.0
    %1425 = vmatpush1.msra.mxu0 0.0
    %1426 = vmatprep.subr.mxu0 0.0
    %1427 = vmatpush1.msra.mxu0 0.0
    %1428 = vmatprep.subr.mxu0 0.0
    %1429 = vmatpush1.msra.mxu0 0.0
    %1430 = vmatprep.subr.mxu0 0.0
    %1431 = vmatpush1.msra.mxu0 0.0
    %1432 = vmatprep.subr.mxu0 0.0
    %1433 = vmatpush1.msra.mxu0 0.0
    %1434 = vmatprep.subr.mxu0 0.0
    %1435 = vmatpush1.msra.mxu0 0.0
    %1436 = vmatprep.subr.mxu0 0.0
    %1437 = vmatpush1.msra.mxu0 0.0
    %1438 = vmatprep.mubr.f32.mxu0 0.0
    %1439 = vmatmul.mubr.f32.gmra.mrb[0].mxu0 %v1364
    %v1440 = vpop.f32.mrb[0].mxu0
    %v1441 = vadd.f32 0.0, %v1440
    %v1442 = vpop.f32.mrb[0].mxu0
    %v1443 = vadd.f32 0.0, %v1442
    %1444 = vdwg.mxu0
    %1445 = vmatprep.subr.mxu0 %v99
    %1446 = vmatpush1.msra.mxu0 %v98
    %1447 = vmatprep.subr.mxu0 %v103
    %1448 = vmatpush1.msra.mxu0 %v102
    %1449 = vmatprep.subr.mxu0 %v107
    %1450 = vmatpush1.msra.mxu0 %v106
    %1451 = vmatprep.subr.mxu0 %v111
    %1452 = vmatpush1.msra.mxu0 %v110
    %1453 = vmatprep.subr.mxu0 %v115
    %1454 = vmatpush1.msra.mxu0 %v114
    %1455 = vmatprep.subr.mxu0 %v119
    %1456 = vmatpush1.msra.mxu0 %v118
    %1457 = vmatprep.subr.mxu0 %v123
    %1458 = vmatpush1.msra.mxu0 %v122
    %1459 = vmatprep.subr.mxu0 %v127
    %1460 = vmatpush1.msra.mxu0 %v126
    %1461 = vmatprep.subr.mxu0 %v131
    %1462 = vmatpush1.msra.mxu0 %v130
    %1463 = vmatprep.subr.mxu0 %v135
    %1464 = vmatpush1.msra.mxu0 %v134
    %1465 = vmatprep.subr.mxu0 %v139
    %1466 = vmatpush1.msra.mxu0 %v138
    %1467 = vmatprep.subr.mxu0 %v143
    %1468 = vmatpush1.msra.mxu0 %v142
    %1469 = vmatprep.subr.mxu0 %v147
    %1470 = vmatpush1.msra.mxu0 %v146
    %1471 = vmatprep.subr.mxu0 %v151
    %1472 = vmatpush1.msra.mxu0 %v150
    %1473 = vmatprep.subr.mxu0 %v155
    %1474 = vmatpush1.msra.mxu0 %v154
    %1475 = vmatprep.subr.mxu0 %v159
    %1476 = vmatpush1.msra.mxu0 %v158
    %1477 = vmatprep.subr.mxu0 0.0
    %1478 = vmatpush1.msra.mxu0 0.0
    %1479 = vmatprep.subr.mxu0 0.0
    %1480 = vmatpush1.msra.mxu0 0.0
    %1481 = vmatprep.subr.mxu0 0.0
    %1482 = vmatpush1.msra.mxu0 0.0
    %1483 = vmatprep.subr.mxu0 0.0
    %1484 = vmatpush1.msra.mxu0 0.0
    %1485 = vmatprep.subr.mxu0 0.0
    %1486 = vmatpush1.msra.mxu0 0.0
    %1487 = vmatprep.subr.mxu0 0.0
    %1488 = vmatpush1.msra.mxu0 0.0
    %1489 = vmatprep.subr.mxu0 0.0
    %1490 = vmatpush1.msra.mxu0 0.0
    %1491 = vmatprep.subr.mxu0 0.0
    %1492 = vmatpush1.msra.mxu0 0.0
    %1493 = vmatprep.subr.mxu0 0.0
    %1494 = vmatpush1.msra.mxu0 0.0
    %1495 = vmatprep.subr.mxu0 0.0
    %1496 = vmatpush1.msra.mxu0 0.0
    %1497 = vmatprep.subr.mxu0 0.0
    %1498 = vmatpush1.msra.mxu0 0.0
    %1499 = vmatprep.subr.mxu0 0.0
    %1500 = vmatpush1.msra.mxu0 0.0
    %1501 = vmatprep.subr.mxu0 0.0
    %1502 = vmatpush1.msra.mxu0 0.0
    %1503 = vmatprep.subr.mxu0 0.0
    %1504 = vmatpush1.msra.mxu0 0.0
    %1505 = vmatprep.subr.mxu0 0.0
    %1506 = vmatpush1.msra.mxu0 0.0
    %1507 = vmatprep.subr.mxu0 0.0
    %1508 = vmatpush1.msra.mxu0 0.0
    %1509 = vmatprep.mubr.f32.mxu0 0.0
    %1510 = vmatmul.mubr.f32.gmra.mrb[0].mxu0 %v1364
    %v1511 = vpop.f32.mrb[0].mxu0
    %v1512 = vadd.f32 0.0, %v1511
    %v1513 = vpop.f32.mrb[0].mxu0
    %v1514 = vadd.f32 0.0, %v1513
    %1515 = vdwg.mxu0
    %v1516 = vadd.f32 %v1370, %v1441
    %v1517 = vadd.f32 %v1371, %v1443
    %v1518 = vadd.f32 %v1372, %v1512
    %v1519 = vadd.f32 %v1373, %v1514
    %v1520 = vxor.u32 %v1516, 2147483648
    %v1521 = vmul.f32 %v1520, 1.442695
    %v1522 = vpow.pop %v1521
    %v1523 = vadd.f32 %v1522, 1.0
    %v1524 = vrcp.pop %v1523
    %v1525 = vmul.f32 1.0, %v1524
    %v1526 = vxor.u32 %v1517, 2147483648
    %v1527 = vmul.f32 %v1526, 1.442695
    %v1528 = vpow.pop %v1527
    %v1529 = vadd.f32 %v1528, 1.0
    %v1530 = vrcp.pop %v1529
    %v1531 = vmul.f32 1.0, %v1530
    %v1532 = vtanh.pop %v1518
    %v1533 = vxor.u32 %v1519, 2147483648
    %v1534 = vmul.f32 %v1533, 1.442695
    %v1535 = vpow.pop %v1534
    %v1536 = vadd.f32 %v1535, 1.0
    %v1537 = vrcp.pop %v1536
    %v1538 = vmul.f32 1.0, %v1537
    %v1539 = vmul.f32 %v1531, %v1362
    %v1540 = vmul.f32 %v1525, %v1532
    %v1541 = vadd.f32 %v1539, %v1540
    %v1542 = vtanh.pop %v1541
    %v1543 = vmul.f32 %v1538, %v1542
    %s1544 = scalar_lea.vmem [#allocation3], 40
    %1545 = vst [vmem:[%s1544] sm:$0xff] %v1543
    %s1546 = smul.u32 6, 4
    %s1547 = smul.addr %s1546, 8
    %s1548 = scalar_lea.vmem [#allocation2], %s1547
    %v1549 = vld [vmem:[%s1548] sm:$0xff]
    %v1550 = vld [vmem:[%s1548 + $0x8] sm:$0xff]
    %v1551 = vld [vmem:[%s1548 + $0x10] sm:$0xff]
    %v1552 = vld [vmem:[%s1548 + $0x18] sm:$0xff]
    %1553 = vmatprep.subr.mxu0 %v97
    %1554 = vmatpush1.msra.mxu0 %v96
    %1555 = vmatprep.subr.mxu0 %v101
    %1556 = vmatpush1.msra.mxu0 %v100
    %1557 = vmatprep.subr.mxu0 %v105
    %1558 = vmatpush1.msra.mxu0 %v104
    %1559 = vmatprep.subr.mxu0 %v109
    %1560 = vmatpush1.msra.mxu0 %v108
    %1561 = vmatprep.subr.mxu0 %v113
    %1562 = vmatpush1.msra.mxu0 %v112
    %1563 = vmatprep.subr.mxu0 %v117
    %1564 = vmatpush1.msra.mxu0 %v116
    %1565 = vmatprep.subr.mxu0 %v121
    %1566 = vmatpush1.msra.mxu0 %v120
    %1567 = vmatprep.subr.mxu0 %v125
    %1568 = vmatpush1.msra.mxu0 %v124
    %1569 = vmatprep.subr.mxu0 %v129
    %1570 = vmatpush1.msra.mxu0 %v128
    %1571 = vmatprep.subr.mxu0 %v133
    %1572 = vmatpush1.msra.mxu0 %v132
    %1573 = vmatprep.subr.mxu0 %v137
    %1574 = vmatpush1.msra.mxu0 %v136
    %1575 = vmatprep.subr.mxu0 %v141
    %1576 = vmatpush1.msra.mxu0 %v140
    %1577 = vmatprep.subr.mxu0 %v145
    %1578 = vmatpush1.msra.mxu0 %v144
    %1579 = vmatprep.subr.mxu0 %v149
    %1580 = vmatpush1.msra.mxu0 %v148
    %1581 = vmatprep.subr.mxu0 %v153
    %1582 = vmatpush1.msra.mxu0 %v152
    %1583 = vmatprep.subr.mxu0 %v157
    %1584 = vmatpush1.msra.mxu0 %v156
    %1585 = vmatprep.subr.mxu0 0.0
    %1586 = vmatpush1.msra.mxu0 0.0
    %1587 = vmatprep.subr.mxu0 0.0
    %1588 = vmatpush1.msra.mxu0 0.0
    %1589 = vmatprep.subr.mxu0 0.0
    %1590 = vmatpush1.msra.mxu0 0.0
    %1591 = vmatprep.subr.mxu0 0.0
    %1592 = vmatpush1.msra.mxu0 0.0
    %1593 = vmatprep.subr.mxu0 0.0
    %1594 = vmatpush1.msra.mxu0 0.0
    %1595 = vmatprep.subr.mxu0 0.0
    %1596 = vmatpush1.msra.mxu0 0.0
    %1597 = vmatprep.subr.mxu0 0.0
    %1598 = vmatpush1.msra.mxu0 0.0
    %1599 = vmatprep.subr.mxu0 0.0
    %1600 = vmatpush1.msra.mxu0 0.0
    %1601 = vmatprep.subr.mxu0 0.0
    %1602 = vmatpush1.msra.mxu0 0.0
    %1603 = vmatprep.subr.mxu0 0.0
    %1604 = vmatpush1.msra.mxu0 0.0
    %1605 = vmatprep.subr.mxu0 0.0
    %1606 = vmatpush1.msra.mxu0 0.0
    %1607 = vmatprep.subr.mxu0 0.0
    %1608 = vmatpush1.msra.mxu0 0.0
    %1609 = vmatprep.subr.mxu0 0.0
    %1610 = vmatpush1.msra.mxu0 0.0
    %1611 = vmatprep.subr.mxu0 0.0
    %1612 = vmatpush1.msra.mxu0 0.0
    %1613 = vmatprep.subr.mxu0 0.0
    %1614 = vmatpush1.msra.mxu0 0.0
    %1615 = vmatprep.subr.mxu0 0.0
    %1616 = vmatpush1.msra.mxu0 0.0
    %1617 = vmatprep.mubr.f32.mxu0 0.0
    %1618 = vmatmul.mubr.f32.gmra.mrb[0].mxu0 %v1543
    %v1619 = vpop.f32.mrb[0].mxu0
    %v1620 = vadd.f32 0.0, %v1619
    %v1621 = vpop.f32.mrb[0].mxu0
    %v1622 = vadd.f32 0.0, %v1621
    %1623 = vdwg.mxu0
    %1624 = vmatprep.subr.mxu0 %v99
    %1625 = vmatpush1.msra.mxu0 %v98
    %1626 = vmatprep.subr.mxu0 %v103
    %1627 = vmatpush1.msra.mxu0 %v102
    %1628 = vmatprep.subr.mxu0 %v107
    %1629 = vmatpush1.msra.mxu0 %v106
    %1630 = vmatprep.subr.mxu0 %v111
    %1631 = vmatpush1.msra.mxu0 %v110
    %1632 = vmatprep.subr.mxu0 %v115
    %1633 = vmatpush1.msra.mxu0 %v114
    %1634 = vmatprep.subr.mxu0 %v119
    %1635 = vmatpush1.msra.mxu0 %v118
    %1636 = vmatprep.subr.mxu0 %v123
    %1637 = vmatpush1.msra.mxu0 %v122
    %1638 = vmatprep.subr.mxu0 %v127
    %1639 = vmatpush1.msra.mxu0 %v126
    %1640 = vmatprep.subr.mxu0 %v131
    %1641 = vmatpush1.msra.mxu0 %v130
    %1642 = vmatprep.subr.mxu0 %v135
    %1643 = vmatpush1.msra.mxu0 %v134
    %1644 = vmatprep.subr.mxu0 %v139
    %1645 = vmatpush1.msra.mxu0 %v138
    %1646 = vmatprep.subr.mxu0 %v143
    %1647 = vmatpush1.msra.mxu0 %v142
    %1648 = vmatprep.subr.mxu0 %v147
    %1649 = vmatpush1.msra.mxu0 %v146
    %1650 = vmatprep.subr.mxu0 %v151
    %1651 = vmatpush1.msra.mxu0 %v150
    %1652 = vmatprep.subr.mxu0 %v155
    %1653 = vmatpush1.msra.mxu0 %v154
    %1654 = vmatprep.subr.mxu0 %v159
    %1655 = vmatpush1.msra.mxu0 %v158
    %1656 = vmatprep.subr.mxu0 0.0
    %1657 = vmatpush1.msra.mxu0 0.0
    %1658 = vmatprep.subr.mxu0 0.0
    %1659 = vmatpush1.msra.mxu0 0.0
    %1660 = vmatprep.subr.mxu0 0.0
    %1661 = vmatpush1.msra.mxu0 0.0
    %1662 = vmatprep.subr.mxu0 0.0
    %1663 = vmatpush1.msra.mxu0 0.0
    %1664 = vmatprep.subr.mxu0 0.0
    %1665 = vmatpush1.msra.mxu0 0.0
    %1666 = vmatprep.subr.mxu0 0.0
    %1667 = vmatpush1.msra.mxu0 0.0
    %1668 = vmatprep.subr.mxu0 0.0
    %1669 = vmatpush1.msra.mxu0 0.0
    %1670 = vmatprep.subr.mxu0 0.0
    %1671 = vmatpush1.msra.mxu0 0.0
    %1672 = vmatprep.subr.mxu0 0.0
    %1673 = vmatpush1.msra.mxu0 0.0
    %1674 = vmatprep.subr.mxu0 0.0
    %1675 = vmatpush1.msra.mxu0 0.0
    %1676 = vmatprep.subr.mxu0 0.0
    %1677 = vmatpush1.msra.mxu0 0.0
    %1678 = vmatprep.subr.mxu0 0.0
    %1679 = vmatpush1.msra.mxu0 0.0
    %1680 = vmatprep.subr.mxu0 0.0
    %1681 = vmatpush1.msra.mxu0 0.0
    %1682 = vmatprep.subr.mxu0 0.0
    %1683 = vmatpush1.msra.mxu0 0.0
    %1684 = vmatprep.subr.mxu0 0.0
    %1685 = vmatpush1.msra.mxu0 0.0
    %1686 = vmatprep.subr.mxu0 0.0
    %1687 = vmatpush1.msra.mxu0 0.0
    %1688 = vmatprep.mubr.f32.mxu0 0.0
    %1689 = vmatmul.mubr.f32.gmra.mrb[0].mxu0 %v1543
    %v1690 = vpop.f32.mrb[0].mxu0
    %v1691 = vadd.f32 0.0, %v1690
    %v1692 = vpop.f32.mrb[0].mxu0
    %v1693 = vadd.f32 0.0, %v1692
    %1694 = vdwg.mxu0
    %v1695 = vadd.f32 %v1549, %v1620
    %v1696 = vadd.f32 %v1550, %v1622
    %v1697 = vadd.f32 %v1551, %v1691
    %v1698 = vadd.f32 %v1552, %v1693
    %v1699 = vxor.u32 %v1695, 2147483648
    %v1700 = vmul.f32 %v1699, 1.442695
    %v1701 = vpow.pop %v1700
    %v1702 = vadd.f32 %v1701, 1.0
    %v1703 = vrcp.pop %v1702
    %v1704 = vmul.f32 1.0, %v1703
    %v1705 = vxor.u32 %v1696, 2147483648
    %v1706 = vmul.f32 %v1705, 1.442695
    %v1707 = vpow.pop %v1706
    %v1708 = vadd.f32 %v1707, 1.0
    %v1709 = vrcp.pop %v1708
    %v1710 = vmul.f32 1.0, %v1709
    %v1711 = vtanh.pop %v1697
    %v1712 = vxor.u32 %v1698, 2147483648
    %v1713 = vmul.f32 %v1712, 1.442695
    %v1714 = vpow.pop %v1713
    %v1715 = vadd.f32 %v1714, 1.0
    %v1716 = vrcp.pop %v1715
    %v1717 = vmul.f32 1.0, %v1716
    %v1718 = vmul.f32 %v1710, %v1541
    %v1719 = vmul.f32 %v1704, %v1711
    %v1720 = vadd.f32 %v1718, %v1719
    %v1721 = vtanh.pop %v1720
    %v1722 = vmul.f32 %v1717, %v1721
    %s1723 = scalar_lea.vmem [#allocation3], 48
    %1724 = vst [vmem:[%s1723] sm:$0xff] %v1722
    %s1725 = smul.u32 7, 4
    %s1726 = smul.addr %s1725, 8
    %s1727 = scalar_lea.vmem [#allocation2], %s1726
    %v1728 = vld [vmem:[%s1727] sm:$0xff]
    %v1729 = vld [vmem:[%s1727 + $0x8] sm:$0xff]
    %v1730 = vld [vmem:[%s1727 + $0x10] sm:$0xff]
    %v1731 = vld [vmem:[%s1727 + $0x18] sm:$0xff]
    %1732 = vmatprep.subr.mxu0 %v97
    %1733 = vmatpush1.msra.mxu0 %v96
    %1734 = vmatprep.subr.mxu0 %v101
    %1735 = vmatpush1.msra.mxu0 %v100
    %1736 = vmatprep.subr.mxu0 %v105
    %1737 = vmatpush1.msra.mxu0 %v104
    %1738 = vmatprep.subr.mxu0 %v109
    %1739 = vmatpush1.msra.mxu0 %v108
    %1740 = vmatprep.subr.mxu0 %v113
    %1741 = vmatpush1.msra.mxu0 %v112
    %1742 = vmatprep.subr.mxu0 %v117
    %1743 = vmatpush1.msra.mxu0 %v116
    %1744 = vmatprep.subr.mxu0 %v121
    %1745 = vmatpush1.msra.mxu0 %v120
    %1746 = vmatprep.subr.mxu0 %v125
    %1747 = vmatpush1.msra.mxu0 %v124
    %1748 = vmatprep.subr.mxu0 %v129
    %1749 = vmatpush1.msra.mxu0 %v128
    %1750 = vmatprep.subr.mxu0 %v133
    %1751 = vmatpush1.msra.mxu0 %v132
    %1752 = vmatprep.subr.mxu0 %v137
    %1753 = vmatpush1.msra.mxu0 %v136
    %1754 = vmatprep.subr.mxu0 %v141
    %1755 = vmatpush1.msra.mxu0 %v140
    %1756 = vmatprep.subr.mxu0 %v145
    %1757 = vmatpush1.msra.mxu0 %v144
    %1758 = vmatprep.subr.mxu0 %v149
    %1759 = vmatpush1.msra.mxu0 %v148
    %1760 = vmatprep.subr.mxu0 %v153
    %1761 = vmatpush1.msra.mxu0 %v152
    %1762 = vmatprep.subr.mxu0 %v157
    %1763 = vmatpush1.msra.mxu0 %v156
    %1764 = vmatprep.subr.mxu0 0.0
    %1765 = vmatpush1.msra.mxu0 0.0
    %1766 = vmatprep.subr.mxu0 0.0
    %1767 = vmatpush1.msra.mxu0 0.0
    %1768 = vmatprep.subr.mxu0 0.0
    %1769 = vmatpush1.msra.mxu0 0.0
    %1770 = vmatprep.subr.mxu0 0.0
    %1771 = vmatpush1.msra.mxu0 0.0
    %1772 = vmatprep.subr.mxu0 0.0
    %1773 = vmatpush1.msra.mxu0 0.0
    %1774 = vmatprep.subr.mxu0 0.0
    %1775 = vmatpush1.msra.mxu0 0.0
    %1776 = vmatprep.subr.mxu0 0.0
    %1777 = vmatpush1.msra.mxu0 0.0
    %1778 = vmatprep.subr.mxu0 0.0
    %1779 = vmatpush1.msra.mxu0 0.0
    %1780 = vmatprep.subr.mxu0 0.0
    %1781 = vmatpush1.msra.mxu0 0.0
    %1782 = vmatprep.subr.mxu0 0.0
    %1783 = vmatpush1.msra.mxu0 0.0
    %1784 = vmatprep.subr.mxu0 0.0
    %1785 = vmatpush1.msra.mxu0 0.0
    %1786 = vmatprep.subr.mxu0 0.0
    %1787 = vmatpush1.msra.mxu0 0.0
    %1788 = vmatprep.subr.mxu0 0.0
    %1789 = vmatpush1.msra.mxu0 0.0
    %1790 = vmatprep.subr.mxu0 0.0
    %1791 = vmatpush1.msra.mxu0 0.0
    %1792 = vmatprep.subr.mxu0 0.0
    %1793 = vmatpush1.msra.mxu0 0.0
    %1794 = vmatprep.subr.mxu0 0.0
    %1795 = vmatpush1.msra.mxu0 0.0
    %1796 = vmatprep.mubr.f32.mxu0 0.0
    %1797 = vmatmul.mubr.f32.gmra.mrb[0].mxu0 %v1722
    %v1798 = vpop.f32.mrb[0].mxu0
    %v1799 = vadd.f32 0.0, %v1798
    %v1800 = vpop.f32.mrb[0].mxu0
    %v1801 = vadd.f32 0.0, %v1800
    %1802 = vdwg.mxu0
    %1803 = vmatprep.subr.mxu0 %v99
    %1804 = vmatpush1.msra.mxu0 %v98
    %1805 = vmatprep.subr.mxu0 %v103
    %1806 = vmatpush1.msra.mxu0 %v102
    %1807 = vmatprep.subr.mxu0 %v107
    %1808 = vmatpush1.msra.mxu0 %v106
    %1809 = vmatprep.subr.mxu0 %v111
    %1810 = vmatpush1.msra.mxu0 %v110
    %1811 = vmatprep.subr.mxu0 %v115
    %1812 = vmatpush1.msra.mxu0 %v114
    %1813 = vmatprep.subr.mxu0 %v119
    %1814 = vmatpush1.msra.mxu0 %v118
    %1815 = vmatprep.subr.mxu0 %v123
    %1816 = vmatpush1.msra.mxu0 %v122
    %1817 = vmatprep.subr.mxu0 %v127
    %1818 = vmatpush1.msra.mxu0 %v126
    %1819 = vmatprep.subr.mxu0 %v131
    %1820 = vmatpush1.msra.mxu0 %v130
    %1821 = vmatprep.subr.mxu0 %v135
    %1822 = vmatpush1.msra.mxu0 %v134
    %1823 = vmatprep.subr.mxu0 %v139
    %1824 = vmatpush1.msra.mxu0 %v138
    %1825 = vmatprep.subr.mxu0 %v143
    %1826 = vmatpush1.msra.mxu0 %v142
    %1827 = vmatprep.subr.mxu0 %v147
    %1828 = vmatpush1.msra.mxu0 %v146
    %1829 = vmatprep.subr.mxu0 %v151
    %1830 = vmatpush1.msra.mxu0 %v150
    %1831 = vmatprep.subr.mxu0 %v155
    %1832 = vmatpush1.msra.mxu0 %v154
    %1833 = vmatprep.subr.mxu0 %v159
    %1834 = vmatpush1.msra.mxu0 %v158
    %1835 = vmatprep.subr.mxu0 0.0
    %1836 = vmatpush1.msra.mxu0 0.0
    %1837 = vmatprep.subr.mxu0 0.0
    %1838 = vmatpush1.msra.mxu0 0.0
    %1839 = vmatprep.subr.mxu0 0.0
    %1840 = vmatpush1.msra.mxu0 0.0
    %1841 = vmatprep.subr.mxu0 0.0
    %1842 = vmatpush1.msra.mxu0 0.0
    %1843 = vmatprep.subr.mxu0 0.0
    %1844 = vmatpush1.msra.mxu0 0.0
    %1845 = vmatprep.subr.mxu0 0.0
    %1846 = vmatpush1.msra.mxu0 0.0
    %1847 = vmatprep.subr.mxu0 0.0
    %1848 = vmatpush1.msra.mxu0 0.0
    %1849 = vmatprep.subr.mxu0 0.0
    %1850 = vmatpush1.msra.mxu0 0.0
    %1851 = vmatprep.subr.mxu0 0.0
    %1852 = vmatpush1.msra.mxu0 0.0
    %1853 = vmatprep.subr.mxu0 0.0
    %1854 = vmatpush1.msra.mxu0 0.0
    %1855 = vmatprep.subr.mxu0 0.0
    %1856 = vmatpush1.msra.mxu0 0.0
    %1857 = vmatprep.subr.mxu0 0.0
    %1858 = vmatpush1.msra.mxu0 0.0
    %1859 = vmatprep.subr.mxu0 0.0
    %1860 = vmatpush1.msra.mxu0 0.0
    %1861 = vmatprep.subr.mxu0 0.0
    %1862 = vmatpush1.msra.mxu0 0.0
    %1863 = vmatprep.subr.mxu0 0.0
    %1864 = vmatpush1.msra.mxu0 0.0
    %1865 = vmatprep.subr.mxu0 0.0
    %1866 = vmatpush1.msra.mxu0 0.0
    %1867 = vmatprep.mubr.f32.mxu0 0.0
    %1868 = vmatmul.mubr.f32.gmra.mrb[0].mxu0 %v1722
    %v1869 = vpop.f32.mrb[0].mxu0
    %v1870 = vadd.f32 0.0, %v1869
    %v1871 = vpop.f32.mrb[0].mxu0
    %v1872 = vadd.f32 0.0, %v1871
    %1873 = vdwg.mxu0
    %v1874 = vadd.f32 %v1728, %v1799
    %v1875 = vadd.f32 %v1729, %v1801
    %v1876 = vadd.f32 %v1730, %v1870
    %v1877 = vadd.f32 %v1731, %v1872
    %v1878 = vxor.u32 %v1874, 2147483648
    %v1879 = vmul.f32 %v1878, 1.442695
    %v1880 = vpow.pop %v1879
    %v1881 = vadd.f32 %v1880, 1.0
    %v1882 = vrcp.pop %v1881
    %v1883 = vmul.f32 1.0, %v1882
    %v1884 = vxor.u32 %v1875, 2147483648
    %v1885 = vmul.f32 %v1884, 1.442695
    %v1886 = vpow.pop %v1885
    %v1887 = vadd.f32 %v1886, 1.0
    %v1888 = vrcp.pop %v1887
    %v1889 = vmul.f32 1.0, %v1888
    %v1890 = vtanh.pop %v1876
    %v1891 = vxor.u32 %v1877, 2147483648
    %v1892 = vmul.f32 %v1891, 1.442695
    %v1893 = vpow.pop %v1892
    %v1894 = vadd.f32 %v1893, 1.0
    %v1895 = vrcp.pop %v1894
    %v1896 = vmul.f32 1.0, %v1895
    %v1897 = vmul.f32 %v1889, %v1720
    %v1898 = vmul.f32 %v1883, %v1890
    %v1899 = vadd.f32 %v1897, %v1898
    %v1900 = vtanh.pop %v1899
    %v1901 = vmul.f32 %v1896, %v1900
    %s1902 = scalar_lea.vmem [#allocation3], 56
    %1903 = vst [vmem:[%s1902] sm:$0xff] %v1901
    %v1904 = vld [vmem:[#allocation7] sm:$0xff]
    %v1905 = vld [vmem:[#allocation7 + $0x8] sm:$0xff]
    %v1906 = vld [vmem:[#allocation7 + $0x10] sm:$0xff]
    %v1907 = vld [vmem:[#allocation7 + $0x18] sm:$0xff]
    %v1908 = vld [vmem:[#allocation7 + $0x20] sm:$0xff]
    %v1909 = vld [vmem:[#allocation7 + $0x28] sm:$0xff]
    %v1910 = vld [vmem:[#allocation7 + $0x30] sm:$0xff]
    %v1911 = vld [vmem:[#allocation7 + $0x38] sm:$0xff]
    %v1912 = vld [vmem:[#allocation7 + $0x40] sm:$0xff]
    %v1913 = vld [vmem:[#allocation7 + $0x48] sm:$0xff]
    %v1914 = vld [vmem:[#allocation7 + $0x50] sm:$0xff]
    %v1915 = vld [vmem:[#allocation7 + $0x58] sm:$0xff]
    %v1916 = vld [vmem:[#allocation7 + $0x60] sm:$0xff]
    %v1917 = vld [vmem:[#allocation7 + $0x68] sm:$0xff]
    %v1918 = vld [vmem:[#allocation7 + $0x70] sm:$0xff]
    %v1919 = vld [vmem:[#allocation7 + $0x78] sm:$0xff]
    %v1920 = vld [vmem:[#allocation7 + $0x80] sm:$0xff]
    %v1921 = vld [vmem:[#allocation7 + $0x88] sm:$0xff]
    %v1922 = vld [vmem:[#allocation7 + $0x90] sm:$0xff]
    %v1923 = vld [vmem:[#allocation7 + $0x98] sm:$0xff]
    %v1924 = vld [vmem:[#allocation7 + $0xa0] sm:$0xff]
    %v1925 = vld [vmem:[#allocation7 + $0xa8] sm:$0xff]
    %v1926 = vld [vmem:[#allocation7 + $0xb0] sm:$0xff]
    %v1927 = vld [vmem:[#allocation7 + $0xb8] sm:$0xff]
    %v1928 = vld [vmem:[#allocation7 + $0xc0] sm:$0xff]
    %v1929 = vld [vmem:[#allocation7 + $0xc8] sm:$0xff]
    %v1930 = vld [vmem:[#allocation7 + $0xd0] sm:$0xff]
    %v1931 = vld [vmem:[#allocation7 + $0xd8] sm:$0xff]
    %v1932 = vld [vmem:[#allocation7 + $0xe0] sm:$0xff]
    %v1933 = vld [vmem:[#allocation7 + $0xe8] sm:$0xff]
    %v1934 = vld [vmem:[#allocation7 + $0xf0] sm:$0xff]
    %v1935 = vld [vmem:[#allocation7 + $0xf8] sm:$0xff]
    %v1936 = vld [vmem:[#allocation7 + $0x100] sm:$0xff]
    %v1937 = vld [vmem:[#allocation7 + $0x108] sm:$0xff]
    %v1938 = vld [vmem:[#allocation7 + $0x110] sm:$0xff]
    %v1939 = vld [vmem:[#allocation7 + $0x118] sm:$0xff]
    %v1940 = vld [vmem:[#allocation7 + $0x120] sm:$0xff]
    %v1941 = vld [vmem:[#allocation7 + $0x128] sm:$0xff]
    %v1942 = vld [vmem:[#allocation7 + $0x130] sm:$0xff]
    %v1943 = vld [vmem:[#allocation7 + $0x138] sm:$0xff]
    %v1944 = vld [vmem:[#allocation7 + $0x140] sm:$0xff]
    %v1945 = vld [vmem:[#allocation7 + $0x148] sm:$0xff]
    %v1946 = vld [vmem:[#allocation7 + $0x150] sm:$0xff]
    %v1947 = vld [vmem:[#allocation7 + $0x158] sm:$0xff]
    %v1948 = vld [vmem:[#allocation7 + $0x160] sm:$0xff]
    %v1949 = vld [vmem:[#allocation7 + $0x168] sm:$0xff]
    %v1950 = vld [vmem:[#allocation7 + $0x170] sm:$0xff]
    %v1951 = vld [vmem:[#allocation7 + $0x178] sm:$0xff]
    %v1952 = vld [vmem:[#allocation7 + $0x180] sm:$0xff]
    %v1953 = vld [vmem:[#allocation7 + $0x188] sm:$0xff]
    %v1954 = vld [vmem:[#allocation7 + $0x190] sm:$0xff]
    %v1955 = vld [vmem:[#allocation7 + $0x198] sm:$0xff]
    %v1956 = vld [vmem:[#allocation7 + $0x1a0] sm:$0xff]
    %v1957 = vld [vmem:[#allocation7 + $0x1a8] sm:$0xff]
    %v1958 = vld [vmem:[#allocation7 + $0x1b0] sm:$0xff]
    %v1959 = vld [vmem:[#allocation7 + $0x1b8] sm:$0xff]
    %v1960 = vld [vmem:[#allocation7 + $0x1c0] sm:$0xff]
    %v1961 = vld [vmem:[#allocation7 + $0x1c8] sm:$0xff]
    %v1962 = vld [vmem:[#allocation7 + $0x1d0] sm:$0xff]
    %v1963 = vld [vmem:[#allocation7 + $0x1d8] sm:$0xff]
    %v1964 = vld [vmem:[#allocation7 + $0x1e0] sm:$0xff]
    %v1965 = vld [vmem:[#allocation7 + $0x1e8] sm:$0xff]
    %v1966 = vld [vmem:[#allocation7 + $0x1f0] sm:$0xff]
    %v1967 = vld [vmem:[#allocation7 + $0x1f8] sm:$0xff]
    %v1968 = vld [vmem:[#allocation9] sm:$0xff]
    %v1969 = vld [vmem:[#allocation9 + $0x8] sm:$0xff]
    %v1970 = vld [vmem:[#allocation9 + $0x10] sm:$0xff]
    %v1971 = vld [vmem:[#allocation9 + $0x18] sm:$0xff]
    %v1972 = vld [vmem:[#allocation9 + $0x20] sm:$0xff]
    %v1973 = vld [vmem:[#allocation9 + $0x28] sm:$0xff]
    %v1974 = vld [vmem:[#allocation9 + $0x30] sm:$0xff]
    %v1975 = vld [vmem:[#allocation9 + $0x38] sm:$0xff]
    %v1976 = vld [vmem:[#allocation9 + $0x40] sm:$0xff]
    %v1977 = vld [vmem:[#allocation9 + $0x48] sm:$0xff]
    %v1978 = vld [vmem:[#allocation9 + $0x50] sm:$0xff]
    %v1979 = vld [vmem:[#allocation9 + $0x58] sm:$0xff]
    %v1980 = vld [vmem:[#allocation9 + $0x60] sm:$0xff]
    %v1981 = vld [vmem:[#allocation9 + $0x68] sm:$0xff]
    %v1982 = vld [vmem:[#allocation9 + $0x70] sm:$0xff]
    %v1983 = vld [vmem:[#allocation9 + $0x78] sm:$0xff]
    %v1984 = vld [vmem:[#allocation9 + $0x80] sm:$0xff]
    %v1985 = vld [vmem:[#allocation9 + $0x88] sm:$0xff]
    %v1986 = vld [vmem:[#allocation9 + $0x90] sm:$0xff]
    %v1987 = vld [vmem:[#allocation9 + $0x98] sm:$0xff]
    %v1988 = vld [vmem:[#allocation9 + $0xa0] sm:$0xff]
    %v1989 = vld [vmem:[#allocation9 + $0xa8] sm:$0xff]
    %v1990 = vld [vmem:[#allocation9 + $0xb0] sm:$0xff]
    %v1991 = vld [vmem:[#allocation9 + $0xb8] sm:$0xff]
    %v1992 = vld [vmem:[#allocation9 + $0xc0] sm:$0xff]
    %v1993 = vld [vmem:[#allocation9 + $0xc8] sm:$0xff]
    %v1994 = vld [vmem:[#allocation9 + $0xd0] sm:$0xff]
    %v1995 = vld [vmem:[#allocation9 + $0xd8] sm:$0xff]
    %v1996 = vld [vmem:[#allocation9 + $0xe0] sm:$0xff]
    %v1997 = vld [vmem:[#allocation9 + $0xe8] sm:$0xff]
    %v1998 = vld [vmem:[#allocation9 + $0xf0] sm:$0xff]
    %v1999 = vld [vmem:[#allocation9 + $0xf8] sm:$0xff]
    %v2000 = vld [vmem:[#allocation9 + $0x100] sm:$0xff]
    %v2001 = vld [vmem:[#allocation9 + $0x108] sm:$0xff]
    %v2002 = vld [vmem:[#allocation9 + $0x110] sm:$0xff]
    %v2003 = vld [vmem:[#allocation9 + $0x118] sm:$0xff]
    %v2004 = vld [vmem:[#allocation9 + $0x120] sm:$0xff]
    %v2005 = vld [vmem:[#allocation9 + $0x128] sm:$0xff]
    %v2006 = vld [vmem:[#allocation9 + $0x130] sm:$0xff]
    %v2007 = vld [vmem:[#allocation9 + $0x138] sm:$0xff]
    %v2008 = vld [vmem:[#allocation9 + $0x140] sm:$0xff]
    %v2009 = vld [vmem:[#allocation9 + $0x148] sm:$0xff]
    %v2010 = vld [vmem:[#allocation9 + $0x150] sm:$0xff]
    %v2011 = vld [vmem:[#allocation9 + $0x158] sm:$0xff]
    %v2012 = vld [vmem:[#allocation9 + $0x160] sm:$0xff]
    %v2013 = vld [vmem:[#allocation9 + $0x168] sm:$0xff]
    %v2014 = vld [vmem:[#allocation9 + $0x170] sm:$0xff]
    %v2015 = vld [vmem:[#allocation9 + $0x178] sm:$0xff]
    %v2016 = vld [vmem:[#allocation9 + $0x180] sm:$0xff]
    %v2017 = vld [vmem:[#allocation9 + $0x188] sm:$0xff]
    %v2018 = vld [vmem:[#allocation9 + $0x190] sm:$0xff]
    %v2019 = vld [vmem:[#allocation9 + $0x198] sm:$0xff]
    %v2020 = vld [vmem:[#allocation9 + $0x1a0] sm:$0xff]
    %v2021 = vld [vmem:[#allocation9 + $0x1a8] sm:$0xff]
    %v2022 = vld [vmem:[#allocation9 + $0x1b0] sm:$0xff]
    %v2023 = vld [vmem:[#allocation9 + $0x1b8] sm:$0xff]
    %v2024 = vld [vmem:[#allocation9 + $0x1c0] sm:$0xff]
    %v2025 = vld [vmem:[#allocation9 + $0x1c8] sm:$0xff]
    %v2026 = vld [vmem:[#allocation9 + $0x1d0] sm:$0xff]
    %v2027 = vld [vmem:[#allocation9 + $0x1d8] sm:$0xff]
    %v2028 = vld [vmem:[#allocation9 + $0x1e0] sm:$0xff]
    %v2029 = vld [vmem:[#allocation9 + $0x1e8] sm:$0xff]
    %v2030 = vld [vmem:[#allocation9 + $0x1f0] sm:$0xff]
    %v2031 = vld [vmem:[#allocation9 + $0x1f8] sm:$0xff]
    %v2032 = vld [vmem:[%s6] sm:$0xf]
    %v2033 = vld [vmem:[#allocation3] sm:$0xff]
    %v2034 = vld [vmem:[#allocation3 + $0x8] sm:$0xff]
    %v2035 = vld [vmem:[#allocation3 + $0x10] sm:$0xff]
    %v2036 = vld [vmem:[#allocation3 + $0x18] sm:$0xff]
    %v2037 = vld [vmem:[#allocation3 + $0x20] sm:$0xff]
    %v2038 = vld [vmem:[#allocation3 + $0x28] sm:$0xff]
    %v2039 = vld [vmem:[#allocation3 + $0x30] sm:$0xff]
    %v2040 = vld [vmem:[#allocation3 + $0x38] sm:$0xff]
    %v2042 = vlaneseq
    %v2043 = vshrl.u32 %v2042, 7
    %v2044 = vsub.s32 0, %v2043
    %v2045 = vrot.slane %v2032, %v2044
    %v2046 = vlaneseq
    %v2047 = vshrl.u32 %v2046, 7
    %v2048 = vsub.s32 1, %v2047
    %v2049 = vrot.slane %v2032, %v2048
    %v2050 = vlaneseq
    %v2051 = vshrl.u32 %v2050, 7
    %v2052 = vsub.s32 2, %v2051
    %v2053 = vrot.slane %v2032, %v2052
    %v2054 = vlaneseq
    %v2055 = vshrl.u32 %v2054, 7
    %v2056 = vsub.s32 3, %v2055
    %v2057 = vrot.slane %v2032, %v2056
    %2062 = vmatprep.subr.mxu0 %v1905
    %2063 = vmatpush1.msra.mxu0 %v1904
    %2064 = vmatprep.subr.mxu0 %v1909
    %2065 = vmatpush1.msra.mxu0 %v1908
    %2066 = vmatprep.subr.mxu0 %v1913
    %2067 = vmatpush1.msra.mxu0 %v1912
    %2068 = vmatprep.subr.mxu0 %v1917
    %2069 = vmatpush1.msra.mxu0 %v1916
    %2070 = vmatprep.subr.mxu0 %v1921
    %2071 = vmatpush1.msra.mxu0 %v1920
    %2072 = vmatprep.subr.mxu0 %v1925
    %2073 = vmatpush1.msra.mxu0 %v1924
    %2074 = vmatprep.subr.mxu0 %v1929
    %2075 = vmatpush1.msra.mxu0 %v1928
    %2076 = vmatprep.subr.mxu0 %v1933
    %2077 = vmatpush1.msra.mxu0 %v1932
    %2078 = vmatprep.subr.mxu0 %v1937
    %2079 = vmatpush1.msra.mxu0 %v1936
    %2080 = vmatprep.subr.mxu0 %v1941
    %2081 = vmatpush1.msra.mxu0 %v1940
    %2082 = vmatprep.subr.mxu0 %v1945
    %2083 = vmatpush1.msra.mxu0 %v1944
    %2084 = vmatprep.subr.mxu0 %v1949
    %2085 = vmatpush1.msra.mxu0 %v1948
    %2086 = vmatprep.subr.mxu0 %v1953
    %2087 = vmatpush1.msra.mxu0 %v1952
    %2088 = vmatprep.subr.mxu0 %v1957
    %2089 = vmatpush1.msra.mxu0 %v1956
    %2090 = vmatprep.subr.mxu0 %v1961
    %2091 = vmatpush1.msra.mxu0 %v1960
    %2092 = vmatprep.subr.mxu0 %v1965
    %2093 = vmatpush1.msra.mxu0 %v1964
    %2094 = vmatprep.subr.mxu0 0.0
    %2095 = vmatpush1.msra.mxu0 0.0
    %2096 = vmatprep.subr.mxu0 0.0
    %2097 = vmatpush1.msra.mxu0 0.0
    %2098 = vmatprep.subr.mxu0 0.0
    %2099 = vmatpush1.msra.mxu0 0.0
    %2100 = vmatprep.subr.mxu0 0.0
    %2101 = vmatpush1.msra.mxu0 0.0
    %2102 = vmatprep.subr.mxu0 0.0
    %2103 = vmatpush1.msra.mxu0 0.0
    %2104 = vmatprep.subr.mxu0 0.0
    %2105 = vmatpush1.msra.mxu0 0.0
    %2106 = vmatprep.subr.mxu0 0.0
    %2107 = vmatpush1.msra.mxu0 0.0
    %2108 = vmatprep.subr.mxu0 0.0
    %2109 = vmatpush1.msra.mxu0 0.0
    %2110 = vmatprep.subr.mxu0 0.0
    %2111 = vmatpush1.msra.mxu0 0.0
    %2112 = vmatprep.subr.mxu0 0.0
    %2113 = vmatpush1.msra.mxu0 0.0
    %2114 = vmatprep.subr.mxu0 0.0
    %2115 = vmatpush1.msra.mxu0 0.0
    %2116 = vmatprep.subr.mxu0 0.0
    %2117 = vmatpush1.msra.mxu0 0.0
    %2118 = vmatprep.subr.mxu0 0.0
    %2119 = vmatpush1.msra.mxu0 0.0
    %2120 = vmatprep.subr.mxu0 0.0
    %2121 = vmatpush1.msra.mxu0 0.0
    %2122 = vmatprep.subr.mxu0 0.0
    %2123 = vmatpush1.msra.mxu0 0.0
    %2124 = vmatprep.subr.mxu0 0.0
    %2125 = vmatpush1.msra.mxu0 0.0
    %2126 = vmatprep.mubr.f32.mxu0 0.0
    %2127 = vmatmul.mubr.f32.gmra.mrb[0].mxu0 %v2033
    %v2128 = vpop.f32.mrb[0].mxu0
    %v2129 = vadd.f32 %v2045, %v2128
    %v2130 = vpop.f32.mrb[0].mxu0
    %v2131 = vadd.f32 %v2049, %v2130
    %2132 = vmatprep.mubr.f32.mxu0 0.0
    %2133 = vmatmul.mubr.f32.gmra.mrb[0].mxu0 %v2034
    %v2134 = vpop.f32.mrb[0].mxu0
    %v2135 = vadd.f32 %v2045, %v2134
    %v2136 = vpop.f32.mrb[0].mxu0
    %v2137 = vadd.f32 %v2049, %v2136
    %2138 = vmatprep.mubr.f32.mxu0 0.0
    %2139 = vmatmul.mubr.f32.gmra.mrb[0].mxu0 %v2035
    %v2140 = vpop.f32.mrb[0].mxu0
    %v2141 = vadd.f32 %v2045, %v2140
    %v2142 = vpop.f32.mrb[0].mxu0
    %v2143 = vadd.f32 %v2049, %v2142
    %2144 = vmatprep.mubr.f32.mxu0 0.0
    %2145 = vmatmul.mubr.f32.gmra.mrb[0].mxu0 %v2036
    %v2146 = vpop.f32.mrb[0].mxu0
    %v2147 = vadd.f32 %v2045, %v2146
    %v2148 = vpop.f32.mrb[0].mxu0
    %v2149 = vadd.f32 %v2049, %v2148
    %2150 = vmatprep.mubr.f32.mxu0 0.0
    %2151 = vmatmul.mubr.f32.gmra.mrb[0].mxu0 %v2037
    %v2152 = vpop.f32.mrb[0].mxu0
    %v2153 = vadd.f32 %v2045, %v2152
    %v2154 = vpop.f32.mrb[0].mxu0
    %v2155 = vadd.f32 %v2049, %v2154
    %2156 = vmatprep.mubr.f32.mxu0 0.0
    %2157 = vmatmul.mubr.f32.gmra.mrb[0].mxu0 %v2038
    %v2158 = vpop.f32.mrb[0].mxu0
    %v2159 = vadd.f32 %v2045, %v2158
    %v2160 = vpop.f32.mrb[0].mxu0
    %v2161 = vadd.f32 %v2049, %v2160
    %2162 = vmatprep.mubr.f32.mxu0 0.0
    %2163 = vmatmul.mubr.f32.gmra.mrb[0].mxu0 %v2039
    %v2164 = vpop.f32.mrb[0].mxu0
    %v2165 = vadd.f32 %v2045, %v2164
    %v2166 = vpop.f32.mrb[0].mxu0
    %v2167 = vadd.f32 %v2049, %v2166
    %2168 = vmatprep.mubr.f32.mxu0 0.0
    %2169 = vmatmul.mubr.f32.gmra.mrb[0].mxu0 %v2040
    %v2170 = vpop.f32.mrb[0].mxu0
    %v2171 = vadd.f32 %v2045, %v2170
    %v2172 = vpop.f32.mrb[0].mxu0
    %v2173 = vadd.f32 %v2049, %v2172
    %2174 = vdwg.mxu0
    %2175 = vmatprep.subr.mxu0 %v1907
    %2176 = vmatpush1.msra.mxu0 %v1906
    %2177 = vmatprep.subr.mxu0 %v1911
    %2178 = vmatpush1.msra.mxu0 %v1910
    %2179 = vmatprep.subr.mxu0 %v1915
    %2180 = vmatpush1.msra.mxu0 %v1914
    %2181 = vmatprep.subr.mxu0 %v1919
    %2182 = vmatpush1.msra.mxu0 %v1918
    %2183 = vmatprep.subr.mxu0 %v1923
    %2184 = vmatpush1.msra.mxu0 %v1922
    %2185 = vmatprep.subr.mxu0 %v1927
    %2186 = vmatpush1.msra.mxu0 %v1926
    %2187 = vmatprep.subr.mxu0 %v1931
    %2188 = vmatpush1.msra.mxu0 %v1930
    %2189 = vmatprep.subr.mxu0 %v1935
    %2190 = vmatpush1.msra.mxu0 %v1934
    %2191 = vmatprep.subr.mxu0 %v1939
    %2192 = vmatpush1.msra.mxu0 %v1938
    %2193 = vmatprep.subr.mxu0 %v1943
    %2194 = vmatpush1.msra.mxu0 %v1942
    %2195 = vmatprep.subr.mxu0 %v1947
    %2196 = vmatpush1.msra.mxu0 %v1946
    %2197 = vmatprep.subr.mxu0 %v1951
    %2198 = vmatpush1.msra.mxu0 %v1950
    %2199 = vmatprep.subr.mxu0 %v1955
    %2200 = vmatpush1.msra.mxu0 %v1954
    %2201 = vmatprep.subr.mxu0 %v1959
    %2202 = vmatpush1.msra.mxu0 %v1958
    %2203 = vmatprep.subr.mxu0 %v1963
    %2204 = vmatpush1.msra.mxu0 %v1962
    %2205 = vmatprep.subr.mxu0 %v1967
    %2206 = vmatpush1.msra.mxu0 %v1966
    %2207 = vmatprep.subr.mxu0 0.0
    %2208 = vmatpush1.msra.mxu0 0.0
    %2209 = vmatprep.subr.mxu0 0.0
    %2210 = vmatpush1.msra.mxu0 0.0
    %2211 = vmatprep.subr.mxu0 0.0
    %2212 = vmatpush1.msra.mxu0 0.0
    %2213 = vmatprep.subr.mxu0 0.0
    %2214 = vmatpush1.msra.mxu0 0.0
    %2215 = vmatprep.subr.mxu0 0.0
    %2216 = vmatpush1.msra.mxu0 0.0
    %2217 = vmatprep.subr.mxu0 0.0
    %2218 = vmatpush1.msra.mxu0 0.0
    %2219 = vmatprep.subr.mxu0 0.0
    %2220 = vmatpush1.msra.mxu0 0.0
    %2221 = vmatprep.subr.mxu0 0.0
    %2222 = vmatpush1.msra.mxu0 0.0
    %2223 = vmatprep.subr.mxu0 0.0
    %2224 = vmatpush1.msra.mxu0 0.0
    %2225 = vmatprep.subr.mxu0 0.0
    %2226 = vmatpush1.msra.mxu0 0.0
    %2227 = vmatprep.subr.mxu0 0.0
    %2228 = vmatpush1.msra.mxu0 0.0
    %2229 = vmatprep.subr.mxu0 0.0
    %2230 = vmatpush1.msra.mxu0 0.0
    %2231 = vmatprep.subr.mxu0 0.0
    %2232 = vmatpush1.msra.mxu0 0.0
    %2233 = vmatprep.subr.mxu0 0.0
    %2234 = vmatpush1.msra.mxu0 0.0
    %2235 = vmatprep.subr.mxu0 0.0
    %2236 = vmatpush1.msra.mxu0 0.0
    %2237 = vmatprep.subr.mxu0 0.0
    %2238 = vmatpush1.msra.mxu0 0.0
    %2239 = vmatprep.mubr.f32.mxu0 0.0
    %2240 = vmatmul.mubr.f32.gmra.mrb[0].mxu0 %v2033
    %v2241 = vpop.f32.mrb[0].mxu0
    %v2242 = vadd.f32 %v2053, %v2241
    %v2243 = vpop.f32.mrb[0].mxu0
    %v2244 = vadd.f32 %v2057, %v2243
    %2245 = vmatprep.mubr.f32.mxu0 0.0
    %2246 = vmatmul.mubr.f32.gmra.mrb[0].mxu0 %v2034
    %v2247 = vpop.f32.mrb[0].mxu0
    %v2248 = vadd.f32 %v2053, %v2247
    %v2249 = vpop.f32.mrb[0].mxu0
    %v2250 = vadd.f32 %v2057, %v2249
    %2251 = vmatprep.mubr.f32.mxu0 0.0
    %2252 = vmatmul.mubr.f32.gmra.mrb[0].mxu0 %v2035
    %v2253 = vpop.f32.mrb[0].mxu0
    %v2254 = vadd.f32 %v2053, %v2253
    %v2255 = vpop.f32.mrb[0].mxu0
    %v2256 = vadd.f32 %v2057, %v2255
    %2257 = vmatprep.mubr.f32.mxu0 0.0
    %2258 = vmatmul.mubr.f32.gmra.mrb[0].mxu0 %v2036
    %v2259 = vpop.f32.mrb[0].mxu0
    %v2260 = vadd.f32 %v2053, %v2259
    %v2261 = vpop.f32.mrb[0].mxu0
    %v2262 = vadd.f32 %v2057, %v2261
    %2263 = vmatprep.mubr.f32.mxu0 0.0
    %2264 = vmatmul.mubr.f32.gmra.mrb[0].mxu0 %v2037
    %v2265 = vpop.f32.mrb[0].mxu0
    %v2266 = vadd.f32 %v2053, %v2265
    %v2267 = vpop.f32.mrb[0].mxu0
    %v2268 = vadd.f32 %v2057, %v2267
    %2269 = vmatprep.mubr.f32.mxu0 0.0
    %2270 = vmatmul.mubr.f32.gmra.mrb[0].mxu0 %v2038
    %v2271 = vpop.f32.mrb[0].mxu0
    %v2272 = vadd.f32 %v2053, %v2271
    %v2273 = vpop.f32.mrb[0].mxu0
    %v2274 = vadd.f32 %v2057, %v2273
    %2275 = vmatprep.mubr.f32.mxu0 0.0
    %2276 = vmatmul.mubr.f32.gmra.mrb[0].mxu0 %v2039
    %v2277 = vpop.f32.mrb[0].mxu0
    %v2278 = vadd.f32 %v2053, %v2277
    %v2279 = vpop.f32.mrb[0].mxu0
    %v2280 = vadd.f32 %v2057, %v2279
    %2281 = vmatprep.mubr.f32.mxu0 0.0
    %2282 = vmatmul.mubr.f32.gmra.mrb[0].mxu0 %v2040
    %v2283 = vpop.f32.mrb[0].mxu0
    %v2284 = vadd.f32 %v2053, %v2283
    %v2285 = vpop.f32.mrb[0].mxu0
    %v2286 = vadd.f32 %v2057, %v2285
    %2287 = vdwg.mxu0
    %2288 = vst [vmem:[#allocation2] sm:$0xff] %v2129
    %2289 = vst [vmem:[#allocation2 + $0x8] sm:$0xff] %v2131
    %2290 = vst [vmem:[#allocation2 + $0x10] sm:$0xff] %v2242
    %2291 = vst [vmem:[#allocation2 + $0x18] sm:$0xff] %v2244
    %2292 = vst [vmem:[#allocation2 + $0x20] sm:$0xff] %v2135
    %2293 = vst [vmem:[#allocation2 + $0x28] sm:$0xff] %v2137
    %2294 = vst [vmem:[#allocation2 + $0x30] sm:$0xff] %v2248
    %2295 = vst [vmem:[#allocation2 + $0x38] sm:$0xff] %v2250
    %2296 = vst [vmem:[#allocation2 + $0x40] sm:$0xff] %v2141
    %2297 = vst [vmem:[#allocation2 + $0x48] sm:$0xff] %v2143
    %2298 = vst [vmem:[#allocation2 + $0x50] sm:$0xff] %v2254
    %2299 = vst [vmem:[#allocation2 + $0x58] sm:$0xff] %v2256
    %2300 = vst [vmem:[#allocation2 + $0x60] sm:$0xff] %v2147
    %2301 = vst [vmem:[#allocation2 + $0x68] sm:$0xff] %v2149
    %2302 = vst [vmem:[#allocation2 + $0x70] sm:$0xff] %v2260
    %2303 = vst [vmem:[#allocation2 + $0x78] sm:$0xff] %v2262
    %2304 = vst [vmem:[#allocation2 + $0x80] sm:$0xff] %v2153
    %2305 = vst [vmem:[#allocation2 + $0x88] sm:$0xff] %v2155
    %2306 = vst [vmem:[#allocation2 + $0x90] sm:$0xff] %v2266
    %2307 = vst [vmem:[#allocation2 + $0x98] sm:$0xff] %v2268
    %2308 = vst [vmem:[#allocation2 + $0xa0] sm:$0xff] %v2159
    %2309 = vst [vmem:[#allocation2 + $0xa8] sm:$0xff] %v2161
    %2310 = vst [vmem:[#allocation2 + $0xb0] sm:$0xff] %v2272
    %2311 = vst [vmem:[#allocation2 + $0xb8] sm:$0xff] %v2274
    %2312 = vst [vmem:[#allocation2 + $0xc0] sm:$0xff] %v2165
    %2313 = vst [vmem:[#allocation2 + $0xc8] sm:$0xff] %v2167
    %2314 = vst [vmem:[#allocation2 + $0xd0] sm:$0xff] %v2278
    %2315 = vst [vmem:[#allocation2 + $0xd8] sm:$0xff] %v2280
    %2316 = vst [vmem:[#allocation2 + $0xe0] sm:$0xff] %v2171
    %2317 = vst [vmem:[#allocation2 + $0xe8] sm:$0xff] %v2173
    %2318 = vst [vmem:[#allocation2 + $0xf0] sm:$0xff] %v2284
    %2319 = vst [vmem:[#allocation2 + $0xf8] sm:$0xff] %v2286
    %v2320 = vld [vmem:[%s475] sm:$0xff]
    %v2321 = vld [vmem:[%s475 + $0x8] sm:$0xff]
    %v2322 = vld [vmem:[%s475 + $0x10] sm:$0xff]
    %v2323 = vld [vmem:[%s475 + $0x18] sm:$0xff]
    %2324 = vmatprep.subr.mxu0 %v1969
    %2325 = vmatpush1.msra.mxu0 %v1968
    %2326 = vmatprep.subr.mxu0 %v1973
    %2327 = vmatpush1.msra.mxu0 %v1972
    %2328 = vmatprep.subr.mxu0 %v1977
    %2329 = vmatpush1.msra.mxu0 %v1976
    %2330 = vmatprep.subr.mxu0 %v1981
    %2331 = vmatpush1.msra.mxu0 %v1980
    %2332 = vmatprep.subr.mxu0 %v1985
    %2333 = vmatpush1.msra.mxu0 %v1984
    %2334 = vmatprep.subr.mxu0 %v1989
    %2335 = vmatpush1.msra.mxu0 %v1988
    %2336 = vmatprep.subr.mxu0 %v1993
    %2337 = vmatpush1.msra.mxu0 %v1992
    %2338 = vmatprep.subr.mxu0 %v1997
    %2339 = vmatpush1.msra.mxu0 %v1996
    %2340 = vmatprep.subr.mxu0 %v2001
    %2341 = vmatpush1.msra.mxu0 %v2000
    %2342 = vmatprep.subr.mxu0 %v2005
    %2343 = vmatpush1.msra.mxu0 %v2004
    %2344 = vmatprep.subr.mxu0 %v2009
    %2345 = vmatpush1.msra.mxu0 %v2008
    %2346 = vmatprep.subr.mxu0 %v2013
    %2347 = vmatpush1.msra.mxu0 %v2012
    %2348 = vmatprep.subr.mxu0 %v2017
    %2349 = vmatpush1.msra.mxu0 %v2016
    %2350 = vmatprep.subr.mxu0 %v2021
    %2351 = vmatpush1.msra.mxu0 %v2020
    %2352 = vmatprep.subr.mxu0 %v2025
    %2353 = vmatpush1.msra.mxu0 %v2024
    %2354 = vmatprep.subr.mxu0 %v2029
    %2355 = vmatpush1.msra.mxu0 %v2028
    %2356 = vmatprep.subr.mxu0 0.0
    %2357 = vmatpush1.msra.mxu0 0.0
    %2358 = vmatprep.subr.mxu0 0.0
    %2359 = vmatpush1.msra.mxu0 0.0
    %2360 = vmatprep.subr.mxu0 0.0
    %2361 = vmatpush1.msra.mxu0 0.0
    %2362 = vmatprep.subr.mxu0 0.0
    %2363 = vmatpush1.msra.mxu0 0.0
    %2364 = vmatprep.subr.mxu0 0.0
    %2365 = vmatpush1.msra.mxu0 0.0
    %2366 = vmatprep.subr.mxu0 0.0
    %2367 = vmatpush1.msra.mxu0 0.0
    %2368 = vmatprep.subr.mxu0 0.0
    %2369 = vmatpush1.msra.mxu0 0.0
    %2370 = vmatprep.subr.mxu0 0.0
    %2371 = vmatpush1.msra.mxu0 0.0
    %2372 = vmatprep.subr.mxu0 0.0
    %2373 = vmatpush1.msra.mxu0 0.0
    %2374 = vmatprep.subr.mxu0 0.0
    %2375 = vmatpush1.msra.mxu0 0.0
    %2376 = vmatprep.subr.mxu0 0.0
    %2377 = vmatpush1.msra.mxu0 0.0
    %2378 = vmatprep.subr.mxu0 0.0
    %2379 = vmatpush1.msra.mxu0 0.0
    %2380 = vmatprep.subr.mxu0 0.0
    %2381 = vmatpush1.msra.mxu0 0.0
    %2382 = vmatprep.subr.mxu0 0.0
    %2383 = vmatpush1.msra.mxu0 0.0
    %2384 = vmatprep.subr.mxu0 0.0
    %2385 = vmatpush1.msra.mxu0 0.0
    %2386 = vmatprep.subr.mxu0 0.0
    %2387 = vmatpush1.msra.mxu0 0.0
    %2388 = vmatprep.mubr.f32.mxu0 0.0
    %2389 = vmatmul.mubr.f32.gmra.mrb[0].mxu0 0.0
    %v2390 = vpop.f32.mrb[0].mxu0
    %v2391 = vadd.f32 0.0, %v2390
    %v2392 = vpop.f32.mrb[0].mxu0
    %v2393 = vadd.f32 0.0, %v2392
    %2394 = vdwg.mxu0
    %2395 = vmatprep.subr.mxu0 %v1971
    %2396 = vmatpush1.msra.mxu0 %v1970
    %2397 = vmatprep.subr.mxu0 %v1975
    %2398 = vmatpush1.msra.mxu0 %v1974
    %2399 = vmatprep.subr.mxu0 %v1979
    %2400 = vmatpush1.msra.mxu0 %v1978
    %2401 = vmatprep.subr.mxu0 %v1983
    %2402 = vmatpush1.msra.mxu0 %v1982
    %2403 = vmatprep.subr.mxu0 %v1987
    %2404 = vmatpush1.msra.mxu0 %v1986
    %2405 = vmatprep.subr.mxu0 %v1991
    %2406 = vmatpush1.msra.mxu0 %v1990
    %2407 = vmatprep.subr.mxu0 %v1995
    %2408 = vmatpush1.msra.mxu0 %v1994
    %2409 = vmatprep.subr.mxu0 %v1999
    %2410 = vmatpush1.msra.mxu0 %v1998
    %2411 = vmatprep.subr.mxu0 %v2003
    %2412 = vmatpush1.msra.mxu0 %v2002
    %2413 = vmatprep.subr.mxu0 %v2007
    %2414 = vmatpush1.msra.mxu0 %v2006
    %2415 = vmatprep.subr.mxu0 %v2011
    %2416 = vmatpush1.msra.mxu0 %v2010
    %2417 = vmatprep.subr.mxu0 %v2015
    %2418 = vmatpush1.msra.mxu0 %v2014
    %2419 = vmatprep.subr.mxu0 %v2019
    %2420 = vmatpush1.msra.mxu0 %v2018
    %2421 = vmatprep.subr.mxu0 %v2023
    %2422 = vmatpush1.msra.mxu0 %v2022
    %2423 = vmatprep.subr.mxu0 %v2027
    %2424 = vmatpush1.msra.mxu0 %v2026
    %2425 = vmatprep.subr.mxu0 %v2031
    %2426 = vmatpush1.msra.mxu0 %v2030
    %2427 = vmatprep.subr.mxu0 0.0
    %2428 = vmatpush1.msra.mxu0 0.0
    %2429 = vmatprep.subr.mxu0 0.0
    %2430 = vmatpush1.msra.mxu0 0.0
    %2431 = vmatprep.subr.mxu0 0.0
    %2432 = vmatpush1.msra.mxu0 0.0
    %2433 = vmatprep.subr.mxu0 0.0
    %2434 = vmatpush1.msra.mxu0 0.0
    %2435 = vmatprep.subr.mxu0 0.0
    %2436 = vmatpush1.msra.mxu0 0.0
    %2437 = vmatprep.subr.mxu0 0.0
    %2438 = vmatpush1.msra.mxu0 0.0
    %2439 = vmatprep.subr.mxu0 0.0
    %2440 = vmatpush1.msra.mxu0 0.0
    %2441 = vmatprep.subr.mxu0 0.0
    %2442 = vmatpush1.msra.mxu0 0.0
    %2443 = vmatprep.subr.mxu0 0.0
    %2444 = vmatpush1.msra.mxu0 0.0
    %2445 = vmatprep.subr.mxu0 0.0
    %2446 = vmatpush1.msra.mxu0 0.0
    %2447 = vmatprep.subr.mxu0 0.0
    %2448 = vmatpush1.msra.mxu0 0.0
    %2449 = vmatprep.subr.mxu0 0.0
    %2450 = vmatpush1.msra.mxu0 0.0
    %2451 = vmatprep.subr.mxu0 0.0
    %2452 = vmatpush1.msra.mxu0 0.0
    %2453 = vmatprep.subr.mxu0 0.0
    %2454 = vmatpush1.msra.mxu0 0.0
    %2455 = vmatprep.subr.mxu0 0.0
    %2456 = vmatpush1.msra.mxu0 0.0
    %2457 = vmatprep.subr.mxu0 0.0
    %2458 = vmatpush1.msra.mxu0 0.0
    %2459 = vmatprep.mubr.f32.mxu0 0.0
    %2460 = vmatmul.mubr.f32.gmra.mrb[0].mxu0 0.0
    %v2461 = vpop.f32.mrb[0].mxu0
    %v2462 = vadd.f32 0.0, %v2461
    %v2463 = vpop.f32.mrb[0].mxu0
    %v2464 = vadd.f32 0.0, %v2463
    %2465 = vdwg.mxu0
    %v2466 = vadd.f32 %v2320, %v2391
    %v2467 = vadd.f32 %v2321, %v2393
    %v2468 = vadd.f32 %v2322, %v2462
    %v2469 = vadd.f32 %v2323, %v2464
    %v2470 = vxor.u32 %v2466, 2147483648
    %v2471 = vmul.f32 %v2470, 1.442695
    %v2472 = vpow.pop %v2471
    %v2473 = vadd.f32 %v2472, 1.0
    %v2474 = vrcp.pop %v2473
    %v2475 = vmul.f32 1.0, %v2474
    %v2476 = vxor.u32 %v2467, 2147483648
    %v2477 = vmul.f32 %v2476, 1.442695
    %v2478 = vpow.pop %v2477
    %v2479 = vadd.f32 %v2478, 1.0
    %v2480 = vrcp.pop %v2479
    %v2481 = vmul.f32 1.0, %v2480
    %v2482 = vtanh.pop %v2468
    %v2483 = vxor.u32 %v2469, 2147483648
    %v2484 = vmul.f32 %v2483, 1.442695
    %v2485 = vpow.pop %v2484
    %v2486 = vadd.f32 %v2485, 1.0
    %v2487 = vrcp.pop %v2486
    %v2488 = vmul.f32 1.0, %v2487
    %v2489 = vmul.f32 %v2481, 0.0
    %v2490 = vmul.f32 %v2475, %v2482
    %v2491 = vadd.f32 %v2489, %v2490
    %v2492 = vtanh.pop %v2491
    %v2493 = vmul.f32 %v2488, %v2492
    %v2494 = vld [vmem:[%s653] sm:$0xff]
    %v2495 = vld [vmem:[%s653 + $0x8] sm:$0xff]
    %v2496 = vld [vmem:[%s653 + $0x10] sm:$0xff]
    %v2497 = vld [vmem:[%s653 + $0x18] sm:$0xff]
    %2498 = vmatprep.subr.mxu0 %v1969
    %2499 = vmatpush1.msra.mxu0 %v1968
    %2500 = vmatprep.subr.mxu0 %v1973
    %2501 = vmatpush1.msra.mxu0 %v1972
    %2502 = vmatprep.subr.mxu0 %v1977
    %2503 = vmatpush1.msra.mxu0 %v1976
    %2504 = vmatprep.subr.mxu0 %v1981
    %2505 = vmatpush1.msra.mxu0 %v1980
    %2506 = vmatprep.subr.mxu0 %v1985
    %2507 = vmatpush1.msra.mxu0 %v1984
    %2508 = vmatprep.subr.mxu0 %v1989
    %2509 = vmatpush1.msra.mxu0 %v1988
    %2510 = vmatprep.subr.mxu0 %v1993
    %2511 = vmatpush1.msra.mxu0 %v1992
    %2512 = vmatprep.subr.mxu0 %v1997
    %2513 = vmatpush1.msra.mxu0 %v1996
    %2514 = vmatprep.subr.mxu0 %v2001
    %2515 = vmatpush1.msra.mxu0 %v2000
    %2516 = vmatprep.subr.mxu0 %v2005
    %2517 = vmatpush1.msra.mxu0 %v2004
    %2518 = vmatprep.subr.mxu0 %v2009
    %2519 = vmatpush1.msra.mxu0 %v2008
    %2520 = vmatprep.subr.mxu0 %v2013
    %2521 = vmatpush1.msra.mxu0 %v2012
    %2522 = vmatprep.subr.mxu0 %v2017
    %2523 = vmatpush1.msra.mxu0 %v2016
    %2524 = vmatprep.subr.mxu0 %v2021
    %2525 = vmatpush1.msra.mxu0 %v2020
    %2526 = vmatprep.subr.mxu0 %v2025
    %2527 = vmatpush1.msra.mxu0 %v2024
    %2528 = vmatprep.subr.mxu0 %v2029
    %2529 = vmatpush1.msra.mxu0 %v2028
    %2530 = vmatprep.subr.mxu0 0.0
    %2531 = vmatpush1.msra.mxu0 0.0
    %2532 = vmatprep.subr.mxu0 0.0
    %2533 = vmatpush1.msra.mxu0 0.0
    %2534 = vmatprep.subr.mxu0 0.0
    %2535 = vmatpush1.msra.mxu0 0.0
    %2536 = vmatprep.subr.mxu0 0.0
    %2537 = vmatpush1.msra.mxu0 0.0
    %2538 = vmatprep.subr.mxu0 0.0
    %2539 = vmatpush1.msra.mxu0 0.0
    %2540 = vmatprep.subr.mxu0 0.0
    %2541 = vmatpush1.msra.mxu0 0.0
    %2542 = vmatprep.subr.mxu0 0.0
    %2543 = vmatpush1.msra.mxu0 0.0
    %2544 = vmatprep.subr.mxu0 0.0
    %2545 = vmatpush1.msra.mxu0 0.0
    %2546 = vmatprep.subr.mxu0 0.0
    %2547 = vmatpush1.msra.mxu0 0.0
    %2548 = vmatprep.subr.mxu0 0.0
    %2549 = vmatpush1.msra.mxu0 0.0
    %2550 = vmatprep.subr.mxu0 0.0
    %2551 = vmatpush1.msra.mxu0 0.0
    %2552 = vmatprep.subr.mxu0 0.0
    %2553 = vmatpush1.msra.mxu0 0.0
    %2554 = vmatprep.subr.mxu0 0.0
    %2555 = vmatpush1.msra.mxu0 0.0
    %2556 = vmatprep.subr.mxu0 0.0
    %2557 = vmatpush1.msra.mxu0 0.0
    %2558 = vmatprep.subr.mxu0 0.0
    %2559 = vmatpush1.msra.mxu0 0.0
    %2560 = vmatprep.subr.mxu0 0.0
    %2561 = vmatpush1.msra.mxu0 0.0
    %2562 = vmatprep.mubr.f32.mxu0 0.0
    %2563 = vmatmul.mubr.f32.gmra.mrb[0].mxu0 %v2493
    %v2564 = vpop.f32.mrb[0].mxu0
    %v2565 = vadd.f32 0.0, %v2564
    %v2566 = vpop.f32.mrb[0].mxu0
    %v2567 = vadd.f32 0.0, %v2566
    %2568 = vdwg.mxu0
    %2569 = vmatprep.subr.mxu0 %v1971
    %2570 = vmatpush1.msra.mxu0 %v1970
    %2571 = vmatprep.subr.mxu0 %v1975
    %2572 = vmatpush1.msra.mxu0 %v1974
    %2573 = vmatprep.subr.mxu0 %v1979
    %2574 = vmatpush1.msra.mxu0 %v1978
    %2575 = vmatprep.subr.mxu0 %v1983
    %2576 = vmatpush1.msra.mxu0 %v1982
    %2577 = vmatprep.subr.mxu0 %v1987
    %2578 = vmatpush1.msra.mxu0 %v1986
    %2579 = vmatprep.subr.mxu0 %v1991
    %2580 = vmatpush1.msra.mxu0 %v1990
    %2581 = vmatprep.subr.mxu0 %v1995
    %2582 = vmatpush1.msra.mxu0 %v1994
    %2583 = vmatprep.subr.mxu0 %v1999
    %2584 = vmatpush1.msra.mxu0 %v1998
    %2585 = vmatprep.subr.mxu0 %v2003
    %2586 = vmatpush1.msra.mxu0 %v2002
    %2587 = vmatprep.subr.mxu0 %v2007
    %2588 = vmatpush1.msra.mxu0 %v2006
    %2589 = vmatprep.subr.mxu0 %v2011
    %2590 = vmatpush1.msra.mxu0 %v2010
    %2591 = vmatprep.subr.mxu0 %v2015
    %2592 = vmatpush1.msra.mxu0 %v2014
    %2593 = vmatprep.subr.mxu0 %v2019
    %2594 = vmatpush1.msra.mxu0 %v2018
    %2595 = vmatprep.subr.mxu0 %v2023
    %2596 = vmatpush1.msra.mxu0 %v2022
    %2597 = vmatprep.subr.mxu0 %v2027
    %2598 = vmatpush1.msra.mxu0 %v2026
    %2599 = vmatprep.subr.mxu0 %v2031
    %2600 = vmatpush1.msra.mxu0 %v2030
    %2601 = vmatprep.subr.mxu0 0.0
    %2602 = vmatpush1.msra.mxu0 0.0
    %2603 = vmatprep.subr.mxu0 0.0
    %2604 = vmatpush1.msra.mxu0 0.0
    %2605 = vmatprep.subr.mxu0 0.0
    %2606 = vmatpush1.msra.mxu0 0.0
    %2607 = vmatprep.subr.mxu0 0.0
    %2608 = vmatpush1.msra.mxu0 0.0
    %2609 = vmatprep.subr.mxu0 0.0
    %2610 = vmatpush1.msra.mxu0 0.0
    %2611 = vmatprep.subr.mxu0 0.0
    %2612 = vmatpush1.msra.mxu0 0.0
    %2613 = vmatprep.subr.mxu0 0.0
    %2614 = vmatpush1.msra.mxu0 0.0
    %2615 = vmatprep.subr.mxu0 0.0
    %2616 = vmatpush1.msra.mxu0 0.0
    %2617 = vmatprep.subr.mxu0 0.0
    %2618 = vmatpush1.msra.mxu0 0.0
    %2619 = vmatprep.subr.mxu0 0.0
    %2620 = vmatpush1.msra.mxu0 0.0
    %2621 = vmatprep.subr.mxu0 0.0
    %2622 = vmatpush1.msra.mxu0 0.0
    %2623 = vmatprep.subr.mxu0 0.0
    %2624 = vmatpush1.msra.mxu0 0.0
    %2625 = vmatprep.subr.mxu0 0.0
    %2626 = vmatpush1.msra.mxu0 0.0
    %2627 = vmatprep.subr.mxu0 0.0
    %2628 = vmatpush1.msra.mxu0 0.0
    %2629 = vmatprep.subr.mxu0 0.0
    %2630 = vmatpush1.msra.mxu0 0.0
    %2631 = vmatprep.subr.mxu0 0.0
    %2632 = vmatpush1.msra.mxu0 0.0
    %2633 = vmatprep.mubr.f32.mxu0 0.0
    %2634 = vmatmul.mubr.f32.gmra.mrb[0].mxu0 %v2493
    %v2635 = vpop.f32.mrb[0].mxu0
    %v2636 = vadd.f32 0.0, %v2635
    %v2637 = vpop.f32.mrb[0].mxu0
    %v2638 = vadd.f32 0.0, %v2637
    %2639 = vdwg.mxu0
    %v2640 = vadd.f32 %v2494, %v2565
    %v2641 = vadd.f32 %v2495, %v2567
    %v2642 = vadd.f32 %v2496, %v2636
    %v2643 = vadd.f32 %v2497, %v2638
    %v2644 = vxor.u32 %v2640, 2147483648
    %v2645 = vmul.f32 %v2644, 1.442695
    %v2646 = vpow.pop %v2645
    %v2647 = vadd.f32 %v2646, 1.0
    %v2648 = vrcp.pop %v2647
    %v2649 = vmul.f32 1.0, %v2648
    %v2650 = vxor.u32 %v2641, 2147483648
    %v2651 = vmul.f32 %v2650, 1.442695
    %v2652 = vpow.pop %v2651
    %v2653 = vadd.f32 %v2652, 1.0
    %v2654 = vrcp.pop %v2653
    %v2655 = vmul.f32 1.0, %v2654
    %v2656 = vtanh.pop %v2642
    %v2657 = vxor.u32 %v2643, 2147483648
    %v2658 = vmul.f32 %v2657, 1.442695
    %v2659 = vpow.pop %v2658
    %v2660 = vadd.f32 %v2659, 1.0
    %v2661 = vrcp.pop %v2660
    %v2662 = vmul.f32 1.0, %v2661
    %v2663 = vmul.f32 %v2655, %v2491
    %v2664 = vmul.f32 %v2649, %v2656
    %v2665 = vadd.f32 %v2663, %v2664
    %v2666 = vtanh.pop %v2665
    %v2667 = vmul.f32 %v2662, %v2666
    %v2668 = vld [vmem:[%s832] sm:$0xff]
    %v2669 = vld [vmem:[%s832 + $0x8] sm:$0xff]
    %v2670 = vld [vmem:[%s832 + $0x10] sm:$0xff]
    %v2671 = vld [vmem:[%s832 + $0x18] sm:$0xff]
    %2672 = vmatprep.subr.mxu0 %v1969
    %2673 = vmatpush1.msra.mxu0 %v1968
    %2674 = vmatprep.subr.mxu0 %v1973
    %2675 = vmatpush1.msra.mxu0 %v1972
    %2676 = vmatprep.subr.mxu0 %v1977
    %2677 = vmatpush1.msra.mxu0 %v1976
    %2678 = vmatprep.subr.mxu0 %v1981
    %2679 = vmatpush1.msra.mxu0 %v1980
    %2680 = vmatprep.subr.mxu0 %v1985
    %2681 = vmatpush1.msra.mxu0 %v1984
    %2682 = vmatprep.subr.mxu0 %v1989
    %2683 = vmatpush1.msra.mxu0 %v1988
    %2684 = vmatprep.subr.mxu0 %v1993
    %2685 = vmatpush1.msra.mxu0 %v1992
    %2686 = vmatprep.subr.mxu0 %v1997
    %2687 = vmatpush1.msra.mxu0 %v1996
    %2688 = vmatprep.subr.mxu0 %v2001
    %2689 = vmatpush1.msra.mxu0 %v2000
    %2690 = vmatprep.subr.mxu0 %v2005
    %2691 = vmatpush1.msra.mxu0 %v2004
    %2692 = vmatprep.subr.mxu0 %v2009
    %2693 = vmatpush1.msra.mxu0 %v2008
    %2694 = vmatprep.subr.mxu0 %v2013
    %2695 = vmatpush1.msra.mxu0 %v2012
    %2696 = vmatprep.subr.mxu0 %v2017
    %2697 = vmatpush1.msra.mxu0 %v2016
    %2698 = vmatprep.subr.mxu0 %v2021
    %2699 = vmatpush1.msra.mxu0 %v2020
    %2700 = vmatprep.subr.mxu0 %v2025
    %2701 = vmatpush1.msra.mxu0 %v2024
    %2702 = vmatprep.subr.mxu0 %v2029
    %2703 = vmatpush1.msra.mxu0 %v2028
    %2704 = vmatprep.subr.mxu0 0.0
    %2705 = vmatpush1.msra.mxu0 0.0
    %2706 = vmatprep.subr.mxu0 0.0
    %2707 = vmatpush1.msra.mxu0 0.0
    %2708 = vmatprep.subr.mxu0 0.0
    %2709 = vmatpush1.msra.mxu0 0.0
    %2710 = vmatprep.subr.mxu0 0.0
    %2711 = vmatpush1.msra.mxu0 0.0
    %2712 = vmatprep.subr.mxu0 0.0
    %2713 = vmatpush1.msra.mxu0 0.0
    %2714 = vmatprep.subr.mxu0 0.0
    %2715 = vmatpush1.msra.mxu0 0.0
    %2716 = vmatprep.subr.mxu0 0.0
    %2717 = vmatpush1.msra.mxu0 0.0
    %2718 = vmatprep.subr.mxu0 0.0
    %2719 = vmatpush1.msra.mxu0 0.0
    %2720 = vmatprep.subr.mxu0 0.0
    %2721 = vmatpush1.msra.mxu0 0.0
    %2722 = vmatprep.subr.mxu0 0.0
    %2723 = vmatpush1.msra.mxu0 0.0
    %2724 = vmatprep.subr.mxu0 0.0
    %2725 = vmatpush1.msra.mxu0 0.0
    %2726 = vmatprep.subr.mxu0 0.0
    %2727 = vmatpush1.msra.mxu0 0.0
    %2728 = vmatprep.subr.mxu0 0.0
    %2729 = vmatpush1.msra.mxu0 0.0
    %2730 = vmatprep.subr.mxu0 0.0
    %2731 = vmatpush1.msra.mxu0 0.0
    %2732 = vmatprep.subr.mxu0 0.0
    %2733 = vmatpush1.msra.mxu0 0.0
    %2734 = vmatprep.subr.mxu0 0.0
    %2735 = vmatpush1.msra.mxu0 0.0
    %2736 = vmatprep.mubr.f32.mxu0 0.0
    %2737 = vmatmul.mubr.f32.gmra.mrb[0].mxu0 %v2667
    %v2738 = vpop.f32.mrb[0].mxu0
    %v2739 = vadd.f32 0.0, %v2738
    %v2740 = vpop.f32.mrb[0].mxu0
    %v2741 = vadd.f32 0.0, %v2740
    %2742 = vdwg.mxu0
    %2743 = vmatprep.subr.mxu0 %v1971
    %2744 = vmatpush1.msra.mxu0 %v1970
    %2745 = vmatprep.subr.mxu0 %v1975
    %2746 = vmatpush1.msra.mxu0 %v1974
    %2747 = vmatprep.subr.mxu0 %v1979
    %2748 = vmatpush1.msra.mxu0 %v1978
    %2749 = vmatprep.subr.mxu0 %v1983
    %2750 = vmatpush1.msra.mxu0 %v1982
    %2751 = vmatprep.subr.mxu0 %v1987
    %2752 = vmatpush1.msra.mxu0 %v1986
    %2753 = vmatprep.subr.mxu0 %v1991
    %2754 = vmatpush1.msra.mxu0 %v1990
    %2755 = vmatprep.subr.mxu0 %v1995
    %2756 = vmatpush1.msra.mxu0 %v1994
    %2757 = vmatprep.subr.mxu0 %v1999
    %2758 = vmatpush1.msra.mxu0 %v1998
    %2759 = vmatprep.subr.mxu0 %v2003
    %2760 = vmatpush1.msra.mxu0 %v2002
    %2761 = vmatprep.subr.mxu0 %v2007
    %2762 = vmatpush1.msra.mxu0 %v2006
    %2763 = vmatprep.subr.mxu0 %v2011
    %2764 = vmatpush1.msra.mxu0 %v2010
    %2765 = vmatprep.subr.mxu0 %v2015
    %2766 = vmatpush1.msra.mxu0 %v2014
    %2767 = vmatprep.subr.mxu0 %v2019
    %2768 = vmatpush1.msra.mxu0 %v2018
    %2769 = vmatprep.subr.mxu0 %v2023
    %2770 = vmatpush1.msra.mxu0 %v2022
    %2771 = vmatprep.subr.mxu0 %v2027
    %2772 = vmatpush1.msra.mxu0 %v2026
    %2773 = vmatprep.subr.mxu0 %v2031
    %2774 = vmatpush1.msra.mxu0 %v2030
    %2775 = vmatprep.subr.mxu0 0.0
    %2776 = vmatpush1.msra.mxu0 0.0
    %2777 = vmatprep.subr.mxu0 0.0
    %2778 = vmatpush1.msra.mxu0 0.0
    %2779 = vmatprep.subr.mxu0 0.0
    %2780 = vmatpush1.msra.mxu0 0.0
    %2781 = vmatprep.subr.mxu0 0.0
    %2782 = vmatpush1.msra.mxu0 0.0
    %2783 = vmatprep.subr.mxu0 0.0
    %2784 = vmatpush1.msra.mxu0 0.0
    %2785 = vmatprep.subr.mxu0 0.0
    %2786 = vmatpush1.msra.mxu0 0.0
    %2787 = vmatprep.subr.mxu0 0.0
    %2788 = vmatpush1.msra.mxu0 0.0
    %2789 = vmatprep.subr.mxu0 0.0
    %2790 = vmatpush1.msra.mxu0 0.0
    %2791 = vmatprep.subr.mxu0 0.0
    %2792 = vmatpush1.msra.mxu0 0.0
    %2793 = vmatprep.subr.mxu0 0.0
    %2794 = vmatpush1.msra.mxu0 0.0
    %2795 = vmatprep.subr.mxu0 0.0
    %2796 = vmatpush1.msra.mxu0 0.0
    %2797 = vmatprep.subr.mxu0 0.0
    %2798 = vmatpush1.msra.mxu0 0.0
    %2799 = vmatprep.subr.mxu0 0.0
    %2800 = vmatpush1.msra.mxu0 0.0
    %2801 = vmatprep.subr.mxu0 0.0
    %2802 = vmatpush1.msra.mxu0 0.0
    %2803 = vmatprep.subr.mxu0 0.0
    %2804 = vmatpush1.msra.mxu0 0.0
    %2805 = vmatprep.subr.mxu0 0.0
    %2806 = vmatpush1.msra.mxu0 0.0
    %2807 = vmatprep.mubr.f32.mxu0 0.0
    %2808 = vmatmul.mubr.f32.gmra.mrb[0].mxu0 %v2667
    %v2809 = vpop.f32.mrb[0].mxu0
    %v2810 = vadd.f32 0.0, %v2809
    %v2811 = vpop.f32.mrb[0].mxu0
    %v2812 = vadd.f32 0.0, %v2811
    %2813 = vdwg.mxu0
    %v2814 = vadd.f32 %v2668, %v2739
    %v2815 = vadd.f32 %v2669, %v2741
    %v2816 = vadd.f32 %v2670, %v2810
    %v2817 = vadd.f32 %v2671, %v2812
    %v2818 = vxor.u32 %v2814, 2147483648
    %v2819 = vmul.f32 %v2818, 1.442695
    %v2820 = vpow.pop %v2819
    %v2821 = vadd.f32 %v2820, 1.0
    %v2822 = vrcp.pop %v2821
    %v2823 = vmul.f32 1.0, %v2822
    %v2824 = vxor.u32 %v2815, 2147483648
    %v2825 = vmul.f32 %v2824, 1.442695
    %v2826 = vpow.pop %v2825
    %v2827 = vadd.f32 %v2826, 1.0
    %v2828 = vrcp.pop %v2827
    %v2829 = vmul.f32 1.0, %v2828
    %v2830 = vtanh.pop %v2816
    %v2831 = vxor.u32 %v2817, 2147483648
    %v2832 = vmul.f32 %v2831, 1.442695
    %v2833 = vpow.pop %v2832
    %v2834 = vadd.f32 %v2833, 1.0
    %v2835 = vrcp.pop %v2834
    %v2836 = vmul.f32 1.0, %v2835
    %v2837 = vmul.f32 %v2829, %v2665
    %v2838 = vmul.f32 %v2823, %v2830
    %v2839 = vadd.f32 %v2837, %v2838
    %v2840 = vtanh.pop %v2839
    %v2841 = vmul.f32 %v2836, %v2840
    %v2842 = vld [vmem:[%s1011] sm:$0xff]
    %v2843 = vld [vmem:[%s1011 + $0x8] sm:$0xff]
    %v2844 = vld [vmem:[%s1011 + $0x10] sm:$0xff]
    %v2845 = vld [vmem:[%s1011 + $0x18] sm:$0xff]
    %2846 = vmatprep.subr.mxu0 %v1969
    %2847 = vmatpush1.msra.mxu0 %v1968
    %2848 = vmatprep.subr.mxu0 %v1973
    %2849 = vmatpush1.msra.mxu0 %v1972
    %2850 = vmatprep.subr.mxu0 %v1977
    %2851 = vmatpush1.msra.mxu0 %v1976
    %2852 = vmatprep.subr.mxu0 %v1981
    %2853 = vmatpush1.msra.mxu0 %v1980
    %2854 = vmatprep.subr.mxu0 %v1985
    %2855 = vmatpush1.msra.mxu0 %v1984
    %2856 = vmatprep.subr.mxu0 %v1989
    %2857 = vmatpush1.msra.mxu0 %v1988
    %2858 = vmatprep.subr.mxu0 %v1993
    %2859 = vmatpush1.msra.mxu0 %v1992
    %2860 = vmatprep.subr.mxu0 %v1997
    %2861 = vmatpush1.msra.mxu0 %v1996
    %2862 = vmatprep.subr.mxu0 %v2001
    %2863 = vmatpush1.msra.mxu0 %v2000
    %2864 = vmatprep.subr.mxu0 %v2005
    %2865 = vmatpush1.msra.mxu0 %v2004
    %2866 = vmatprep.subr.mxu0 %v2009
    %2867 = vmatpush1.msra.mxu0 %v2008
    %2868 = vmatprep.subr.mxu0 %v2013
    %2869 = vmatpush1.msra.mxu0 %v2012
    %2870 = vmatprep.subr.mxu0 %v2017
    %2871 = vmatpush1.msra.mxu0 %v2016
    %2872 = vmatprep.subr.mxu0 %v2021
    %2873 = vmatpush1.msra.mxu0 %v2020
    %2874 = vmatprep.subr.mxu0 %v2025
    %2875 = vmatpush1.msra.mxu0 %v2024
    %2876 = vmatprep.subr.mxu0 %v2029
    %2877 = vmatpush1.msra.mxu0 %v2028
    %2878 = vmatprep.subr.mxu0 0.0
    %2879 = vmatpush1.msra.mxu0 0.0
    %2880 = vmatprep.subr.mxu0 0.0
    %2881 = vmatpush1.msra.mxu0 0.0
    %2882 = vmatprep.subr.mxu0 0.0
    %2883 = vmatpush1.msra.mxu0 0.0
    %2884 = vmatprep.subr.mxu0 0.0
    %2885 = vmatpush1.msra.mxu0 0.0
    %2886 = vmatprep.subr.mxu0 0.0
    %2887 = vmatpush1.msra.mxu0 0.0
    %2888 = vmatprep.subr.mxu0 0.0
    %2889 = vmatpush1.msra.mxu0 0.0
    %2890 = vmatprep.subr.mxu0 0.0
    %2891 = vmatpush1.msra.mxu0 0.0
    %2892 = vmatprep.subr.mxu0 0.0
    %2893 = vmatpush1.msra.mxu0 0.0
    %2894 = vmatprep.subr.mxu0 0.0
    %2895 = vmatpush1.msra.mxu0 0.0
    %2896 = vmatprep.subr.mxu0 0.0
    %2897 = vmatpush1.msra.mxu0 0.0
    %2898 = vmatprep.subr.mxu0 0.0
    %2899 = vmatpush1.msra.mxu0 0.0
    %2900 = vmatprep.subr.mxu0 0.0
    %2901 = vmatpush1.msra.mxu0 0.0
    %2902 = vmatprep.subr.mxu0 0.0
    %2903 = vmatpush1.msra.mxu0 0.0
    %2904 = vmatprep.subr.mxu0 0.0
    %2905 = vmatpush1.msra.mxu0 0.0
    %2906 = vmatprep.subr.mxu0 0.0
    %2907 = vmatpush1.msra.mxu0 0.0
    %2908 = vmatprep.subr.mxu0 0.0
    %2909 = vmatpush1.msra.mxu0 0.0
    %2910 = vmatprep.mubr.f32.mxu0 0.0
    %2911 = vmatmul.mubr.f32.gmra.mrb[0].mxu0 %v2841
    %v2912 = vpop.f32.mrb[0].mxu0
    %v2913 = vadd.f32 0.0, %v2912
    %v2914 = vpop.f32.mrb[0].mxu0
    %v2915 = vadd.f32 0.0, %v2914
    %2916 = vdwg.mxu0
    %2917 = vmatprep.subr.mxu0 %v1971
    %2918 = vmatpush1.msra.mxu0 %v1970
    %2919 = vmatprep.subr.mxu0 %v1975
    %2920 = vmatpush1.msra.mxu0 %v1974
    %2921 = vmatprep.subr.mxu0 %v1979
    %2922 = vmatpush1.msra.mxu0 %v1978
    %2923 = vmatprep.subr.mxu0 %v1983
    %2924 = vmatpush1.msra.mxu0 %v1982
    %2925 = vmatprep.subr.mxu0 %v1987
    %2926 = vmatpush1.msra.mxu0 %v1986
    %2927 = vmatprep.subr.mxu0 %v1991
    %2928 = vmatpush1.msra.mxu0 %v1990
    %2929 = vmatprep.subr.mxu0 %v1995
    %2930 = vmatpush1.msra.mxu0 %v1994
    %2931 = vmatprep.subr.mxu0 %v1999
    %2932 = vmatpush1.msra.mxu0 %v1998
    %2933 = vmatprep.subr.mxu0 %v2003
    %2934 = vmatpush1.msra.mxu0 %v2002
    %2935 = vmatprep.subr.mxu0 %v2007
    %2936 = vmatpush1.msra.mxu0 %v2006
    %2937 = vmatprep.subr.mxu0 %v2011
    %2938 = vmatpush1.msra.mxu0 %v2010
    %2939 = vmatprep.subr.mxu0 %v2015
    %2940 = vmatpush1.msra.mxu0 %v2014
    %2941 = vmatprep.subr.mxu0 %v2019
    %2942 = vmatpush1.msra.mxu0 %v2018
    %2943 = vmatprep.subr.mxu0 %v2023
    %2944 = vmatpush1.msra.mxu0 %v2022
    %2945 = vmatprep.subr.mxu0 %v2027
    %2946 = vmatpush1.msra.mxu0 %v2026
    %2947 = vmatprep.subr.mxu0 %v2031
    %2948 = vmatpush1.msra.mxu0 %v2030
    %2949 = vmatprep.subr.mxu0 0.0
    %2950 = vmatpush1.msra.mxu0 0.0
    %2951 = vmatprep.subr.mxu0 0.0
    %2952 = vmatpush1.msra.mxu0 0.0
    %2953 = vmatprep.subr.mxu0 0.0
    %2954 = vmatpush1.msra.mxu0 0.0
    %2955 = vmatprep.subr.mxu0 0.0
    %2956 = vmatpush1.msra.mxu0 0.0
    %2957 = vmatprep.subr.mxu0 0.0
    %2958 = vmatpush1.msra.mxu0 0.0
    %2959 = vmatprep.subr.mxu0 0.0
    %2960 = vmatpush1.msra.mxu0 0.0
    %2961 = vmatprep.subr.mxu0 0.0
    %2962 = vmatpush1.msra.mxu0 0.0
    %2963 = vmatprep.subr.mxu0 0.0
    %2964 = vmatpush1.msra.mxu0 0.0
    %2965 = vmatprep.subr.mxu0 0.0
    %2966 = vmatpush1.msra.mxu0 0.0
    %2967 = vmatprep.subr.mxu0 0.0
    %2968 = vmatpush1.msra.mxu0 0.0
    %2969 = vmatprep.subr.mxu0 0.0
    %2970 = vmatpush1.msra.mxu0 0.0
    %2971 = vmatprep.subr.mxu0 0.0
    %2972 = vmatpush1.msra.mxu0 0.0
    %2973 = vmatprep.subr.mxu0 0.0
    %2974 = vmatpush1.msra.mxu0 0.0
    %2975 = vmatprep.subr.mxu0 0.0
    %2976 = vmatpush1.msra.mxu0 0.0
    %2977 = vmatprep.subr.mxu0 0.0
    %2978 = vmatpush1.msra.mxu0 0.0
    %2979 = vmatprep.subr.mxu0 0.0
    %2980 = vmatpush1.msra.mxu0 0.0
    %2981 = vmatprep.mubr.f32.mxu0 0.0
    %2982 = vmatmul.mubr.f32.gmra.mrb[0].mxu0 %v2841
    %v2983 = vpop.f32.mrb[0].mxu0
    %v2984 = vadd.f32 0.0, %v2983
    %v2985 = vpop.f32.mrb[0].mxu0
    %v2986 = vadd.f32 0.0, %v2985
    %2987 = vdwg.mxu0
    %v2988 = vadd.f32 %v2842, %v2913
    %v2989 = vadd.f32 %v2843, %v2915
    %v2990 = vadd.f32 %v2844, %v2984
    %v2991 = vadd.f32 %v2845, %v2986
    %v2992 = vxor.u32 %v2988, 2147483648
    %v2993 = vmul.f32 %v2992, 1.442695
    %v2994 = vpow.pop %v2993
    %v2995 = vadd.f32 %v2994, 1.0
    %v2996 = vrcp.pop %v2995
    %v2997 = vmul.f32 1.0, %v2996
    %v2998 = vxor.u32 %v2989, 2147483648
    %v2999 = vmul.f32 %v2998, 1.442695
    %v3000 = vpow.pop %v2999
    %v3001 = vadd.f32 %v3000, 1.0
    %v3002 = vrcp.pop %v3001
    %v3003 = vmul.f32 1.0, %v3002
    %v3004 = vtanh.pop %v2990
    %v3005 = vxor.u32 %v2991, 2147483648
    %v3006 = vmul.f32 %v3005, 1.442695
    %v3007 = vpow.pop %v3006
    %v3008 = vadd.f32 %v3007, 1.0
    %v3009 = vrcp.pop %v3008
    %v3010 = vmul.f32 1.0, %v3009
    %v3011 = vmul.f32 %v3003, %v2839
    %v3012 = vmul.f32 %v2997, %v3004
    %v3013 = vadd.f32 %v3011, %v3012
    %v3014 = vtanh.pop %v3013
    %v3015 = vmul.f32 %v3010, %v3014
    %v3016 = vld [vmem:[%s1190] sm:$0xff]
    %v3017 = vld [vmem:[%s1190 + $0x8] sm:$0xff]
    %v3018 = vld [vmem:[%s1190 + $0x10] sm:$0xff]
    %v3019 = vld [vmem:[%s1190 + $0x18] sm:$0xff]
    %3020 = vmatprep.subr.mxu0 %v1969
    %3021 = vmatpush1.msra.mxu0 %v1968
    %3022 = vmatprep.subr.mxu0 %v1973
    %3023 = vmatpush1.msra.mxu0 %v1972
    %3024 = vmatprep.subr.mxu0 %v1977
    %3025 = vmatpush1.msra.mxu0 %v1976
    %3026 = vmatprep.subr.mxu0 %v1981
    %3027 = vmatpush1.msra.mxu0 %v1980
    %3028 = vmatprep.subr.mxu0 %v1985
    %3029 = vmatpush1.msra.mxu0 %v1984
    %3030 = vmatprep.subr.mxu0 %v1989
    %3031 = vmatpush1.msra.mxu0 %v1988
    %3032 = vmatprep.subr.mxu0 %v1993
    %3033 = vmatpush1.msra.mxu0 %v1992
    %3034 = vmatprep.subr.mxu0 %v1997
    %3035 = vmatpush1.msra.mxu0 %v1996
    %3036 = vmatprep.subr.mxu0 %v2001
    %3037 = vmatpush1.msra.mxu0 %v2000
    %3038 = vmatprep.subr.mxu0 %v2005
    %3039 = vmatpush1.msra.mxu0 %v2004
    %3040 = vmatprep.subr.mxu0 %v2009
    %3041 = vmatpush1.msra.mxu0 %v2008
    %3042 = vmatprep.subr.mxu0 %v2013
    %3043 = vmatpush1.msra.mxu0 %v2012
    %3044 = vmatprep.subr.mxu0 %v2017
    %3045 = vmatpush1.msra.mxu0 %v2016
    %3046 = vmatprep.subr.mxu0 %v2021
    %3047 = vmatpush1.msra.mxu0 %v2020
    %3048 = vmatprep.subr.mxu0 %v2025
    %3049 = vmatpush1.msra.mxu0 %v2024
    %3050 = vmatprep.subr.mxu0 %v2029
    %3051 = vmatpush1.msra.mxu0 %v2028
    %3052 = vmatprep.subr.mxu0 0.0
    %3053 = vmatpush1.msra.mxu0 0.0
    %3054 = vmatprep.subr.mxu0 0.0
    %3055 = vmatpush1.msra.mxu0 0.0
    %3056 = vmatprep.subr.mxu0 0.0
    %3057 = vmatpush1.msra.mxu0 0.0
    %3058 = vmatprep.subr.mxu0 0.0
    %3059 = vmatpush1.msra.mxu0 0.0
    %3060 = vmatprep.subr.mxu0 0.0
    %3061 = vmatpush1.msra.mxu0 0.0
    %3062 = vmatprep.subr.mxu0 0.0
    %3063 = vmatpush1.msra.mxu0 0.0
    %3064 = vmatprep.subr.mxu0 0.0
    %3065 = vmatpush1.msra.mxu0 0.0
    %3066 = vmatprep.subr.mxu0 0.0
    %3067 = vmatpush1.msra.mxu0 0.0
    %3068 = vmatprep.subr.mxu0 0.0
    %3069 = vmatpush1.msra.mxu0 0.0
    %3070 = vmatprep.subr.mxu0 0.0
    %3071 = vmatpush1.msra.mxu0 0.0
    %3072 = vmatprep.subr.mxu0 0.0
    %3073 = vmatpush1.msra.mxu0 0.0
    %3074 = vmatprep.subr.mxu0 0.0
    %3075 = vmatpush1.msra.mxu0 0.0
    %3076 = vmatprep.subr.mxu0 0.0
    %3077 = vmatpush1.msra.mxu0 0.0
    %3078 = vmatprep.subr.mxu0 0.0
    %3079 = vmatpush1.msra.mxu0 0.0
    %3080 = vmatprep.subr.mxu0 0.0
    %3081 = vmatpush1.msra.mxu0 0.0
    %3082 = vmatprep.subr.mxu0 0.0
    %3083 = vmatpush1.msra.mxu0 0.0
    %3084 = vmatprep.mubr.f32.mxu0 0.0
    %3085 = vmatmul.mubr.f32.gmra.mrb[0].mxu0 %v3015
    %v3086 = vpop.f32.mrb[0].mxu0
    %v3087 = vadd.f32 0.0, %v3086
    %v3088 = vpop.f32.mrb[0].mxu0
    %v3089 = vadd.f32 0.0, %v3088
    %3090 = vdwg.mxu0
    %3091 = vmatprep.subr.mxu0 %v1971
    %3092 = vmatpush1.msra.mxu0 %v1970
    %3093 = vmatprep.subr.mxu0 %v1975
    %3094 = vmatpush1.msra.mxu0 %v1974
    %3095 = vmatprep.subr.mxu0 %v1979
    %3096 = vmatpush1.msra.mxu0 %v1978
    %3097 = vmatprep.subr.mxu0 %v1983
    %3098 = vmatpush1.msra.mxu0 %v1982
    %3099 = vmatprep.subr.mxu0 %v1987
    %3100 = vmatpush1.msra.mxu0 %v1986
    %3101 = vmatprep.subr.mxu0 %v1991
    %3102 = vmatpush1.msra.mxu0 %v1990
    %3103 = vmatprep.subr.mxu0 %v1995
    %3104 = vmatpush1.msra.mxu0 %v1994
    %3105 = vmatprep.subr.mxu0 %v1999
    %3106 = vmatpush1.msra.mxu0 %v1998
    %3107 = vmatprep.subr.mxu0 %v2003
    %3108 = vmatpush1.msra.mxu0 %v2002
    %3109 = vmatprep.subr.mxu0 %v2007
    %3110 = vmatpush1.msra.mxu0 %v2006
    %3111 = vmatprep.subr.mxu0 %v2011
    %3112 = vmatpush1.msra.mxu0 %v2010
    %3113 = vmatprep.subr.mxu0 %v2015
    %3114 = vmatpush1.msra.mxu0 %v2014
    %3115 = vmatprep.subr.mxu0 %v2019
    %3116 = vmatpush1.msra.mxu0 %v2018
    %3117 = vmatprep.subr.mxu0 %v2023
    %3118 = vmatpush1.msra.mxu0 %v2022
    %3119 = vmatprep.subr.mxu0 %v2027
    %3120 = vmatpush1.msra.mxu0 %v2026
    %3121 = vmatprep.subr.mxu0 %v2031
    %3122 = vmatpush1.msra.mxu0 %v2030
    %3123 = vmatprep.subr.mxu0 0.0
    %3124 = vmatpush1.msra.mxu0 0.0
    %3125 = vmatprep.subr.mxu0 0.0
    %3126 = vmatpush1.msra.mxu0 0.0
    %3127 = vmatprep.subr.mxu0 0.0
    %3128 = vmatpush1.msra.mxu0 0.0
    %3129 = vmatprep.subr.mxu0 0.0
    %3130 = vmatpush1.msra.mxu0 0.0
    %3131 = vmatprep.subr.mxu0 0.0
    %3132 = vmatpush1.msra.mxu0 0.0
    %3133 = vmatprep.subr.mxu0 0.0
    %3134 = vmatpush1.msra.mxu0 0.0
    %3135 = vmatprep.subr.mxu0 0.0
    %3136 = vmatpush1.msra.mxu0 0.0
    %3137 = vmatprep.subr.mxu0 0.0
    %3138 = vmatpush1.msra.mxu0 0.0
    %3139 = vmatprep.subr.mxu0 0.0
    %3140 = vmatpush1.msra.mxu0 0.0
    %3141 = vmatprep.subr.mxu0 0.0
    %3142 = vmatpush1.msra.mxu0 0.0
    %3143 = vmatprep.subr.mxu0 0.0
    %3144 = vmatpush1.msra.mxu0 0.0
    %3145 = vmatprep.subr.mxu0 0.0
    %3146 = vmatpush1.msra.mxu0 0.0
    %3147 = vmatprep.subr.mxu0 0.0
    %3148 = vmatpush1.msra.mxu0 0.0
    %3149 = vmatprep.subr.mxu0 0.0
    %3150 = vmatpush1.msra.mxu0 0.0
    %3151 = vmatprep.subr.mxu0 0.0
    %3152 = vmatpush1.msra.mxu0 0.0
    %3153 = vmatprep.subr.mxu0 0.0
    %3154 = vmatpush1.msra.mxu0 0.0
    %3155 = vmatprep.mubr.f32.mxu0 0.0
    %3156 = vmatmul.mubr.f32.gmra.mrb[0].mxu0 %v3015
    %v3157 = vpop.f32.mrb[0].mxu0
    %v3158 = vadd.f32 0.0, %v3157
    %v3159 = vpop.f32.mrb[0].mxu0
    %v3160 = vadd.f32 0.0, %v3159
    %3161 = vdwg.mxu0
    %v3162 = vadd.f32 %v3016, %v3087
    %v3163 = vadd.f32 %v3017, %v3089
    %v3164 = vadd.f32 %v3018, %v3158
    %v3165 = vadd.f32 %v3019, %v3160
    %v3166 = vxor.u32 %v3162, 2147483648
    %v3167 = vmul.f32 %v3166, 1.442695
    %v3168 = vpow.pop %v3167
    %v3169 = vadd.f32 %v3168, 1.0
    %v3170 = vrcp.pop %v3169
    %v3171 = vmul.f32 1.0, %v3170
    %v3172 = vxor.u32 %v3163, 2147483648
    %v3173 = vmul.f32 %v3172, 1.442695
    %v3174 = vpow.pop %v3173
    %v3175 = vadd.f32 %v3174, 1.0
    %v3176 = vrcp.pop %v3175
    %v3177 = vmul.f32 1.0, %v3176
    %v3178 = vtanh.pop %v3164
    %v3179 = vxor.u32 %v3165, 2147483648
    %v3180 = vmul.f32 %v3179, 1.442695
    %v3181 = vpow.pop %v3180
    %v3182 = vadd.f32 %v3181, 1.0
    %v3183 = vrcp.pop %v3182
    %v3184 = vmul.f32 1.0, %v3183
    %v3185 = vmul.f32 %v3177, %v3013
    %v3186 = vmul.f32 %v3171, %v3178
    %v3187 = vadd.f32 %v3185, %v3186
    %v3188 = vtanh.pop %v3187
    %v3189 = vmul.f32 %v3184, %v3188
    %v3190 = vld [vmem:[%s1369] sm:$0xff]
    %v3191 = vld [vmem:[%s1369 + $0x8] sm:$0xff]
    %v3192 = vld [vmem:[%s1369 + $0x10] sm:$0xff]
    %v3193 = vld [vmem:[%s1369 + $0x18] sm:$0xff]
    %3194 = vmatprep.subr.mxu0 %v1969
    %3195 = vmatpush1.msra.mxu0 %v1968
    %3196 = vmatprep.subr.mxu0 %v1973
    %3197 = vmatpush1.msra.mxu0 %v1972
    %3198 = vmatprep.subr.mxu0 %v1977
    %3199 = vmatpush1.msra.mxu0 %v1976
    %3200 = vmatprep.subr.mxu0 %v1981
    %3201 = vmatpush1.msra.mxu0 %v1980
    %3202 = vmatprep.subr.mxu0 %v1985
    %3203 = vmatpush1.msra.mxu0 %v1984
    %3204 = vmatprep.subr.mxu0 %v1989
    %3205 = vmatpush1.msra.mxu0 %v1988
    %3206 = vmatprep.subr.mxu0 %v1993
    %3207 = vmatpush1.msra.mxu0 %v1992
    %3208 = vmatprep.subr.mxu0 %v1997
    %3209 = vmatpush1.msra.mxu0 %v1996
    %3210 = vmatprep.subr.mxu0 %v2001
    %3211 = vmatpush1.msra.mxu0 %v2000
    %3212 = vmatprep.subr.mxu0 %v2005
    %3213 = vmatpush1.msra.mxu0 %v2004
    %3214 = vmatprep.subr.mxu0 %v2009
    %3215 = vmatpush1.msra.mxu0 %v2008
    %3216 = vmatprep.subr.mxu0 %v2013
    %3217 = vmatpush1.msra.mxu0 %v2012
    %3218 = vmatprep.subr.mxu0 %v2017
    %3219 = vmatpush1.msra.mxu0 %v2016
    %3220 = vmatprep.subr.mxu0 %v2021
    %3221 = vmatpush1.msra.mxu0 %v2020
    %3222 = vmatprep.subr.mxu0 %v2025
    %3223 = vmatpush1.msra.mxu0 %v2024
    %3224 = vmatprep.subr.mxu0 %v2029
    %3225 = vmatpush1.msra.mxu0 %v2028
    %3226 = vmatprep.subr.mxu0 0.0
    %3227 = vmatpush1.msra.mxu0 0.0
    %3228 = vmatprep.subr.mxu0 0.0
    %3229 = vmatpush1.msra.mxu0 0.0
    %3230 = vmatprep.subr.mxu0 0.0
    %3231 = vmatpush1.msra.mxu0 0.0
    %3232 = vmatprep.subr.mxu0 0.0
    %3233 = vmatpush1.msra.mxu0 0.0
    %3234 = vmatprep.subr.mxu0 0.0
    %3235 = vmatpush1.msra.mxu0 0.0
    %3236 = vmatprep.subr.mxu0 0.0
    %3237 = vmatpush1.msra.mxu0 0.0
    %3238 = vmatprep.subr.mxu0 0.0
    %3239 = vmatpush1.msra.mxu0 0.0
    %3240 = vmatprep.subr.mxu0 0.0
    %3241 = vmatpush1.msra.mxu0 0.0
    %3242 = vmatprep.subr.mxu0 0.0
    %3243 = vmatpush1.msra.mxu0 0.0
    %3244 = vmatprep.subr.mxu0 0.0
    %3245 = vmatpush1.msra.mxu0 0.0
    %3246 = vmatprep.subr.mxu0 0.0
    %3247 = vmatpush1.msra.mxu0 0.0
    %3248 = vmatprep.subr.mxu0 0.0
    %3249 = vmatpush1.msra.mxu0 0.0
    %3250 = vmatprep.subr.mxu0 0.0
    %3251 = vmatpush1.msra.mxu0 0.0
    %3252 = vmatprep.subr.mxu0 0.0
    %3253 = vmatpush1.msra.mxu0 0.0
    %3254 = vmatprep.subr.mxu0 0.0
    %3255 = vmatpush1.msra.mxu0 0.0
    %3256 = vmatprep.subr.mxu0 0.0
    %3257 = vmatpush1.msra.mxu0 0.0
    %3258 = vmatprep.mubr.f32.mxu0 0.0
    %3259 = vmatmul.mubr.f32.gmra.mrb[0].mxu0 %v3189
    %v3260 = vpop.f32.mrb[0].mxu0
    %v3261 = vadd.f32 0.0, %v3260
    %v3262 = vpop.f32.mrb[0].mxu0
    %v3263 = vadd.f32 0.0, %v3262
    %3264 = vdwg.mxu0
    %3265 = vmatprep.subr.mxu0 %v1971
    %3266 = vmatpush1.msra.mxu0 %v1970
    %3267 = vmatprep.subr.mxu0 %v1975
    %3268 = vmatpush1.msra.mxu0 %v1974
    %3269 = vmatprep.subr.mxu0 %v1979
    %3270 = vmatpush1.msra.mxu0 %v1978
    %3271 = vmatprep.subr.mxu0 %v1983
    %3272 = vmatpush1.msra.mxu0 %v1982
    %3273 = vmatprep.subr.mxu0 %v1987
    %3274 = vmatpush1.msra.mxu0 %v1986
    %3275 = vmatprep.subr.mxu0 %v1991
    %3276 = vmatpush1.msra.mxu0 %v1990
    %3277 = vmatprep.subr.mxu0 %v1995
    %3278 = vmatpush1.msra.mxu0 %v1994
    %3279 = vmatprep.subr.mxu0 %v1999
    %3280 = vmatpush1.msra.mxu0 %v1998
    %3281 = vmatprep.subr.mxu0 %v2003
    %3282 = vmatpush1.msra.mxu0 %v2002
    %3283 = vmatprep.subr.mxu0 %v2007
    %3284 = vmatpush1.msra.mxu0 %v2006
    %3285 = vmatprep.subr.mxu0 %v2011
    %3286 = vmatpush1.msra.mxu0 %v2010
    %3287 = vmatprep.subr.mxu0 %v2015
    %3288 = vmatpush1.msra.mxu0 %v2014
    %3289 = vmatprep.subr.mxu0 %v2019
    %3290 = vmatpush1.msra.mxu0 %v2018
    %3291 = vmatprep.subr.mxu0 %v2023
    %3292 = vmatpush1.msra.mxu0 %v2022
    %3293 = vmatprep.subr.mxu0 %v2027
    %3294 = vmatpush1.msra.mxu0 %v2026
    %3295 = vmatprep.subr.mxu0 %v2031
    %3296 = vmatpush1.msra.mxu0 %v2030
    %3297 = vmatprep.subr.mxu0 0.0
    %3298 = vmatpush1.msra.mxu0 0.0
    %3299 = vmatprep.subr.mxu0 0.0
    %3300 = vmatpush1.msra.mxu0 0.0
    %3301 = vmatprep.subr.mxu0 0.0
    %3302 = vmatpush1.msra.mxu0 0.0
    %3303 = vmatprep.subr.mxu0 0.0
    %3304 = vmatpush1.msra.mxu0 0.0
    %3305 = vmatprep.subr.mxu0 0.0
    %3306 = vmatpush1.msra.mxu0 0.0
    %3307 = vmatprep.subr.mxu0 0.0
    %3308 = vmatpush1.msra.mxu0 0.0
    %3309 = vmatprep.subr.mxu0 0.0
    %3310 = vmatpush1.msra.mxu0 0.0
    %3311 = vmatprep.subr.mxu0 0.0
    %3312 = vmatpush1.msra.mxu0 0.0
    %3313 = vmatprep.subr.mxu0 0.0
    %3314 = vmatpush1.msra.mxu0 0.0
    %3315 = vmatprep.subr.mxu0 0.0
    %3316 = vmatpush1.msra.mxu0 0.0
    %3317 = vmatprep.subr.mxu0 0.0
    %3318 = vmatpush1.msra.mxu0 0.0
    %3319 = vmatprep.subr.mxu0 0.0
    %3320 = vmatpush1.msra.mxu0 0.0
    %3321 = vmatprep.subr.mxu0 0.0
    %3322 = vmatpush1.msra.mxu0 0.0
    %3323 = vmatprep.subr.mxu0 0.0
    %3324 = vmatpush1.msra.mxu0 0.0
    %3325 = vmatprep.subr.mxu0 0.0
    %3326 = vmatpush1.msra.mxu0 0.0
    %3327 = vmatprep.subr.mxu0 0.0
    %3328 = vmatpush1.msra.mxu0 0.0
    %3329 = vmatprep.mubr.f32.mxu0 0.0
    %3330 = vmatmul.mubr.f32.gmra.mrb[0].mxu0 %v3189
    %v3331 = vpop.f32.mrb[0].mxu0
    %v3332 = vadd.f32 0.0, %v3331
    %v3333 = vpop.f32.mrb[0].mxu0
    %v3334 = vadd.f32 0.0, %v3333
    %3335 = vdwg.mxu0
    %v3336 = vadd.f32 %v3190, %v3261
    %v3337 = vadd.f32 %v3191, %v3263
    %v3338 = vadd.f32 %v3192, %v3332
    %v3339 = vadd.f32 %v3193, %v3334
    %v3340 = vxor.u32 %v3336, 2147483648
    %v3341 = vmul.f32 %v3340, 1.442695
    %v3342 = vpow.pop %v3341
    %v3343 = vadd.f32 %v3342, 1.0
    %v3344 = vrcp.pop %v3343
    %v3345 = vmul.f32 1.0, %v3344
    %v3346 = vxor.u32 %v3337, 2147483648
    %v3347 = vmul.f32 %v3346, 1.442695
    %v3348 = vpow.pop %v3347
    %v3349 = vadd.f32 %v3348, 1.0
    %v3350 = vrcp.pop %v3349
    %v3351 = vmul.f32 1.0, %v3350
    %v3352 = vtanh.pop %v3338
    %v3353 = vxor.u32 %v3339, 2147483648
    %v3354 = vmul.f32 %v3353, 1.442695
    %v3355 = vpow.pop %v3354
    %v3356 = vadd.f32 %v3355, 1.0
    %v3357 = vrcp.pop %v3356
    %v3358 = vmul.f32 1.0, %v3357
    %v3359 = vmul.f32 %v3351, %v3187
    %v3360 = vmul.f32 %v3345, %v3352
    %v3361 = vadd.f32 %v3359, %v3360
    %v3362 = vtanh.pop %v3361
    %v3363 = vmul.f32 %v3358, %v3362
    %v3364 = vld [vmem:[%s1548] sm:$0xff]
    %v3365 = vld [vmem:[%s1548 + $0x8] sm:$0xff]
    %v3366 = vld [vmem:[%s1548 + $0x10] sm:$0xff]
    %v3367 = vld [vmem:[%s1548 + $0x18] sm:$0xff]
    %3368 = vmatprep.subr.mxu0 %v1969
    %3369 = vmatpush1.msra.mxu0 %v1968
    %3370 = vmatprep.subr.mxu0 %v1973
    %3371 = vmatpush1.msra.mxu0 %v1972
    %3372 = vmatprep.subr.mxu0 %v1977
    %3373 = vmatpush1.msra.mxu0 %v1976
    %3374 = vmatprep.subr.mxu0 %v1981
    %3375 = vmatpush1.msra.mxu0 %v1980
    %3376 = vmatprep.subr.mxu0 %v1985
    %3377 = vmatpush1.msra.mxu0 %v1984
    %3378 = vmatprep.subr.mxu0 %v1989
    %3379 = vmatpush1.msra.mxu0 %v1988
    %3380 = vmatprep.subr.mxu0 %v1993
    %3381 = vmatpush1.msra.mxu0 %v1992
    %3382 = vmatprep.subr.mxu0 %v1997
    %3383 = vmatpush1.msra.mxu0 %v1996
    %3384 = vmatprep.subr.mxu0 %v2001
    %3385 = vmatpush1.msra.mxu0 %v2000
    %3386 = vmatprep.subr.mxu0 %v2005
    %3387 = vmatpush1.msra.mxu0 %v2004
    %3388 = vmatprep.subr.mxu0 %v2009
    %3389 = vmatpush1.msra.mxu0 %v2008
    %3390 = vmatprep.subr.mxu0 %v2013
    %3391 = vmatpush1.msra.mxu0 %v2012
    %3392 = vmatprep.subr.mxu0 %v2017
    %3393 = vmatpush1.msra.mxu0 %v2016
    %3394 = vmatprep.subr.mxu0 %v2021
    %3395 = vmatpush1.msra.mxu0 %v2020
    %3396 = vmatprep.subr.mxu0 %v2025
    %3397 = vmatpush1.msra.mxu0 %v2024
    %3398 = vmatprep.subr.mxu0 %v2029
    %3399 = vmatpush1.msra.mxu0 %v2028
    %3400 = vmatprep.subr.mxu0 0.0
    %3401 = vmatpush1.msra.mxu0 0.0
    %3402 = vmatprep.subr.mxu0 0.0
    %3403 = vmatpush1.msra.mxu0 0.0
    %3404 = vmatprep.subr.mxu0 0.0
    %3405 = vmatpush1.msra.mxu0 0.0
    %3406 = vmatprep.subr.mxu0 0.0
    %3407 = vmatpush1.msra.mxu0 0.0
    %3408 = vmatprep.subr.mxu0 0.0
    %3409 = vmatpush1.msra.mxu0 0.0
    %3410 = vmatprep.subr.mxu0 0.0
    %3411 = vmatpush1.msra.mxu0 0.0
    %3412 = vmatprep.subr.mxu0 0.0
    %3413 = vmatpush1.msra.mxu0 0.0
    %3414 = vmatprep.subr.mxu0 0.0
    %3415 = vmatpush1.msra.mxu0 0.0
    %3416 = vmatprep.subr.mxu0 0.0
    %3417 = vmatpush1.msra.mxu0 0.0
    %3418 = vmatprep.subr.mxu0 0.0
    %3419 = vmatpush1.msra.mxu0 0.0
    %3420 = vmatprep.subr.mxu0 0.0
    %3421 = vmatpush1.msra.mxu0 0.0
    %3422 = vmatprep.subr.mxu0 0.0
    %3423 = vmatpush1.msra.mxu0 0.0
    %3424 = vmatprep.subr.mxu0 0.0
    %3425 = vmatpush1.msra.mxu0 0.0
    %3426 = vmatprep.subr.mxu0 0.0
    %3427 = vmatpush1.msra.mxu0 0.0
    %3428 = vmatprep.subr.mxu0 0.0
    %3429 = vmatpush1.msra.mxu0 0.0
    %3430 = vmatprep.subr.mxu0 0.0
    %3431 = vmatpush1.msra.mxu0 0.0
    %3432 = vmatprep.mubr.f32.mxu0 0.0
    %3433 = vmatmul.mubr.f32.gmra.mrb[0].mxu0 %v3363
    %v3434 = vpop.f32.mrb[0].mxu0
    %v3435 = vadd.f32 0.0, %v3434
    %v3436 = vpop.f32.mrb[0].mxu0
    %v3437 = vadd.f32 0.0, %v3436
    %3438 = vdwg.mxu0
    %3439 = vmatprep.subr.mxu0 %v1971
    %3440 = vmatpush1.msra.mxu0 %v1970
    %3441 = vmatprep.subr.mxu0 %v1975
    %3442 = vmatpush1.msra.mxu0 %v1974
    %3443 = vmatprep.subr.mxu0 %v1979
    %3444 = vmatpush1.msra.mxu0 %v1978
    %3445 = vmatprep.subr.mxu0 %v1983
    %3446 = vmatpush1.msra.mxu0 %v1982
    %3447 = vmatprep.subr.mxu0 %v1987
    %3448 = vmatpush1.msra.mxu0 %v1986
    %3449 = vmatprep.subr.mxu0 %v1991
    %3450 = vmatpush1.msra.mxu0 %v1990
    %3451 = vmatprep.subr.mxu0 %v1995
    %3452 = vmatpush1.msra.mxu0 %v1994
    %3453 = vmatprep.subr.mxu0 %v1999
    %3454 = vmatpush1.msra.mxu0 %v1998
    %3455 = vmatprep.subr.mxu0 %v2003
    %3456 = vmatpush1.msra.mxu0 %v2002
    %3457 = vmatprep.subr.mxu0 %v2007
    %3458 = vmatpush1.msra.mxu0 %v2006
    %3459 = vmatprep.subr.mxu0 %v2011
    %3460 = vmatpush1.msra.mxu0 %v2010
    %3461 = vmatprep.subr.mxu0 %v2015
    %3462 = vmatpush1.msra.mxu0 %v2014
    %3463 = vmatprep.subr.mxu0 %v2019
    %3464 = vmatpush1.msra.mxu0 %v2018
    %3465 = vmatprep.subr.mxu0 %v2023
    %3466 = vmatpush1.msra.mxu0 %v2022
    %3467 = vmatprep.subr.mxu0 %v2027
    %3468 = vmatpush1.msra.mxu0 %v2026
    %3469 = vmatprep.subr.mxu0 %v2031
    %3470 = vmatpush1.msra.mxu0 %v2030
    %3471 = vmatprep.subr.mxu0 0.0
    %3472 = vmatpush1.msra.mxu0 0.0
    %3473 = vmatprep.subr.mxu0 0.0
    %3474 = vmatpush1.msra.mxu0 0.0
    %3475 = vmatprep.subr.mxu0 0.0
    %3476 = vmatpush1.msra.mxu0 0.0
    %3477 = vmatprep.subr.mxu0 0.0
    %3478 = vmatpush1.msra.mxu0 0.0
    %3479 = vmatprep.subr.mxu0 0.0
    %3480 = vmatpush1.msra.mxu0 0.0
    %3481 = vmatprep.subr.mxu0 0.0
    %3482 = vmatpush1.msra.mxu0 0.0
    %3483 = vmatprep.subr.mxu0 0.0
    %3484 = vmatpush1.msra.mxu0 0.0
    %3485 = vmatprep.subr.mxu0 0.0
    %3486 = vmatpush1.msra.mxu0 0.0
    %3487 = vmatprep.subr.mxu0 0.0
    %3488 = vmatpush1.msra.mxu0 0.0
    %3489 = vmatprep.subr.mxu0 0.0
    %3490 = vmatpush1.msra.mxu0 0.0
    %3491 = vmatprep.subr.mxu0 0.0
    %3492 = vmatpush1.msra.mxu0 0.0
    %3493 = vmatprep.subr.mxu0 0.0
    %3494 = vmatpush1.msra.mxu0 0.0
    %3495 = vmatprep.subr.mxu0 0.0
    %3496 = vmatpush1.msra.mxu0 0.0
    %3497 = vmatprep.subr.mxu0 0.0
    %3498 = vmatpush1.msra.mxu0 0.0
    %3499 = vmatprep.subr.mxu0 0.0
    %3500 = vmatpush1.msra.mxu0 0.0
    %3501 = vmatprep.subr.mxu0 0.0
    %3502 = vmatpush1.msra.mxu0 0.0
    %3503 = vmatprep.mubr.f32.mxu0 0.0
    %3504 = vmatmul.mubr.f32.gmra.mrb[0].mxu0 %v3363
    %v3505 = vpop.f32.mrb[0].mxu0
    %v3506 = vadd.f32 0.0, %v3505
    %v3507 = vpop.f32.mrb[0].mxu0
    %v3508 = vadd.f32 0.0, %v3507
    %3509 = vdwg.mxu0
    %v3510 = vadd.f32 %v3364, %v3435
    %v3511 = vadd.f32 %v3365, %v3437
    %v3512 = vadd.f32 %v3366, %v3506
    %v3513 = vadd.f32 %v3367, %v3508
    %v3514 = vxor.u32 %v3510, 2147483648
    %v3515 = vmul.f32 %v3514, 1.442695
    %v3516 = vpow.pop %v3515
    %v3517 = vadd.f32 %v3516, 1.0
    %v3518 = vrcp.pop %v3517
    %v3519 = vmul.f32 1.0, %v3518
    %v3520 = vxor.u32 %v3511, 2147483648
    %v3521 = vmul.f32 %v3520, 1.442695
    %v3522 = vpow.pop %v3521
    %v3523 = vadd.f32 %v3522, 1.0
    %v3524 = vrcp.pop %v3523
    %v3525 = vmul.f32 1.0, %v3524
    %v3526 = vtanh.pop %v3512
    %v3527 = vxor.u32 %v3513, 2147483648
    %v3528 = vmul.f32 %v3527, 1.442695
    %v3529 = vpow.pop %v3528
    %v3530 = vadd.f32 %v3529, 1.0
    %v3531 = vrcp.pop %v3530
    %v3532 = vmul.f32 1.0, %v3531
    %v3533 = vmul.f32 %v3525, %v3361
    %v3534 = vmul.f32 %v3519, %v3526
    %v3535 = vadd.f32 %v3533, %v3534
    %v3536 = vtanh.pop %v3535
    %v3537 = vmul.f32 %v3532, %v3536
    %v3538 = vld [vmem:[%s1727] sm:$0xff]
    %v3539 = vld [vmem:[%s1727 + $0x8] sm:$0xff]
    %v3540 = vld [vmem:[%s1727 + $0x10] sm:$0xff]
    %v3541 = vld [vmem:[%s1727 + $0x18] sm:$0xff]
    %3542 = vmatprep.subr.mxu0 %v1969
    %3543 = vmatpush1.msra.mxu0 %v1968
    %3544 = vmatprep.subr.mxu0 %v1973
    %3545 = vmatpush1.msra.mxu0 %v1972
    %3546 = vmatprep.subr.mxu0 %v1977
    %3547 = vmatpush1.msra.mxu0 %v1976
    %3548 = vmatprep.subr.mxu0 %v1981
    %3549 = vmatpush1.msra.mxu0 %v1980
    %3550 = vmatprep.subr.mxu0 %v1985
    %3551 = vmatpush1.msra.mxu0 %v1984
    %3552 = vmatprep.subr.mxu0 %v1989
    %3553 = vmatpush1.msra.mxu0 %v1988
    %3554 = vmatprep.subr.mxu0 %v1993
    %3555 = vmatpush1.msra.mxu0 %v1992
    %3556 = vmatprep.subr.mxu0 %v1997
    %3557 = vmatpush1.msra.mxu0 %v1996
    %3558 = vmatprep.subr.mxu0 %v2001
    %3559 = vmatpush1.msra.mxu0 %v2000
    %3560 = vmatprep.subr.mxu0 %v2005
    %3561 = vmatpush1.msra.mxu0 %v2004
    %3562 = vmatprep.subr.mxu0 %v2009
    %3563 = vmatpush1.msra.mxu0 %v2008
    %3564 = vmatprep.subr.mxu0 %v2013
    %3565 = vmatpush1.msra.mxu0 %v2012
    %3566 = vmatprep.subr.mxu0 %v2017
    %3567 = vmatpush1.msra.mxu0 %v2016
    %3568 = vmatprep.subr.mxu0 %v2021
    %3569 = vmatpush1.msra.mxu0 %v2020
    %3570 = vmatprep.subr.mxu0 %v2025
    %3571 = vmatpush1.msra.mxu0 %v2024
    %3572 = vmatprep.subr.mxu0 %v2029
    %3573 = vmatpush1.msra.mxu0 %v2028
    %3574 = vmatprep.subr.mxu0 0.0
    %3575 = vmatpush1.msra.mxu0 0.0
    %3576 = vmatprep.subr.mxu0 0.0
    %3577 = vmatpush1.msra.mxu0 0.0
    %3578 = vmatprep.subr.mxu0 0.0
    %3579 = vmatpush1.msra.mxu0 0.0
    %3580 = vmatprep.subr.mxu0 0.0
    %3581 = vmatpush1.msra.mxu0 0.0
    %3582 = vmatprep.subr.mxu0 0.0
    %3583 = vmatpush1.msra.mxu0 0.0
    %3584 = vmatprep.subr.mxu0 0.0
    %3585 = vmatpush1.msra.mxu0 0.0
    %3586 = vmatprep.subr.mxu0 0.0
    %3587 = vmatpush1.msra.mxu0 0.0
    %3588 = vmatprep.subr.mxu0 0.0
    %3589 = vmatpush1.msra.mxu0 0.0
    %3590 = vmatprep.subr.mxu0 0.0
    %3591 = vmatpush1.msra.mxu0 0.0
    %3592 = vmatprep.subr.mxu0 0.0
    %3593 = vmatpush1.msra.mxu0 0.0
    %3594 = vmatprep.subr.mxu0 0.0
    %3595 = vmatpush1.msra.mxu0 0.0
    %3596 = vmatprep.subr.mxu0 0.0
    %3597 = vmatpush1.msra.mxu0 0.0
    %3598 = vmatprep.subr.mxu0 0.0
    %3599 = vmatpush1.msra.mxu0 0.0
    %3600 = vmatprep.subr.mxu0 0.0
    %3601 = vmatpush1.msra.mxu0 0.0
    %3602 = vmatprep.subr.mxu0 0.0
    %3603 = vmatpush1.msra.mxu0 0.0
    %3604 = vmatprep.subr.mxu0 0.0
    %3605 = vmatpush1.msra.mxu0 0.0
    %3606 = vmatprep.mubr.f32.mxu0 0.0
    %3607 = vmatmul.mubr.f32.gmra.mrb[0].mxu0 %v3537
    %v3608 = vpop.f32.mrb[0].mxu0
    %v3609 = vadd.f32 0.0, %v3608
    %v3610 = vpop.f32.mrb[0].mxu0
    %v3611 = vadd.f32 0.0, %v3610
    %3612 = vdwg.mxu0
    %3613 = vmatprep.subr.mxu0 %v1971
    %3614 = vmatpush1.msra.mxu0 %v1970
    %3615 = vmatprep.subr.mxu0 %v1975
    %3616 = vmatpush1.msra.mxu0 %v1974
    %3617 = vmatprep.subr.mxu0 %v1979
    %3618 = vmatpush1.msra.mxu0 %v1978
    %3619 = vmatprep.subr.mxu0 %v1983
    %3620 = vmatpush1.msra.mxu0 %v1982
    %3621 = vmatprep.subr.mxu0 %v1987
    %3622 = vmatpush1.msra.mxu0 %v1986
    %3623 = vmatprep.subr.mxu0 %v1991
    %3624 = vmatpush1.msra.mxu0 %v1990
    %3625 = vmatprep.subr.mxu0 %v1995
    %3626 = vmatpush1.msra.mxu0 %v1994
    %3627 = vmatprep.subr.mxu0 %v1999
    %3628 = vmatpush1.msra.mxu0 %v1998
    %3629 = vmatprep.subr.mxu0 %v2003
    %3630 = vmatpush1.msra.mxu0 %v2002
    %3631 = vmatprep.subr.mxu0 %v2007
    %3632 = vmatpush1.msra.mxu0 %v2006
    %3633 = vmatprep.subr.mxu0 %v2011
    %3634 = vmatpush1.msra.mxu0 %v2010
    %3635 = vmatprep.subr.mxu0 %v2015
    %3636 = vmatpush1.msra.mxu0 %v2014
    %3637 = vmatprep.subr.mxu0 %v2019
    %3638 = vmatpush1.msra.mxu0 %v2018
    %3639 = vmatprep.subr.mxu0 %v2023
    %3640 = vmatpush1.msra.mxu0 %v2022
    %3641 = vmatprep.subr.mxu0 %v2027
    %3642 = vmatpush1.msra.mxu0 %v2026
    %3643 = vmatprep.subr.mxu0 %v2031
    %3644 = vmatpush1.msra.mxu0 %v2030
    %3645 = vmatprep.subr.mxu0 0.0
    %3646 = vmatpush1.msra.mxu0 0.0
    %3647 = vmatprep.subr.mxu0 0.0
    %3648 = vmatpush1.msra.mxu0 0.0
    %3649 = vmatprep.subr.mxu0 0.0
    %3650 = vmatpush1.msra.mxu0 0.0
    %3651 = vmatprep.subr.mxu0 0.0
    %3652 = vmatpush1.msra.mxu0 0.0
    %3653 = vmatprep.subr.mxu0 0.0
    %3654 = vmatpush1.msra.mxu0 0.0
    %3655 = vmatprep.subr.mxu0 0.0
    %3656 = vmatpush1.msra.mxu0 0.0
    %3657 = vmatprep.subr.mxu0 0.0
    %3658 = vmatpush1.msra.mxu0 0.0
    %3659 = vmatprep.subr.mxu0 0.0
    %3660 = vmatpush1.msra.mxu0 0.0
    %3661 = vmatprep.subr.mxu0 0.0
    %3662 = vmatpush1.msra.mxu0 0.0
    %3663 = vmatprep.subr.mxu0 0.0
    %3664 = vmatpush1.msra.mxu0 0.0
    %3665 = vmatprep.subr.mxu0 0.0
    %3666 = vmatpush1.msra.mxu0 0.0
    %3667 = vmatprep.subr.mxu0 0.0
    %3668 = vmatpush1.msra.mxu0 0.0
    %3669 = vmatprep.subr.mxu0 0.0
    %3670 = vmatpush1.msra.mxu0 0.0
    %3671 = vmatprep.subr.mxu0 0.0
    %3672 = vmatpush1.msra.mxu0 0.0
    %3673 = vmatprep.subr.mxu0 0.0
    %3674 = vmatpush1.msra.mxu0 0.0
    %3675 = vmatprep.subr.mxu0 0.0
    %3676 = vmatpush1.msra.mxu0 0.0
    %3677 = vmatprep.mubr.f32.mxu0 0.0
    %3678 = vmatmul.mubr.f32.gmra.mrb[0].mxu0 %v3537
    %v3679 = vpop.f32.mrb[0].mxu0
    %v3680 = vadd.f32 0.0, %v3679
    %v3681 = vpop.f32.mrb[0].mxu0
    %v3682 = vadd.f32 0.0, %v3681
    %3683 = vdwg.mxu0
    %v3684 = vadd.f32 %v3538, %v3609
    %v3685 = vadd.f32 %v3539, %v3611
    %v3686 = vadd.f32 %v3540, %v3680
    %v3687 = vadd.f32 %v3541, %v3682
    %v3688 = vxor.u32 %v3684, 2147483648
    %v3689 = vmul.f32 %v3688, 1.442695
    %v3690 = vpow.pop %v3689
    %v3691 = vadd.f32 %v3690, 1.0
    %v3692 = vrcp.pop %v3691
    %v3693 = vmul.f32 1.0, %v3692
    %v3694 = vxor.u32 %v3685, 2147483648
    %v3695 = vmul.f32 %v3694, 1.442695
    %v3696 = vpow.pop %v3695
    %v3697 = vadd.f32 %v3696, 1.0
    %v3698 = vrcp.pop %v3697
    %v3699 = vmul.f32 1.0, %v3698
    %v3700 = vtanh.pop %v3686
    %v3701 = vxor.u32 %v3687, 2147483648
    %v3702 = vmul.f32 %v3701, 1.442695
    %v3703 = vpow.pop %v3702
    %v3704 = vadd.f32 %v3703, 1.0
    %v3705 = vrcp.pop %v3704
    %v3706 = vmul.f32 1.0, %v3705
    %v3707 = vmul.f32 %v3699, %v3535
    %v3708 = vmul.f32 %v3693, %v3700
    %v3709 = vadd.f32 %v3707, %v3708
    %v3710 = vtanh.pop %v3709
    %v3711 = vmul.f32 %v3706, %v3710
    %v3712 = vld [vmem:[#allocation10] sm:$0xff]
    %v3713 = vld [vmem:[#allocation10 + $0x8] sm:$0xff]
    %v3714 = vld [vmem:[#allocation10 + $0x10] sm:$0xff]
    %v3715 = vld [vmem:[#allocation10 + $0x18] sm:$0xff]
    %v3716 = vld [vmem:[#allocation10 + $0x20] sm:$0xff]
    %v3717 = vld [vmem:[#allocation10 + $0x28] sm:$0xff]
    %v3718 = vld [vmem:[#allocation10 + $0x30] sm:$0xff]
    %v3719 = vld [vmem:[#allocation10 + $0x38] sm:$0xff]
    %v3720 = vld [vmem:[#allocation10 + $0x40] sm:$0xff]
    %v3721 = vld [vmem:[#allocation10 + $0x48] sm:$0xff]
    %v3722 = vld [vmem:[#allocation10 + $0x50] sm:$0xff]
    %v3723 = vld [vmem:[#allocation10 + $0x58] sm:$0xff]
    %v3724 = vld [vmem:[#allocation10 + $0x60] sm:$0xff]
    %v3725 = vld [vmem:[#allocation10 + $0x68] sm:$0xff]
    %v3726 = vld [vmem:[#allocation10 + $0x70] sm:$0xff]
    %v3727 = vld [vmem:[#allocation10 + $0x78] sm:$0xff]
    %v3728 = vld [vmem:[%s8] sm:$0x1]
    %v3730 = vlaneseq
    %v3731 = vshrl.u32 %v3730, 7
    %v3732 = vsub.s32 0, %v3731
    %v3733 = vrot.slane %v3728, %v3732
    %3735 = vmatprep.subr.mxu0 0.0
    %3736 = vmatpush1.msra.mxu0 %v3712
    %3737 = vmatprep.subr.mxu0 0.0
    %3738 = vmatpush1.msra.mxu0 %v3713
    %3739 = vmatprep.subr.mxu0 0.0
    %3740 = vmatpush1.msra.mxu0 %v3714
    %3741 = vmatprep.subr.mxu0 0.0
    %3742 = vmatpush1.msra.mxu0 %v3715
    %3743 = vmatprep.subr.mxu0 0.0
    %3744 = vmatpush1.msra.mxu0 %v3716
    %3745 = vmatprep.subr.mxu0 0.0
    %3746 = vmatpush1.msra.mxu0 %v3717
    %3747 = vmatprep.subr.mxu0 0.0
    %3748 = vmatpush1.msra.mxu0 %v3718
    %3749 = vmatprep.subr.mxu0 0.0
    %3750 = vmatpush1.msra.mxu0 %v3719
    %3751 = vmatprep.subr.mxu0 0.0
    %3752 = vmatpush1.msra.mxu0 %v3720
    %3753 = vmatprep.subr.mxu0 0.0
    %3754 = vmatpush1.msra.mxu0 %v3721
    %3755 = vmatprep.subr.mxu0 0.0
    %3756 = vmatpush1.msra.mxu0 %v3722
    %3757 = vmatprep.subr.mxu0 0.0
    %3758 = vmatpush1.msra.mxu0 %v3723
    %3759 = vmatprep.subr.mxu0 0.0
    %3760 = vmatpush1.msra.mxu0 %v3724
    %3761 = vmatprep.subr.mxu0 0.0
    %3762 = vmatpush1.msra.mxu0 %v3725
    %3763 = vmatprep.subr.mxu0 0.0
    %3764 = vmatpush1.msra.mxu0 %v3726
    %3765 = vmatprep.subr.mxu0 0.0
    %3766 = vmatpush1.msra.mxu0 %v3727
    %3767 = vmatprep.subr.mxu0 0.0
    %3768 = vmatpush1.msra.mxu0 0.0
    %3769 = vmatprep.subr.mxu0 0.0
    %3770 = vmatpush1.msra.mxu0 0.0
    %3771 = vmatprep.subr.mxu0 0.0
    %3772 = vmatpush1.msra.mxu0 0.0
    %3773 = vmatprep.subr.mxu0 0.0
    %3774 = vmatpush1.msra.mxu0 0.0
    %3775 = vmatprep.subr.mxu0 0.0
    %3776 = vmatpush1.msra.mxu0 0.0
    %3777 = vmatprep.subr.mxu0 0.0
    %3778 = vmatpush1.msra.mxu0 0.0
    %3779 = vmatprep.subr.mxu0 0.0
    %3780 = vmatpush1.msra.mxu0 0.0
    %3781 = vmatprep.subr.mxu0 0.0
    %3782 = vmatpush1.msra.mxu0 0.0
    %3783 = vmatprep.subr.mxu0 0.0
    %3784 = vmatpush1.msra.mxu0 0.0
    %3785 = vmatprep.subr.mxu0 0.0
    %3786 = vmatpush1.msra.mxu0 0.0
    %3787 = vmatprep.subr.mxu0 0.0
    %3788 = vmatpush1.msra.mxu0 0.0
    %3789 = vmatprep.subr.mxu0 0.0
    %3790 = vmatpush1.msra.mxu0 0.0
    %3791 = vmatprep.subr.mxu0 0.0
    %3792 = vmatpush1.msra.mxu0 0.0
    %3793 = vmatprep.subr.mxu0 0.0
    %3794 = vmatpush1.msra.mxu0 0.0
    %3795 = vmatprep.subr.mxu0 0.0
    %3796 = vmatpush1.msra.mxu0 0.0
    %3797 = vmatprep.subr.mxu0 0.0
    %3798 = vmatpush1.msra.mxu0 0.0
    %3799 = vmatprep.mubr.f32.mxu0 0.0
    %3800 = vmatmul.mubr.f32.gmra.mrb[0].mxu0 %v3711
    %v3801 = vpop.f32.mrb[0].mxu0
    %v3802 = vadd.f32 %v3733, %v3801
    %v3803 = vpop.f32.mrb[0].mxu0
    %3804 = vdwg.mxu0
    %3805 = vst [vmem:[#allocation12] sm:$0xff] %v3802
    // Predicated region
    $region54: #{tpu_custom_call.1} parent=1 // pred_check
      _
    $region55: #{tpu_custom_call.1} parent=1 // pred_check_branch
      %3807 = sbr.rel (0) target = $region57
    $region56: #{tpu_custom_call.1} parent=1 // pred_region
      %s3809 = ssub.s32 128, 128
      %3810 = vsyncadd [#allocation6], %s3809
      %s3812 = sshll.u32 [#allocation12], 4
      %s3813 = int_to_ptr.vmem [resolvable:$true] %s3812
      %3815 = dma.vmem_to_hbm [thread:$0]  %s3813, 128, %s9, [#allocation6]
    $region57: #{tpu_custom_call.1} parent=1 // pred_fallthru
      _
    // Predicated region
    $region58: #{tpu_custom_call.1} parent=1 // pred_check
      _
    $region59: #{tpu_custom_call.1} parent=1 // pred_check_branch
      %3817 = sbr.rel (0) target = $region61
    $region60: #{tpu_custom_call.1} parent=1 // pred_region
      %3818 = dma.done [#allocation6], 128
    $region61: #{tpu_custom_call.1} parent=1 // pred_fallthru
      _
    %3819 = vsyncpa [#allocation5], 1
    %3820 = vsyncpa [#allocation8], 1
    %3821 = vsyncpa [#allocation11], 1
    %3822 = vsyncpa [#allocation6], 1

</llo_original>
